<compile_context>
chip_gen: v6e
topology: v6e:2x2x1
jax: 0.10.0
libtpu: 0.0.40
codegen_flags: <defaults>
</compile_context>

<pallas_src>
import jax
import jax.numpy as jnp
from jax.experimental import pallas as pl
from jax.experimental.pallas import tpu as pltpu

OUT_DIM = 61           # MANO parameter vector width
OUT_DIM_PADDED = 128   # lane-dense padded output width


# --------------------------------- kernel ----------------------------------

def _mano_regressor_kernel(x_ref,
                           w1_ref, s1_ref, b1_ref,
                           w2_ref, s2_ref, b2_ref,
                           w3_ref, s3_ref, b3_ref,
                           w4_ref, s4_ref, b4_ref,
                           out_ref):
    # int8 weights -> bf16 on the VPU in front of each MXU matmul; the
    # per-output-channel scale is applied to the f32 accumulator together with
    # the (BN-folded) bias.  Accumulation is f32 via preferred_element_type.
    x = x_ref[...]                                              # (bt,1536) bf16

    h = jnp.dot(x, w1_ref[...].astype(jnp.bfloat16),
                preferred_element_type=jnp.float32)
    h = jnp.maximum(h * s1_ref[...] + b1_ref[...], 0.0).astype(jnp.bfloat16)

    h = jnp.dot(h, w2_ref[...].astype(jnp.bfloat16),
                preferred_element_type=jnp.float32)
    h = jnp.maximum(h * s2_ref[...] + b2_ref[...], 0.0).astype(jnp.bfloat16)

    h = jnp.dot(h, w3_ref[...].astype(jnp.bfloat16),
                preferred_element_type=jnp.float32)
    h = jnp.maximum(h * s3_ref[...] + b3_ref[...], 0.0).astype(jnp.bfloat16)

    out = jnp.dot(h, w4_ref[...].astype(jnp.bfloat16),
                  preferred_element_type=jnp.float32)
    out_ref[...] = out * s4_ref[...] + b4_ref[...]              # (bt,128) f32


# --------------------------------- wrapper ---------------------------------

def _default_batch_tile():
    """256 on v6e/v7x (256-wide MXU), 128 on v5e (4x128 MXU, tighter VMEM)."""
    try:
        kind = jax.devices()[0].device_kind.lower()
    except Exception:
        return 128
    return 128 if "v5" in kind else 256


def _run_tiles(x_bf16, params, bt):
    """One pallas_call over an exactly-tiled batch (B % bt == 0)."""
    B, F = x_bf16.shape
    n_out = params["w4"].shape[1]
    assert B % bt == 0
    grid = (B // bt,)

    def const_spec(shape):
        # Grid-invariant block: weights/scales/biases are DMA'd once and stay
        # VMEM-resident across every batch tile.
        return pl.BlockSpec(shape, lambda i: (0,) * len(shape))

    # Advisory cost model: tiny, memory-bound op -> lets XLA schedule/overlap
    # it sensibly when this regressor sits inside a larger graph.
    weight_bytes = sum(int(params[k].size) for k in ("w1", "w2", "w3", "w4"))
    aux_bytes = sum(int(params[k].size) * 4
                    for k in ("s1", "s2", "s3", "s4", "b1", "b2", "b3", "b4"))
    flops = 2 * B * (F * 1024 + 1024 * 512 + 512 * 256 + 256 * n_out)
    bytes_accessed = weight_bytes + aux_bytes + B * (F * 2 + n_out * 4)

    return pl.pallas_call(
        _mano_regressor_kernel,
        out_shape=jax.ShapeDtypeStruct((B, n_out), jnp.float32),
        grid_spec=pltpu.PrefetchScalarGridSpec(
            num_scalar_prefetch=0,
            grid=grid,
            in_specs=[
                pl.BlockSpec((bt, F), lambda i: (i, 0)),
                const_spec(params["w1"].shape), const_spec(params["s1"].shape),
                const_spec(params["b1"].shape),
                const_spec(params["w2"].shape), const_spec(params["s2"].shape),
                const_spec(params["b2"].shape),
                const_spec(params["w3"].shape), const_spec(params["s3"].shape),
                const_spec(params["b3"].shape),
                const_spec(params["w4"].shape), const_spec(params["s4"].shape),
                const_spec(params["b4"].shape),
            ],
            out_specs=pl.BlockSpec((bt, n_out), lambda i: (i, 0)),
        ),
        compiler_params=pltpu.CompilerParams(
            # Independent batch tiles; shards across v7x's two TensorCores
            # only when grid >= 2 (at B <= bt this annotation is a no-op).
            dimension_semantics=("parallel",),
            # Headroom for the in-kernel int8->bf16 dequant temporaries on top
            # of the double-buffered int8 weight blocks (~11 MB peak); 32 MiB
            # is within every generation's physical VMEM.
            vmem_limit_bytes=32 * 1024 * 1024,
        ),
        cost_estimate=pl.CostEstimate(flops=flops, transcendentals=0,
                                      bytes_accessed=bytes_accessed),
    )(x_bf16,
      params["w1"], params["s1"], params["b1"],
      params["w2"], params["s2"], params["b2"],
      params["w3"], params["s3"], params["b3"],
      params["w4"], params["s4"], params["b4"])


def mano_regressor_pallas(features, params, batch_tile=None):
    """features: (B, 1536) f32.  Returns (B, 61) f32 MANO parameters."""
    B, _ = features.shape
    if batch_tile is None:
        batch_tile = _default_batch_tile()
    # Stream activations as bf16 (halves per-tile input DMA).
    x = features.astype(jnp.bfloat16)

    if B <= batch_tile:
        # Single full-extent tile: no padding, no sublane-divisibility needed.
        out = _run_tiles(x, params, bt=B)
    else:
        # Never pad the full feature array in HBM: exactly-tiled main call
        # plus a small full-extent tail call for the remainder rows.
        main = (B // batch_tile) * batch_tile
        pieces = [_run_tiles(x[:main], params, bt=batch_tile)]
        if main < B:
            pieces.append(_run_tiles(x[main:], params, bt=B - main))
        out = jnp.concatenate(pieces, axis=0)
    return out[:, :OUT_DIM]


def freipose_hand_forward(features, K, params):
    """Pallas-backed equivalent of FreiPoseHand.forward (regressor part)."""
    # TODO(synk): pose_hand / MANO mesh layer is an external CPU/numpy
    # dependency with no Pallas equivalent; K is accepted but unused.
    del K
    return mano_regressor_pallas(features, params)


# ----------------------------- parameter setup -----------------------------

def _init_linear(key, fan_in, fan_out, scale=0.02):
    kw, kb = jax.random.split(key)
    w = scale * jax.random.normal(kw, (fan_in, fan_out), dtype=jnp.float32)
    b = scale * jax.random.normal(kb, (fan_out,), dtype=jnp.float32)
    return w, b


def _init_bn(key, num_features):
    kg, kb = jax.random.split(key)
    gamma = 1.0 + 0.01 * jax.random.normal(kg, (num_features,), jnp.float32)
    beta = 0.01 * jax.random.normal(kb, (num_features,), jnp.float32)
    mean = jnp.zeros((num_features,), jnp.float32)
    var = jnp.ones((num_features,), jnp.float32)
    return gamma, beta, mean, var


def _fold_bn(w, b, gamma, beta, mean, var, eps=1e-5):
    """Fold eval-mode BatchNorm1d into the preceding Linear (x @ W + b)."""
    s = gamma / jnp.sqrt(var + eps)
    return w * s[None, :], (b - mean) * s + beta


def _quantize_per_channel_int8(w):
    """Symmetric per-output-channel int8 quantization of a (K, N) weight."""
    amax = jnp.max(jnp.abs(w), axis=0)
    scale = jnp.maximum(amax, 1e-8) / 127.0
    q = jnp.clip(jnp.round(w / scale[None, :]), -127.0, 127.0).astype(jnp.int8)
    return q, scale.astype(jnp.float32)


def make_params(key, inp_neurons=1536):
    """Returns (quantized kernel params, f32 BN-folded reference params)."""
    keys = jax.random.split(key, 7)
    w1, b1 = _init_linear(keys[0], inp_neurons, 1024)
    g1, be1, m1, v1 = _init_bn(keys[1], 1024)
    w2, b2 = _init_linear(keys[2], 1024, 512)
    g2, be2, m2, v2 = _init_bn(keys[3], 512)
    w3, b3 = _init_linear(keys[4], 512, 256)
    g3, be3, m3, v3 = _init_bn(keys[5], 256)
    w4, b4 = _init_linear(keys[6], 256, OUT_DIM)

    w1f, b1f = _fold_bn(w1, b1, g1, be1, m1, v1)
    w2f, b2f = _fold_bn(w2, b2, g2, be2, m2, v2)
    w3f, b3f = _fold_bn(w3, b3, g3, be3, m3, v3)

    # Zero-pad the last layer to 128 output columns (lane-dense output block);
    # padded columns are exactly 0 and are sliced off in the wrapper.
    pad = OUT_DIM_PADDED - OUT_DIM
    w4p = jnp.pad(w4, ((0, 0), (0, pad)))
    b4p = jnp.pad(b4, ((0, pad),))

    f32_params = {"w1": w1f, "b1": b1f, "w2": w2f, "b2": b2f,
                  "w3": w3f, "b3": b3f, "w4": w4p, "b4": b4p}

    quant = {}
    for i in range(1, 5):
        q, s = _quantize_per_channel_int8(f32_params[f"w{i}"])
        quant[f"w{i}"] = q
        quant[f"s{i}"] = s[None, :]
        quant[f"b{i}"] = f32_params[f"b{i}"][None, :]
    return quant, f32_params


# -------------------------------- references --------------------------------

def _reference_forward_quantized(features, params):
    """Pure-JAX reference with the same int8/bf16 numerics as the kernel."""
    h = features.astype(jnp.bfloat16)
    for i in range(1, 5):
        w = params[f"w{i}"].astype(jnp.bfloat16)
        h = jnp.dot(h, w, preferred_element_type=jnp.float32)
        h = h * params[f"s{i}"] + params[f"b{i}"]
        if i < 4:
            h = jnp.maximum(h, 0.0).astype(jnp.bfloat16)
    return h[:, :OUT_DIM]


def _reference_forward_f32(features, f32_params):
    """Full-f32 reference of the original (eval-mode BN-folded) model."""
    h = features
    for i in range(1, 5):
        h = jnp.dot(h, f32_params[f"w{i}"]) + f32_params[f"b{i}"]
        if i < 4:
            h = jnp.maximum(h, 0.0)
    return h[:, :OUT_DIM]


# ----------------------------------- main -----------------------------------

if __name__ == "__main__":
    key = jax.random.PRNGKey(0)
    k_feat, k_param = jax.random.split(key)

    B, INP = 8, 1536
    features = jax.random.normal(k_feat, (B, INP), dtype=jnp.float32)
    K_cam = jnp.tile(jnp.eye(3, dtype=jnp.float32)[None], (B, 1, 1))

    params, f32_params = make_params(k_param, inp_neurons=INP)

    # Small-batch path: grid = (1,), weight-DMA bound.
    mano = freipose_hand_forward(features, K_cam, params)
    mano = jax.block_until_ready(mano)
    assert mano.shape == (B, OUT_DIM), mano.shape

    # Kernel vs. identically-quantized reference (same numerics).
    ref_q = _reference_forward_quantized(features, params)
    assert jnp.allclose(mano, ref_q, atol=2e-2, rtol=2e-2), float(
        jnp.max(jnp.abs(mano - ref_q)))

    # Fidelity vs. the full-f32 (BN-folded) model: explicit budget for the
    # int8-weight / bf16-activation quantization of this regressor.
    ref_f = _reference_forward_f32(features, f32_params)
    assert float(jnp.max(jnp.abs(mano - ref_f))) < 5e-2, float(
        jnp.max(jnp.abs(mano - ref_f)))

    # Multi-tile + remainder path (grid >= 2 plus a full-extent tail tile),
    # exercised at a tiny tile size so it runs fast.
    B2 = 20
    feats2 = jax.random.normal(jax.random.PRNGKey(1), (B2, INP), jnp.float32)
    out2 = jax.block_until_ready(
        mano_regressor_pallas(feats2, params, batch_tile=8))
    ref2 = _reference_forward_quantized(feats2, params)
    assert out2.shape == (B2, OUT_DIM), out2.shape
    assert jnp.allclose(out2, ref2, atol=2e-2, rtol=2e-2), float(
        jnp.max(jnp.abs(out2 - ref2)))

    print("KERNEL_OK")
</pallas_src>

<mosaic_0001>
module attributes {stable_mosaic.version = 11 : i64} {
  func.func @_mano_regressor_kernel(%arg0: i32, %arg1: memref<8x1536xbf16, #tpu.memory_space<vmem>>, %arg2: memref<1536x1024xi8, #tpu.memory_space<vmem>>, %arg3: memref<1x1024xf32, #tpu.memory_space<vmem>>, %arg4: memref<1x1024xf32, #tpu.memory_space<vmem>>, %arg5: memref<1024x512xi8, #tpu.memory_space<vmem>>, %arg6: memref<1x512xf32, #tpu.memory_space<vmem>>, %arg7: memref<1x512xf32, #tpu.memory_space<vmem>>, %arg8: memref<512x256xi8, #tpu.memory_space<vmem>>, %arg9: memref<1x256xf32, #tpu.memory_space<vmem>>, %arg10: memref<1x256xf32, #tpu.memory_space<vmem>>, %arg11: memref<256x128xi8, #tpu.memory_space<vmem>>, %arg12: memref<1x128xf32, #tpu.memory_space<vmem>>, %arg13: memref<1x128xf32, #tpu.memory_space<vmem>>, %arg14: memref<8x128xf32, #tpu.memory_space<vmem>>) attributes {dimension_semantics = [#tpu.dimension_semantics<parallel>], iteration_bounds = array<i64: 1>, scalar_prefetch = 0 : i64, scratch_operands = 0 : i64, tpu.core_type = #tpu.core_type<tc>, window_params = [{transform_indices = @transform_0, window_bounds = array<i64: 8, 1536>}, {pipeline_mode = #tpu.pipeline_mode<synchronous>, transform_indices = @transform_1, window_bounds = array<i64: 1536, 1024>}, {pipeline_mode = #tpu.pipeline_mode<synchronous>, transform_indices = @transform_2, window_bounds = array<i64: 1, 1024>}, {pipeline_mode = #tpu.pipeline_mode<synchronous>, transform_indices = @transform_3, window_bounds = array<i64: 1, 1024>}, {pipeline_mode = #tpu.pipeline_mode<synchronous>, transform_indices = @transform_4, window_bounds = array<i64: 1024, 512>}, {pipeline_mode = #tpu.pipeline_mode<synchronous>, transform_indices = @transform_5, window_bounds = array<i64: 1, 512>}, {pipeline_mode = #tpu.pipeline_mode<synchronous>, transform_indices = @transform_6, window_bounds = array<i64: 1, 512>}, {pipeline_mode = #tpu.pipeline_mode<synchronous>, transform_indices = @transform_7, window_bounds = array<i64: 512, 256>}, {pipeline_mode = #tpu.pipeline_mode<synchronous>, transform_indices = @transform_8, window_bounds = array<i64: 1, 256>}, {pipeline_mode = #tpu.pipeline_mode<synchronous>, transform_indices = @transform_9, window_bounds = array<i64: 1, 256>}, {pipeline_mode = #tpu.pipeline_mode<synchronous>, transform_indices = @transform_10, window_bounds = array<i64: 256, 128>}, {pipeline_mode = #tpu.pipeline_mode<synchronous>, transform_indices = @transform_11, window_bounds = array<i64: 1, 128>}, {pipeline_mode = #tpu.pipeline_mode<synchronous>, transform_indices = @transform_12, window_bounds = array<i64: 1, 128>}, {transform_indices = @transform_13, window_bounds = array<i64: 8, 128>}]} {
    %c0 = arith.constant 0 : index
    %c0_0 = arith.constant 0 : index
    %0 = vector.load %arg1[%c0, %c0_0] : memref<8x1536xbf16, #tpu.memory_space<vmem>>, vector<8x1536xbf16>
    %c0_1 = arith.constant 0 : index
    %c0_2 = arith.constant 0 : index
    %1 = vector.load %arg2[%c0_1, %c0_2] : memref<1536x1024xi8, #tpu.memory_space<vmem>>, vector<1536x1024xi8>
    %2 = arith.sitofp %1 : vector<1536x1024xi8> to vector<1536x1024xbf16>
    %cst = arith.constant dense<0.000000e+00> : vector<8x1024xf32>
    %3 = tpu.matmul %0, %2, %cst {dimension_numbers = #tpu.dot_dimension_numbers<[1], [0], [0], [1], [0, 0, 1, 1], [], []>} : vector<8x1536xbf16>, vector<1536x1024xbf16>, vector<8x1024xf32> -> vector<8x1024xf32>
    %c0_3 = arith.constant 0 : index
    %c0_4 = arith.constant 0 : index
    %4 = vector.load %arg3[%c0_3, %c0_4] : memref<1x1024xf32, #tpu.memory_space<vmem>>, vector<1x1024xf32>
    %5 = vector.broadcast %4 : vector<1x1024xf32> to vector<8x1024xf32>
    %6 = arith.mulf %3, %5 : vector<8x1024xf32>
    %c0_5 = arith.constant 0 : index
    %c0_6 = arith.constant 0 : index
    %7 = vector.load %arg4[%c0_5, %c0_6] : memref<1x1024xf32, #tpu.memory_space<vmem>>, vector<1x1024xf32>
    %8 = vector.broadcast %7 : vector<1x1024xf32> to vector<8x1024xf32>
    %9 = arith.addf %6, %8 : vector<8x1024xf32>
    %cst_7 = arith.constant 0.000000e+00 : f32
    %10 = vector.broadcast %cst_7 : f32 to vector<8x1024xf32>
    %11 = arith.maximumf %9, %10 : vector<8x1024xf32>
    %12 = arith.truncf %11 : vector<8x1024xf32> to vector<8x1024xbf16>
    %c0_8 = arith.constant 0 : index
    %c0_9 = arith.constant 0 : index
    %13 = vector.load %arg5[%c0_8, %c0_9] : memref<1024x512xi8, #tpu.memory_space<vmem>>, vector<1024x512xi8>
    %14 = arith.sitofp %13 : vector<1024x512xi8> to vector<1024x512xbf16>
    %cst_10 = arith.constant dense<0.000000e+00> : vector<8x512xf32>
    %15 = tpu.matmul %12, %14, %cst_10 {dimension_numbers = #tpu.dot_dimension_numbers<[1], [0], [0], [1], [0, 0, 1, 1], [], []>} : vector<8x1024xbf16>, vector<1024x512xbf16>, vector<8x512xf32> -> vector<8x512xf32>
    %c0_11 = arith.constant 0 : index
    %c0_12 = arith.constant 0 : index
    %16 = vector.load %arg6[%c0_11, %c0_12] : memref<1x512xf32, #tpu.memory_space<vmem>>, vector<1x512xf32>
    %17 = vector.broadcast %16 : vector<1x512xf32> to vector<8x512xf32>
    %18 = arith.mulf %15, %17 : vector<8x512xf32>
    %c0_13 = arith.constant 0 : index
    %c0_14 = arith.constant 0 : index
    %19 = vector.load %arg7[%c0_13, %c0_14] : memref<1x512xf32, #tpu.memory_space<vmem>>, vector<1x512xf32>
    %20 = vector.broadcast %19 : vector<1x512xf32> to vector<8x512xf32>
    %21 = arith.addf %18, %20 : vector<8x512xf32>
    %cst_15 = arith.constant 0.000000e+00 : f32
    %22 = vector.broadcast %cst_15 : f32 to vector<8x512xf32>
    %23 = arith.maximumf %21, %22 : vector<8x512xf32>
    %24 = arith.truncf %23 : vector<8x512xf32> to vector<8x512xbf16>
    %c0_16 = arith.constant 0 : index
    %c0_17 = arith.constant 0 : index
    %25 = vector.load %arg8[%c0_16, %c0_17] : memref<512x256xi8, #tpu.memory_space<vmem>>, vector<512x256xi8>
    %26 = arith.sitofp %25 : vector<512x256xi8> to vector<512x256xbf16>
    %cst_18 = arith.constant dense<0.000000e+00> : vector<8x256xf32>
    %27 = tpu.matmul %24, %26, %cst_18 {dimension_numbers = #tpu.dot_dimension_numbers<[1], [0], [0], [1], [0, 0, 1, 1], [], []>} : vector<8x512xbf16>, vector<512x256xbf16>, vector<8x256xf32> -> vector<8x256xf32>
    %c0_19 = arith.constant 0 : index
    %c0_20 = arith.constant 0 : index
    %28 = vector.load %arg9[%c0_19, %c0_20] : memref<1x256xf32, #tpu.memory_space<vmem>>, vector<1x256xf32>
    %29 = vector.broadcast %28 : vector<1x256xf32> to vector<8x256xf32>
    %30 = arith.mulf %27, %29 : vector<8x256xf32>
    %c0_21 = arith.constant 0 : index
    %c0_22 = arith.constant 0 : index
    %31 = vector.load %arg10[%c0_21, %c0_22] : memref<1x256xf32, #tpu.memory_space<vmem>>, vector<1x256xf32>
    %32 = vector.broadcast %31 : vector<1x256xf32> to vector<8x256xf32>
    %33 = arith.addf %30, %32 : vector<8x256xf32>
    %cst_23 = arith.constant 0.000000e+00 : f32
    %34 = vector.broadcast %cst_23 : f32 to vector<8x256xf32>
    %35 = arith.maximumf %33, %34 : vector<8x256xf32>
    %36 = arith.truncf %35 : vector<8x256xf32> to vector<8x256xbf16>
    %c0_24 = arith.constant 0 : index
    %c0_25 = arith.constant 0 : index
    %37 = vector.load %arg11[%c0_24, %c0_25] : memref<256x128xi8, #tpu.memory_space<vmem>>, vector<256x128xi8>
    %38 = arith.sitofp %37 : vector<256x128xi8> to vector<256x128xbf16>
    %cst_26 = arith.constant dense<0.000000e+00> : vector<8x128xf32>
    %39 = tpu.matmul %36, %38, %cst_26 {dimension_numbers = #tpu.dot_dimension_numbers<[1], [0], [0], [1], [0, 0, 1, 1], [], []>} : vector<8x256xbf16>, vector<256x128xbf16>, vector<8x128xf32> -> vector<8x128xf32>
    %c0_27 = arith.constant 0 : index
    %c0_28 = arith.constant 0 : index
    %40 = vector.load %arg12[%c0_27, %c0_28] : memref<1x128xf32, #tpu.memory_space<vmem>>, vector<1x128xf32>
    %41 = vector.broadcast %40 : vector<1x128xf32> to vector<8x128xf32>
    %42 = arith.mulf %39, %41 : vector<8x128xf32>
    %c0_29 = arith.constant 0 : index
    %c0_30 = arith.constant 0 : index
    %43 = vector.load %arg13[%c0_29, %c0_30] : memref<1x128xf32, #tpu.memory_space<vmem>>, vector<1x128xf32>
    %44 = vector.broadcast %43 : vector<1x128xf32> to vector<8x128xf32>
    %45 = arith.addf %42, %44 : vector<8x128xf32>
    %c0_31 = arith.constant 0 : index
    %c0_32 = arith.constant 0 : index
    %46 = vector.load %arg14[%c0_31, %c0_32] : memref<8x128xf32, #tpu.memory_space<vmem>>, vector<8x128xf32>
    tpu.vector_store %arg14[%c0_31, %c0_32], %45 {strides = array<i32>} : memref<8x128xf32, #tpu.memory_space<vmem>>, vector<8x128xf32>,
    return
  }
  func.func @transform_0(%arg0: i32) -> (i32, i32) {
    %c0_i32 = arith.constant 0 : i32
    %c0_i32_0 = arith.constant 0 : i32
    return %arg0, %c0_i32 : i32, i32
  }
  func.func @transform_1(%arg0: i32) -> (i32, i32) {
    %c0_i32 = arith.constant 0 : i32
    %c0_i32_0 = arith.constant 0 : i32
    %c0_i32_1 = arith.constant 0 : i32
    return %c0_i32, %c0_i32_0 : i32, i32
  }
  func.func @transform_2(%arg0: i32) -> (i32, i32) {
    %c0_i32 = arith.constant 0 : i32
    %c0_i32_0 = arith.constant 0 : i32
    %c0_i32_1 = arith.constant 0 : i32
    return %c0_i32, %c0_i32_0 : i32, i32
  }
  func.func @transform_3(%arg0: i32) -> (i32, i32) {
    %c0_i32 = arith.constant 0 : i32
    %c0_i32_0 = arith.constant 0 : i32
    %c0_i32_1 = arith.constant 0 : i32
    return %c0_i32, %c0_i32_0 : i32, i32
  }
  func.func @transform_4(%arg0: i32) -> (i32, i32) {
    %c0_i32 = arith.constant 0 : i32
    %c0_i32_0 = arith.constant 0 : i32
    %c0_i32_1 = arith.constant 0 : i32
    return %c0_i32, %c0_i32_0 : i32, i32
  }
  func.func @transform_5(%arg0: i32) -> (i32, i32) {
    %c0_i32 = arith.constant 0 : i32
    %c0_i32_0 = arith.constant 0 : i32
    %c0_i32_1 = arith.constant 0 : i32
    return %c0_i32, %c0_i32_0 : i32, i32
  }
  func.func @transform_6(%arg0: i32) -> (i32, i32) {
    %c0_i32 = arith.constant 0 : i32
    %c0_i32_0 = arith.constant 0 : i32
    %c0_i32_1 = arith.constant 0 : i32
    return %c0_i32, %c0_i32_0 : i32, i32
  }
  func.func @transform_7(%arg0: i32) -> (i32, i32) {
    %c0_i32 = arith.constant 0 : i32
    %c0_i32_0 = arith.constant 0 : i32
    %c0_i32_1 = arith.constant 0 : i32
    return %c0_i32, %c0_i32_0 : i32, i32
  }
  func.func @transform_8(%arg0: i32) -> (i32, i32) {
    %c0_i32 = arith.constant 0 : i32
    %c0_i32_0 = arith.constant 0 : i32
    %c0_i32_1 = arith.constant 0 : i32
    return %c0_i32, %c0_i32_0 : i32, i32
  }
  func.func @transform_9(%arg0: i32) -> (i32, i32) {
    %c0_i32 = arith.constant 0 : i32
    %c0_i32_0 = arith.constant 0 : i32
    %c0_i32_1 = arith.constant 0 : i32
    return %c0_i32, %c0_i32_0 : i32, i32
  }
  func.func @transform_10(%arg0: i32) -> (i32, i32) {
    %c0_i32 = arith.constant 0 : i32
    %c0_i32_0 = arith.constant 0 : i32
    %c0_i32_1 = arith.constant 0 : i32
    return %c0_i32, %c0_i32_0 : i32, i32
  }
  func.func @transform_11(%arg0: i32) -> (i32, i32) {
    %c0_i32 = arith.constant 0 : i32
    %c0_i32_0 = arith.constant 0 : i32
    %c0_i32_1 = arith.constant 0 : i32
    return %c0_i32, %c0_i32_0 : i32, i32
  }
  func.func @transform_12(%arg0: i32) -> (i32, i32) {
    %c0_i32 = arith.constant 0 : i32
    %c0_i32_0 = arith.constant 0 : i32
    %c0_i32_1 = arith.constant 0 : i32
    return %c0_i32, %c0_i32_0 : i32, i32
  }
  func.func @transform_13(%arg0: i32) -> (i32, i32) {
    %c0_i32 = arith.constant 0 : i32
    %c0_i32_0 = arith.constant 0 : i32
    return %arg0, %c0_i32 : i32, i32
  }
}

</mosaic_0001>

<llo_original>
// kernel: tpu_custom_call.1
$region0: #{tpu_custom_call.1}
  #allocation0 [shape = 'u32[]', space=smem, size = 0x4, offset = 0x4, fixed_abs, tag = 'smem constant byte address 0x4 - core index']
  #allocation1 [shape = 'u32[144,128]{1,0:T(1,128)}', space=vmem, size = 0x12000, scoped, tag = 'internal scratch']
  %s0 = inlined_call_operand.hbm [shape: bf16[8,1536], index: 0, kind: input, shape index: {}]
  %s1 = inlined_call_operand.hbm [shape: s8[1536,1024], index: 1, kind: input, shape index: {}]
  %s2 = inlined_call_operand.hbm [shape: f32[1,1024], index: 2, kind: input, shape index: {}]
  %s3 = inlined_call_operand.hbm [shape: f32[1,1024], index: 3, kind: input, shape index: {}]
  %s4 = inlined_call_operand.hbm [shape: s8[1024,512], index: 4, kind: input, shape index: {}]
  %s5 = inlined_call_operand.hbm [shape: f32[1,512], index: 5, kind: input, shape index: {}]
  %s6 = inlined_call_operand.hbm [shape: f32[1,512], index: 6, kind: input, shape index: {}]
  %s7 = inlined_call_operand.hbm [shape: s8[512,256], index: 7, kind: input, shape index: {}]
  %s8 = inlined_call_operand.hbm [shape: f32[1,256], index: 8, kind: input, shape index: {}]
  %s9 = inlined_call_operand.hbm [shape: f32[1,256], index: 9, kind: input, shape index: {}]
  %s10 = inlined_call_operand.hbm [shape: s8[256,128], index: 10, kind: input, shape index: {}]
  %s11 = inlined_call_operand.hbm [shape: f32[1,128], index: 11, kind: input, shape index: {}]
  %s12 = inlined_call_operand.hbm [shape: f32[1,128], index: 12, kind: input, shape index: {}]
  %s13 = inlined_call_operand.hbm [shape: f32[8,128], index: 13, kind: output, shape index: {}]
  %s14 = sld [smem:[#allocation0]]
  $region114: #{tpu_custom_call.1} parent=0
    _
  %s16 = ssub.s32 1, %s14
  %s17 = scalar_select 0, %s16, %s14
  $region1: #{tpu_custom_call.1} parent=0
    #allocation2 [shape = 'u8[24576]{0}', space=vmem, size = 0x6000, scoped, tag = 'input window, operand 0, single buffered']
    #allocation3 [shape = 's32[1]{0}', space=sflag, size = 0x4, scoped, tag = 'scoped memory for tpu_custom_call.1']
    #allocation4 [shape = 's32[1]{0}', space=sflag, size = 0x4, scoped, tag = 'scoped memory for tpu_custom_call.1']
    #allocation5 [shape = 'u8[1572864]{0}', space=vmem, size = 0x180000, scoped, tag = 'input window, operand 1, single buffered']
    #allocation6 [shape = 's32[1]{0}', space=sflag, size = 0x4, scoped, tag = 'scoped memory for tpu_custom_call.1']
    #allocation7 [shape = 'u8[4096]{0}', space=vmem, size = 0x1000, scoped, tag = 'input window, operand 2, single buffered']
    #allocation8 [shape = 'u8[4096]{0}', space=vmem, size = 0x1000, scoped, tag = 'input window, operand 3, single buffered']
    #allocation9 [shape = 's32[1]{0}', space=sflag, size = 0x4, scoped, tag = 'scoped memory for tpu_custom_call.1']
    #allocation10 [shape = 'u8[524288]{0}', space=vmem, size = 0x80000, scoped, tag = 'input window, operand 4, single buffered']
    #allocation11 [shape = 'u8[2048]{0}', space=vmem, size = 0x800, scoped, tag = 'input window, operand 5, single buffered']
    #allocation12 [shape = 's32[1]{0}', space=sflag, size = 0x4, scoped, tag = 'scoped memory for tpu_custom_call.1']
    #allocation13 [shape = 'u8[2048]{0}', space=vmem, size = 0x800, scoped, tag = 'input window, operand 6, single buffered']
    #allocation14 [shape = 'u8[131072]{0}', space=vmem, size = 0x20000, scoped, tag = 'input window, operand 7, single buffered']
    #allocation15 [shape = 's32[1]{0}', space=sflag, size = 0x4, scoped, tag = 'scoped memory for tpu_custom_call.1']
    #allocation16 [shape = 'u8[1024]{0}', space=vmem, size = 0x400, scoped, tag = 'input window, operand 8, single buffered']
    #allocation17 [shape = 'u8[1024]{0}', space=vmem, size = 0x400, scoped, tag = 'input window, operand 9, single buffered']
    #allocation18 [shape = 's32[1]{0}', space=sflag, size = 0x4, scoped, tag = 'scoped memory for tpu_custom_call.1']
    #allocation19 [shape = 'u8[32768]{0}', space=vmem, size = 0x8000, scoped, tag = 'input window, operand 10, single buffered']
    #allocation20 [shape = 'u8[512]{0}', space=vmem, size = 0x400, scoped, tag = 'input window, operand 11, single buffered']
    #allocation21 [shape = 's32[1]{0}', space=sflag, size = 0x4, scoped, tag = 'scoped memory for tpu_custom_call.1']
    #allocation22 [shape = 'u8[512]{0}', space=vmem, size = 0x400, scoped, tag = 'input window, operand 12, single buffered']
    #allocation23 [shape = 'u8[4096]{0}', space=vmem, size = 0x1000, scoped, tag = 'output window, operand 0, single buffered']
    %18 = vsyncpa [#allocation3], 0
    %19 = vsyncpa [#allocation6], 0
    %20 = vsyncpa [#allocation9], 0
    %21 = vsyncpa [#allocation12], 0
    %22 = vsyncpa [#allocation15], 0
    %23 = vsyncpa [#allocation18], 0
    %24 = vsyncpa [#allocation21], 0
    %25 = vsyncpa [#allocation4], 0
    // Predicated region
    $region2: #{tpu_custom_call.1} parent=1 // pred_check
      _
    $region3: #{tpu_custom_call.1} parent=1 // pred_check_branch
      %27 = sbr.rel (0) target = $region5
    $region4: #{tpu_custom_call.1} parent=1 // pred_region
      %s29 = ssub.s32 768, 768
      %30 = vsyncadd [#allocation3], %s29
      %s32 = sshll.u32 [#allocation2], 4
      %s33 = int_to_ptr.vmem [resolvable:$true] %s32
      %35 = dma.hbm_to_vmem [thread:$0]  %s0, 768, %s33, [#allocation3]
    $region5: #{tpu_custom_call.1} parent=1 // pred_fallthru
      _
    // Predicated region
    $region6: #{tpu_custom_call.1} parent=1 // pred_check
      _
    $region7: #{tpu_custom_call.1} parent=1 // pred_check_branch
      %37 = sbr.rel (0) target = $region9
    $region8: #{tpu_custom_call.1} parent=1 // pred_region
      %s39 = ssub.s32 49152, 49152
      %40 = vsyncadd [#allocation6], %s39
      %s41 = sshll.u32 [#allocation5], 4
      %s42 = int_to_ptr.vmem [resolvable:$true] %s41
      %47 = dma.hbm_to_vmem [thread:$0]  %s1, 49152, %s42, [#allocation6], 1024, 1024, 64
    $region9: #{tpu_custom_call.1} parent=1 // pred_fallthru
      _
    // Predicated region
    $region10: #{tpu_custom_call.1} parent=1 // pred_check
      _
    $region11: #{tpu_custom_call.1} parent=1 // pred_check_branch
      %49 = sbr.rel (0) target = $region13
    $region12: #{tpu_custom_call.1} parent=1 // pred_region
      %s51 = ssub.s32 128, 128
      %52 = vsyncadd [#allocation6], %s51
      %s54 = sshll.u32 [#allocation7], 4
      %s55 = int_to_ptr.vmem [resolvable:$true] %s54
      %57 = dma.hbm_to_vmem [thread:$0]  %s2, 128, %s55, [#allocation6]
    $region13: #{tpu_custom_call.1} parent=1 // pred_fallthru
      _
    // Predicated region
    $region14: #{tpu_custom_call.1} parent=1 // pred_check
      _
    $region15: #{tpu_custom_call.1} parent=1 // pred_check_branch
      %59 = sbr.rel (0) target = $region17
    $region16: #{tpu_custom_call.1} parent=1 // pred_region
      %s61 = ssub.s32 128, 128
      %62 = vsyncadd [#allocation9], %s61
      %s64 = sshll.u32 [#allocation8], 4
      %s65 = int_to_ptr.vmem [resolvable:$true] %s64
      %67 = dma.hbm_to_vmem [thread:$0]  %s3, 128, %s65, [#allocation9]
    $region17: #{tpu_custom_call.1} parent=1 // pred_fallthru
      _
    // Predicated region
    $region18: #{tpu_custom_call.1} parent=1 // pred_check
      _
    $region19: #{tpu_custom_call.1} parent=1 // pred_check_branch
      %69 = sbr.rel (0) target = $region21
    $region20: #{tpu_custom_call.1} parent=1 // pred_region
      %s71 = ssub.s32 16384, 16384
      %72 = vsyncadd [#allocation9], %s71
      %s73 = sshll.u32 [#allocation10], 4
      %s74 = int_to_ptr.vmem [resolvable:$true] %s73
      %79 = dma.hbm_to_vmem [thread:$0]  %s4, 16384, %s74, [#allocation9], 512, 512, 32
    $region21: #{tpu_custom_call.1} parent=1 // pred_fallthru
      _
    // Predicated region
    $region22: #{tpu_custom_call.1} parent=1 // pred_check
      _
    $region23: #{tpu_custom_call.1} parent=1 // pred_check_branch
      %81 = sbr.rel (0) target = $region25
    $region24: #{tpu_custom_call.1} parent=1 // pred_region
      %s83 = ssub.s32 64, 64
      %84 = vsyncadd [#allocation12], %s83
      %s86 = sshll.u32 [#allocation11], 4
      %s87 = int_to_ptr.vmem [resolvable:$true] %s86
      %89 = dma.hbm_to_vmem [thread:$0]  %s5, 64, %s87, [#allocation12]
    $region25: #{tpu_custom_call.1} parent=1 // pred_fallthru
      _
    // Predicated region
    $region26: #{tpu_custom_call.1} parent=1 // pred_check
      _
    $region27: #{tpu_custom_call.1} parent=1 // pred_check_branch
      %91 = sbr.rel (0) target = $region29
    $region28: #{tpu_custom_call.1} parent=1 // pred_region
      %s93 = ssub.s32 64, 64
      %94 = vsyncadd [#allocation12], %s93
      %s96 = sshll.u32 [#allocation13], 4
      %s97 = int_to_ptr.vmem [resolvable:$true] %s96
      %99 = dma.hbm_to_vmem [thread:$0]  %s6, 64, %s97, [#allocation12]
    $region29: #{tpu_custom_call.1} parent=1 // pred_fallthru
      _
    // Predicated region
    $region30: #{tpu_custom_call.1} parent=1 // pred_check
      _
    $region31: #{tpu_custom_call.1} parent=1 // pred_check_branch
      %101 = sbr.rel (0) target = $region33
    $region32: #{tpu_custom_call.1} parent=1 // pred_region
      %s103 = ssub.s32 4096, 4096
      %104 = vsyncadd [#allocation15], %s103
      %s105 = sshll.u32 [#allocation14], 4
      %s106 = int_to_ptr.vmem [resolvable:$true] %s105
      %111 = dma.hbm_to_vmem [thread:$0]  %s7, 4096, %s106, [#allocation15], 256, 256, 16
    $region33: #{tpu_custom_call.1} parent=1 // pred_fallthru
      _
    // Predicated region
    $region34: #{tpu_custom_call.1} parent=1 // pred_check
      _
    $region35: #{tpu_custom_call.1} parent=1 // pred_check_branch
      %113 = sbr.rel (0) target = $region37
    $region36: #{tpu_custom_call.1} parent=1 // pred_region
      %s115 = ssub.s32 32, 32
      %116 = vsyncadd [#allocation15], %s115
      %s118 = sshll.u32 [#allocation16], 4
      %s119 = int_to_ptr.vmem [resolvable:$true] %s118
      %121 = dma.hbm_to_vmem [thread:$0]  %s8, 32, %s119, [#allocation15]
    $region37: #{tpu_custom_call.1} parent=1 // pred_fallthru
      _
    // Predicated region
    $region38: #{tpu_custom_call.1} parent=1 // pred_check
      _
    $region39: #{tpu_custom_call.1} parent=1 // pred_check_branch
      %123 = sbr.rel (0) target = $region41
    $region40: #{tpu_custom_call.1} parent=1 // pred_region
      %s125 = ssub.s32 32, 32
      %126 = vsyncadd [#allocation18], %s125
      %s128 = sshll.u32 [#allocation17], 4
      %s129 = int_to_ptr.vmem [resolvable:$true] %s128
      %131 = dma.hbm_to_vmem [thread:$0]  %s9, 32, %s129, [#allocation18]
    $region41: #{tpu_custom_call.1} parent=1 // pred_fallthru
      _
    // Predicated region
    $region42: #{tpu_custom_call.1} parent=1 // pred_check
      _
    $region43: #{tpu_custom_call.1} parent=1 // pred_check_branch
      %133 = sbr.rel (0) target = $region45
    $region44: #{tpu_custom_call.1} parent=1 // pred_region
      %s135 = ssub.s32 1024, 1024
      %136 = vsyncadd [#allocation18], %s135
      %s137 = sshll.u32 [#allocation19], 4
      %s138 = int_to_ptr.vmem [resolvable:$true] %s137
      %143 = dma.hbm_to_vmem [thread:$0]  %s10, 1024, %s138, [#allocation18], 128, 128, 8
    $region45: #{tpu_custom_call.1} parent=1 // pred_fallthru
      _
    // Predicated region
    $region46: #{tpu_custom_call.1} parent=1 // pred_check
      _
    $region47: #{tpu_custom_call.1} parent=1 // pred_check_branch
      %145 = sbr.rel (0) target = $region49
    $region48: #{tpu_custom_call.1} parent=1 // pred_region
      %s147 = ssub.s32 16, 16
      %148 = vsyncadd [#allocation21], %s147
      %s150 = sshll.u32 [#allocation20], 4
      %s151 = int_to_ptr.vmem [resolvable:$true] %s150
      %153 = dma.hbm_to_vmem [thread:$0]  %s11, 16, %s151, [#allocation21]
    $region49: #{tpu_custom_call.1} parent=1 // pred_fallthru
      _
    // Predicated region
    $region50: #{tpu_custom_call.1} parent=1 // pred_check
      _
    $region51: #{tpu_custom_call.1} parent=1 // pred_check_branch
      %155 = sbr.rel (0) target = $region53
    $region52: #{tpu_custom_call.1} parent=1 // pred_region
      %s157 = ssub.s32 16, 16
      %158 = vsyncadd [#allocation21], %s157
      %s160 = sshll.u32 [#allocation22], 4
      %s161 = int_to_ptr.vmem [resolvable:$true] %s160
      %163 = dma.hbm_to_vmem [thread:$0]  %s12, 16, %s161, [#allocation21]
    $region53: #{tpu_custom_call.1} parent=1 // pred_fallthru
      _
    // Predicated region
    $region54: #{tpu_custom_call.1} parent=1 // pred_check
      _
    $region55: #{tpu_custom_call.1} parent=1 // pred_check_branch
      %165 = sbr.rel (0) target = $region57
    $region56: #{tpu_custom_call.1} parent=1 // pred_region
      %166 = dma.done [#allocation3], 768
    $region57: #{tpu_custom_call.1} parent=1 // pred_fallthru
      _
    // Predicated region
    $region58: #{tpu_custom_call.1} parent=1 // pred_check
      _
    $region59: #{tpu_custom_call.1} parent=1 // pred_check_branch
      %168 = sbr.rel (0) target = $region61
    $region60: #{tpu_custom_call.1} parent=1 // pred_region
      %169 = dma.done [#allocation6], 49152
    $region61: #{tpu_custom_call.1} parent=1 // pred_fallthru
      _
    // Predicated region
    $region62: #{tpu_custom_call.1} parent=1 // pred_check
      _
    $region63: #{tpu_custom_call.1} parent=1 // pred_check_branch
      %171 = sbr.rel (0) target = $region65
    $region64: #{tpu_custom_call.1} parent=1 // pred_region
      %172 = dma.done [#allocation6], 128
    $region65: #{tpu_custom_call.1} parent=1 // pred_fallthru
      _
    // Predicated region
    $region66: #{tpu_custom_call.1} parent=1 // pred_check
      _
    $region67: #{tpu_custom_call.1} parent=1 // pred_check_branch
      %174 = sbr.rel (0) target = $region69
    $region68: #{tpu_custom_call.1} parent=1 // pred_region
      %175 = dma.done [#allocation9], 128
    $region69: #{tpu_custom_call.1} parent=1 // pred_fallthru
      _
    // Predicated region
    $region70: #{tpu_custom_call.1} parent=1 // pred_check
      _
    $region71: #{tpu_custom_call.1} parent=1 // pred_check_branch
      %177 = sbr.rel (0) target = $region73
    $region72: #{tpu_custom_call.1} parent=1 // pred_region
      %178 = dma.done [#allocation9], 16384
    $region73: #{tpu_custom_call.1} parent=1 // pred_fallthru
      _
    // Predicated region
    $region74: #{tpu_custom_call.1} parent=1 // pred_check
      _
    $region75: #{tpu_custom_call.1} parent=1 // pred_check_branch
      %180 = sbr.rel (0) target = $region77
    $region76: #{tpu_custom_call.1} parent=1 // pred_region
      %181 = dma.done [#allocation12], 64
    $region77: #{tpu_custom_call.1} parent=1 // pred_fallthru
      _
    // Predicated region
    $region78: #{tpu_custom_call.1} parent=1 // pred_check
      _
    $region79: #{tpu_custom_call.1} parent=1 // pred_check_branch
      %183 = sbr.rel (0) target = $region81
    $region80: #{tpu_custom_call.1} parent=1 // pred_region
      %184 = dma.done [#allocation12], 64
    $region81: #{tpu_custom_call.1} parent=1 // pred_fallthru
      _
    // Predicated region
    $region82: #{tpu_custom_call.1} parent=1 // pred_check
      _
    $region83: #{tpu_custom_call.1} parent=1 // pred_check_branch
      %186 = sbr.rel (0) target = $region85
    $region84: #{tpu_custom_call.1} parent=1 // pred_region
      %187 = dma.done [#allocation15], 4096
    $region85: #{tpu_custom_call.1} parent=1 // pred_fallthru
      _
    // Predicated region
    $region86: #{tpu_custom_call.1} parent=1 // pred_check
      _
    $region87: #{tpu_custom_call.1} parent=1 // pred_check_branch
      %189 = sbr.rel (0) target = $region89
    $region88: #{tpu_custom_call.1} parent=1 // pred_region
      %190 = dma.done [#allocation15], 32
    $region89: #{tpu_custom_call.1} parent=1 // pred_fallthru
      _
    // Predicated region
    $region90: #{tpu_custom_call.1} parent=1 // pred_check
      _
    $region91: #{tpu_custom_call.1} parent=1 // pred_check_branch
      %192 = sbr.rel (0) target = $region93
    $region92: #{tpu_custom_call.1} parent=1 // pred_region
      %193 = dma.done [#allocation18], 32
    $region93: #{tpu_custom_call.1} parent=1 // pred_fallthru
      _
    // Predicated region
    $region94: #{tpu_custom_call.1} parent=1 // pred_check
      _
    $region95: #{tpu_custom_call.1} parent=1 // pred_check_branch
      %195 = sbr.rel (0) target = $region97
    $region96: #{tpu_custom_call.1} parent=1 // pred_region
      %196 = dma.done [#allocation18], 1024
    $region97: #{tpu_custom_call.1} parent=1 // pred_fallthru
      _
    // Predicated region
    $region98: #{tpu_custom_call.1} parent=1 // pred_check
      _
    $region99: #{tpu_custom_call.1} parent=1 // pred_check_branch
      %198 = sbr.rel (0) target = $region101
    $region100: #{tpu_custom_call.1} parent=1 // pred_region
      %199 = dma.done [#allocation21], 16
    $region101: #{tpu_custom_call.1} parent=1 // pred_fallthru
      _
    // Predicated region
    $region102: #{tpu_custom_call.1} parent=1 // pred_check
      _
    $region103: #{tpu_custom_call.1} parent=1 // pred_check_branch
      %201 = sbr.rel (0) target = $region105
    $region104: #{tpu_custom_call.1} parent=1 // pred_region
      %202 = dma.done [#allocation21], 16
    $region105: #{tpu_custom_call.1} parent=1 // pred_fallthru
      _
    %v204 = vld [vmem:[#allocation2] sm:$0xff]
    %v205 = vld [vmem:[#allocation2 + $0x8] sm:$0xff]
    %v206 = vld [vmem:[#allocation2 + $0x10] sm:$0xff]
    %v207 = vld [vmem:[#allocation2 + $0x18] sm:$0xff]
    %v208 = vld [vmem:[#allocation2 + $0x20] sm:$0xff]
    %v209 = vld [vmem:[#allocation2 + $0x28] sm:$0xff]
    %v210 = vld [vmem:[#allocation5] sm:$0xff]
    %v211 = vld [vmem:[#allocation5 + $0x8] sm:$0xff]
    %v212 = vld [vmem:[#allocation5 + $0x10] sm:$0xff]
    %v213 = vld [vmem:[#allocation5 + $0x18] sm:$0xff]
    %v214 = vld [vmem:[#allocation5 + $0x20] sm:$0xff]
    %v215 = vld [vmem:[#allocation5 + $0x28] sm:$0xff]
    %v216 = vld [vmem:[#allocation5 + $0x30] sm:$0xff]
    %v217 = vld [vmem:[#allocation5 + $0x38] sm:$0xff]
    %v218 = vld [vmem:[#allocation5 + $0x40] sm:$0xff]
    %v219 = vld [vmem:[#allocation5 + $0x48] sm:$0xff]
    %v220 = vld [vmem:[#allocation5 + $0x50] sm:$0xff]
    %v221 = vld [vmem:[#allocation5 + $0x58] sm:$0xff]
    %v222 = vld [vmem:[#allocation5 + $0x60] sm:$0xff]
    %v223 = vld [vmem:[#allocation5 + $0x68] sm:$0xff]
    %v224 = vld [vmem:[#allocation5 + $0x70] sm:$0xff]
    %v225 = vld [vmem:[#allocation5 + $0x78] sm:$0xff]
    %v226 = vld [vmem:[#allocation5 + $0x80] sm:$0xff]
    %v227 = vld [vmem:[#allocation5 + $0x88] sm:$0xff]
    %v228 = vld [vmem:[#allocation5 + $0x90] sm:$0xff]
    %v229 = vld [vmem:[#allocation5 + $0x98] sm:$0xff]
    %v230 = vld [vmem:[#allocation5 + $0xa0] sm:$0xff]
    %v231 = vld [vmem:[#allocation5 + $0xa8] sm:$0xff]
    %v232 = vld [vmem:[#allocation5 + $0xb0] sm:$0xff]
    %v233 = vld [vmem:[#allocation5 + $0xb8] sm:$0xff]
    %v234 = vld [vmem:[#allocation5 + $0xc0] sm:$0xff]
    %v235 = vld [vmem:[#allocation5 + $0xc8] sm:$0xff]
    %v236 = vld [vmem:[#allocation5 + $0xd0] sm:$0xff]
    %v237 = vld [vmem:[#allocation5 + $0xd8] sm:$0xff]
    %v238 = vld [vmem:[#allocation5 + $0xe0] sm:$0xff]
    %v239 = vld [vmem:[#allocation5 + $0xe8] sm:$0xff]
    %v240 = vld [vmem:[#allocation5 + $0xf0] sm:$0xff]
    %v241 = vld [vmem:[#allocation5 + $0xf8] sm:$0xff]
    %v242 = vld [vmem:[#allocation5 + $0x100] sm:$0xff]
    %v243 = vld [vmem:[#allocation5 + $0x108] sm:$0xff]
    %v244 = vld [vmem:[#allocation5 + $0x110] sm:$0xff]
    %v245 = vld [vmem:[#allocation5 + $0x118] sm:$0xff]
    %v246 = vld [vmem:[#allocation5 + $0x120] sm:$0xff]
    %v247 = vld [vmem:[#allocation5 + $0x128] sm:$0xff]
    %v248 = vld [vmem:[#allocation5 + $0x130] sm:$0xff]
    %v249 = vld [vmem:[#allocation5 + $0x138] sm:$0xff]
    %v250 = vld [vmem:[#allocation5 + $0x140] sm:$0xff]
    %v251 = vld [vmem:[#allocation5 + $0x148] sm:$0xff]
    %v252 = vld [vmem:[#allocation5 + $0x150] sm:$0xff]
    %v253 = vld [vmem:[#allocation5 + $0x158] sm:$0xff]
    %v254 = vld [vmem:[#allocation5 + $0x160] sm:$0xff]
    %v255 = vld [vmem:[#allocation5 + $0x168] sm:$0xff]
    %v256 = vld [vmem:[#allocation5 + $0x170] sm:$0xff]
    %v257 = vld [vmem:[#allocation5 + $0x178] sm:$0xff]
    %v258 = vld [vmem:[#allocation5 + $0x180] sm:$0xff]
    %v259 = vld [vmem:[#allocation5 + $0x188] sm:$0xff]
    %v260 = vld [vmem:[#allocation5 + $0x190] sm:$0xff]
    %v261 = vld [vmem:[#allocation5 + $0x198] sm:$0xff]
    %v262 = vld [vmem:[#allocation5 + $0x1a0] sm:$0xff]
    %v263 = vld [vmem:[#allocation5 + $0x1a8] sm:$0xff]
    %v264 = vld [vmem:[#allocation5 + $0x1b0] sm:$0xff]
    %v265 = vld [vmem:[#allocation5 + $0x1b8] sm:$0xff]
    %v266 = vld [vmem:[#allocation5 + $0x1c0] sm:$0xff]
    %v267 = vld [vmem:[#allocation5 + $0x1c8] sm:$0xff]
    %v268 = vld [vmem:[#allocation5 + $0x1d0] sm:$0xff]
    %v269 = vld [vmem:[#allocation5 + $0x1d8] sm:$0xff]
    %v270 = vld [vmem:[#allocation5 + $0x1e0] sm:$0xff]
    %v271 = vld [vmem:[#allocation5 + $0x1e8] sm:$0xff]
    %v272 = vld [vmem:[#allocation5 + $0x1f0] sm:$0xff]
    %v273 = vld [vmem:[#allocation5 + $0x1f8] sm:$0xff]
    %v274 = vld [vmem:[#allocation5 + $0x200] sm:$0xff]
    %v275 = vld [vmem:[#allocation5 + $0x208] sm:$0xff]
    %v276 = vld [vmem:[#allocation5 + $0x210] sm:$0xff]
    %v277 = vld [vmem:[#allocation5 + $0x218] sm:$0xff]
    %v278 = vld [vmem:[#allocation5 + $0x220] sm:$0xff]
    %v279 = vld [vmem:[#allocation5 + $0x228] sm:$0xff]
    %v280 = vld [vmem:[#allocation5 + $0x230] sm:$0xff]
    %v281 = vld [vmem:[#allocation5 + $0x238] sm:$0xff]
    %v282 = vld [vmem:[#allocation5 + $0x240] sm:$0xff]
    %v283 = vld [vmem:[#allocation5 + $0x248] sm:$0xff]
    %v284 = vld [vmem:[#allocation5 + $0x250] sm:$0xff]
    %v285 = vld [vmem:[#allocation5 + $0x258] sm:$0xff]
    %v286 = vld [vmem:[#allocation5 + $0x260] sm:$0xff]
    %v287 = vld [vmem:[#allocation5 + $0x268] sm:$0xff]
    %v288 = vld [vmem:[#allocation5 + $0x270] sm:$0xff]
    %v289 = vld [vmem:[#allocation5 + $0x278] sm:$0xff]
    %v290 = vld [vmem:[#allocation5 + $0x280] sm:$0xff]
    %v291 = vld [vmem:[#allocation5 + $0x288] sm:$0xff]
    %v292 = vld [vmem:[#allocation5 + $0x290] sm:$0xff]
    %v293 = vld [vmem:[#allocation5 + $0x298] sm:$0xff]
    %v294 = vld [vmem:[#allocation5 + $0x2a0] sm:$0xff]
    %v295 = vld [vmem:[#allocation5 + $0x2a8] sm:$0xff]
    %v296 = vld [vmem:[#allocation5 + $0x2b0] sm:$0xff]
    %v297 = vld [vmem:[#allocation5 + $0x2b8] sm:$0xff]
    %v298 = vld [vmem:[#allocation5 + $0x2c0] sm:$0xff]
    %v299 = vld [vmem:[#allocation5 + $0x2c8] sm:$0xff]
    %v300 = vld [vmem:[#allocation5 + $0x2d0] sm:$0xff]
    %v301 = vld [vmem:[#allocation5 + $0x2d8] sm:$0xff]
    %v302 = vld [vmem:[#allocation5 + $0x2e0] sm:$0xff]
    %v303 = vld [vmem:[#allocation5 + $0x2e8] sm:$0xff]
    %v304 = vld [vmem:[#allocation5 + $0x2f0] sm:$0xff]
    %v305 = vld [vmem:[#allocation5 + $0x2f8] sm:$0xff]
    %v306 = vld [vmem:[#allocation5 + $0x300] sm:$0xff]
    %v307 = vld [vmem:[#allocation5 + $0x308] sm:$0xff]
    %v308 = vld [vmem:[#allocation5 + $0x310] sm:$0xff]
    %v309 = vld [vmem:[#allocation5 + $0x318] sm:$0xff]
    %v310 = vld [vmem:[#allocation5 + $0x320] sm:$0xff]
    %v311 = vld [vmem:[#allocation5 + $0x328] sm:$0xff]
    %v312 = vld [vmem:[#allocation5 + $0x330] sm:$0xff]
    %v313 = vld [vmem:[#allocation5 + $0x338] sm:$0xff]
    %v314 = vld [vmem:[#allocation5 + $0x340] sm:$0xff]
    %v315 = vld [vmem:[#allocation5 + $0x348] sm:$0xff]
    %v316 = vld [vmem:[#allocation5 + $0x350] sm:$0xff]
    %v317 = vld [vmem:[#allocation5 + $0x358] sm:$0xff]
    %v318 = vld [vmem:[#allocation5 + $0x360] sm:$0xff]
    %v319 = vld [vmem:[#allocation5 + $0x368] sm:$0xff]
    %v320 = vld [vmem:[#allocation5 + $0x370] sm:$0xff]
    %v321 = vld [vmem:[#allocation5 + $0x378] sm:$0xff]
    %v322 = vld [vmem:[#allocation5 + $0x380] sm:$0xff]
    %v323 = vld [vmem:[#allocation5 + $0x388] sm:$0xff]
    %v324 = vld [vmem:[#allocation5 + $0x390] sm:$0xff]
    %v325 = vld [vmem:[#allocation5 + $0x398] sm:$0xff]
    %v326 = vld [vmem:[#allocation5 + $0x3a0] sm:$0xff]
    %v327 = vld [vmem:[#allocation5 + $0x3a8] sm:$0xff]
    %v328 = vld [vmem:[#allocation5 + $0x3b0] sm:$0xff]
    %v329 = vld [vmem:[#allocation5 + $0x3b8] sm:$0xff]
    %v330 = vld [vmem:[#allocation5 + $0x3c0] sm:$0xff]
    %v331 = vld [vmem:[#allocation5 + $0x3c8] sm:$0xff]
    %v332 = vld [vmem:[#allocation5 + $0x3d0] sm:$0xff]
    %v333 = vld [vmem:[#allocation5 + $0x3d8] sm:$0xff]
    %v334 = vld [vmem:[#allocation5 + $0x3e0] sm:$0xff]
    %v335 = vld [vmem:[#allocation5 + $0x3e8] sm:$0xff]
    %v336 = vld [vmem:[#allocation5 + $0x3f0] sm:$0xff]
    %v337 = vld [vmem:[#allocation5 + $0x3f8] sm:$0xff]
    %v338 = vld [vmem:[#allocation5 + $0x400] sm:$0xff]
    %v339 = vld [vmem:[#allocation5 + $0x408] sm:$0xff]
    %v340 = vld [vmem:[#allocation5 + $0x410] sm:$0xff]
    %v341 = vld [vmem:[#allocation5 + $0x418] sm:$0xff]
    %v342 = vld [vmem:[#allocation5 + $0x420] sm:$0xff]
    %v343 = vld [vmem:[#allocation5 + $0x428] sm:$0xff]
    %v344 = vld [vmem:[#allocation5 + $0x430] sm:$0xff]
    %v345 = vld [vmem:[#allocation5 + $0x438] sm:$0xff]
    %v346 = vld [vmem:[#allocation5 + $0x440] sm:$0xff]
    %v347 = vld [vmem:[#allocation5 + $0x448] sm:$0xff]
    %v348 = vld [vmem:[#allocation5 + $0x450] sm:$0xff]
    %v349 = vld [vmem:[#allocation5 + $0x458] sm:$0xff]
    %v350 = vld [vmem:[#allocation5 + $0x460] sm:$0xff]
    %v351 = vld [vmem:[#allocation5 + $0x468] sm:$0xff]
    %v352 = vld [vmem:[#allocation5 + $0x470] sm:$0xff]
    %v353 = vld [vmem:[#allocation5 + $0x478] sm:$0xff]
    %v354 = vld [vmem:[#allocation5 + $0x480] sm:$0xff]
    %v355 = vld [vmem:[#allocation5 + $0x488] sm:$0xff]
    %v356 = vld [vmem:[#allocation5 + $0x490] sm:$0xff]
    %v357 = vld [vmem:[#allocation5 + $0x498] sm:$0xff]
    %v358 = vld [vmem:[#allocation5 + $0x4a0] sm:$0xff]
    %v359 = vld [vmem:[#allocation5 + $0x4a8] sm:$0xff]
    %v360 = vld [vmem:[#allocation5 + $0x4b0] sm:$0xff]
    %v361 = vld [vmem:[#allocation5 + $0x4b8] sm:$0xff]
    %v362 = vld [vmem:[#allocation5 + $0x4c0] sm:$0xff]
    %v363 = vld [vmem:[#allocation5 + $0x4c8] sm:$0xff]
    %v364 = vld [vmem:[#allocation5 + $0x4d0] sm:$0xff]
    %v365 = vld [vmem:[#allocation5 + $0x4d8] sm:$0xff]
    %v366 = vld [vmem:[#allocation5 + $0x4e0] sm:$0xff]
    %v367 = vld [vmem:[#allocation5 + $0x4e8] sm:$0xff]
    %v368 = vld [vmem:[#allocation5 + $0x4f0] sm:$0xff]
    %v369 = vld [vmem:[#allocation5 + $0x4f8] sm:$0xff]
    %v370 = vld [vmem:[#allocation5 + $0x500] sm:$0xff]
    %v371 = vld [vmem:[#allocation5 + $0x508] sm:$0xff]
    %v372 = vld [vmem:[#allocation5 + $0x510] sm:$0xff]
    %v373 = vld [vmem:[#allocation5 + $0x518] sm:$0xff]
    %v374 = vld [vmem:[#allocation5 + $0x520] sm:$0xff]
    %v375 = vld [vmem:[#allocation5 + $0x528] sm:$0xff]
    %v376 = vld [vmem:[#allocation5 + $0x530] sm:$0xff]
    %v377 = vld [vmem:[#allocation5 + $0x538] sm:$0xff]
    %v378 = vld [vmem:[#allocation5 + $0x540] sm:$0xff]
    %v379 = vld [vmem:[#allocation5 + $0x548] sm:$0xff]
    %v380 = vld [vmem:[#allocation5 + $0x550] sm:$0xff]
    %v381 = vld [vmem:[#allocation5 + $0x558] sm:$0xff]
    %v382 = vld [vmem:[#allocation5 + $0x560] sm:$0xff]
    %v383 = vld [vmem:[#allocation5 + $0x568] sm:$0xff]
    %v384 = vld [vmem:[#allocation5 + $0x570] sm:$0xff]
    %v385 = vld [vmem:[#allocation5 + $0x578] sm:$0xff]
    %v386 = vld [vmem:[#allocation5 + $0x580] sm:$0xff]
    %v387 = vld [vmem:[#allocation5 + $0x588] sm:$0xff]
    %v388 = vld [vmem:[#allocation5 + $0x590] sm:$0xff]
    %v389 = vld [vmem:[#allocation5 + $0x598] sm:$0xff]
    %v390 = vld [vmem:[#allocation5 + $0x5a0] sm:$0xff]
    %v391 = vld [vmem:[#allocation5 + $0x5a8] sm:$0xff]
    %v392 = vld [vmem:[#allocation5 + $0x5b0] sm:$0xff]
    %v393 = vld [vmem:[#allocation5 + $0x5b8] sm:$0xff]
    %v394 = vld [vmem:[#allocation5 + $0x5c0] sm:$0xff]
    %v395 = vld [vmem:[#allocation5 + $0x5c8] sm:$0xff]
    %v396 = vld [vmem:[#allocation5 + $0x5d0] sm:$0xff]
    %v397 = vld [vmem:[#allocation5 + $0x5d8] sm:$0xff]
    %v398 = vld [vmem:[#allocation5 + $0x5e0] sm:$0xff]
    %v399 = vld [vmem:[#allocation5 + $0x5e8] sm:$0xff]
    %v400 = vld [vmem:[#allocation5 + $0x5f0] sm:$0xff]
    %v401 = vld [vmem:[#allocation5 + $0x5f8] sm:$0xff]
    %v402 = vld [vmem:[#allocation5 + $0x600] sm:$0xff]
    %v403 = vld [vmem:[#allocation5 + $0x608] sm:$0xff]
    %v404 = vld [vmem:[#allocation5 + $0x610] sm:$0xff]
    %v405 = vld [vmem:[#allocation5 + $0x618] sm:$0xff]
    %v406 = vld [vmem:[#allocation5 + $0x620] sm:$0xff]
    %v407 = vld [vmem:[#allocation5 + $0x628] sm:$0xff]
    %v408 = vld [vmem:[#allocation5 + $0x630] sm:$0xff]
    %v409 = vld [vmem:[#allocation5 + $0x638] sm:$0xff]
    %v410 = vld [vmem:[#allocation5 + $0x640] sm:$0xff]
    %v411 = vld [vmem:[#allocation5 + $0x648] sm:$0xff]
    %v412 = vld [vmem:[#allocation5 + $0x650] sm:$0xff]
    %v413 = vld [vmem:[#allocation5 + $0x658] sm:$0xff]
    %v414 = vld [vmem:[#allocation5 + $0x660] sm:$0xff]
    %v415 = vld [vmem:[#allocation5 + $0x668] sm:$0xff]
    %v416 = vld [vmem:[#allocation5 + $0x670] sm:$0xff]
    %v417 = vld [vmem:[#allocation5 + $0x678] sm:$0xff]
    %v418 = vld [vmem:[#allocation5 + $0x680] sm:$0xff]
    %v419 = vld [vmem:[#allocation5 + $0x688] sm:$0xff]
    %v420 = vld [vmem:[#allocation5 + $0x690] sm:$0xff]
    %v421 = vld [vmem:[#allocation5 + $0x698] sm:$0xff]
    %v422 = vld [vmem:[#allocation5 + $0x6a0] sm:$0xff]
    %v423 = vld [vmem:[#allocation5 + $0x6a8] sm:$0xff]
    %v424 = vld [vmem:[#allocation5 + $0x6b0] sm:$0xff]
    %v425 = vld [vmem:[#allocation5 + $0x6b8] sm:$0xff]
    %v426 = vld [vmem:[#allocation5 + $0x6c0] sm:$0xff]
    %v427 = vld [vmem:[#allocation5 + $0x6c8] sm:$0xff]
    %v428 = vld [vmem:[#allocation5 + $0x6d0] sm:$0xff]
    %v429 = vld [vmem:[#allocation5 + $0x6d8] sm:$0xff]
    %v430 = vld [vmem:[#allocation5 + $0x6e0] sm:$0xff]
    %v431 = vld [vmem:[#allocation5 + $0x6e8] sm:$0xff]
    %v432 = vld [vmem:[#allocation5 + $0x6f0] sm:$0xff]
    %v433 = vld [vmem:[#allocation5 + $0x6f8] sm:$0xff]
    %v434 = vld [vmem:[#allocation5 + $0x700] sm:$0xff]
    %v435 = vld [vmem:[#allocation5 + $0x708] sm:$0xff]
    %v436 = vld [vmem:[#allocation5 + $0x710] sm:$0xff]
    %v437 = vld [vmem:[#allocation5 + $0x718] sm:$0xff]
    %v438 = vld [vmem:[#allocation5 + $0x720] sm:$0xff]
    %v439 = vld [vmem:[#allocation5 + $0x728] sm:$0xff]
    %v440 = vld [vmem:[#allocation5 + $0x730] sm:$0xff]
    %v441 = vld [vmem:[#allocation5 + $0x738] sm:$0xff]
    %v442 = vld [vmem:[#allocation5 + $0x740] sm:$0xff]
    %v443 = vld [vmem:[#allocation5 + $0x748] sm:$0xff]
    %v444 = vld [vmem:[#allocation5 + $0x750] sm:$0xff]
    %v445 = vld [vmem:[#allocation5 + $0x758] sm:$0xff]
    %v446 = vld [vmem:[#allocation5 + $0x760] sm:$0xff]
    %v447 = vld [vmem:[#allocation5 + $0x768] sm:$0xff]
    %v448 = vld [vmem:[#allocation5 + $0x770] sm:$0xff]
    %v449 = vld [vmem:[#allocation5 + $0x778] sm:$0xff]
    %v450 = vld [vmem:[#allocation5 + $0x780] sm:$0xff]
    %v451 = vld [vmem:[#allocation5 + $0x788] sm:$0xff]
    %v452 = vld [vmem:[#allocation5 + $0x790] sm:$0xff]
    %v453 = vld [vmem:[#allocation5 + $0x798] sm:$0xff]
    %v454 = vld [vmem:[#allocation5 + $0x7a0] sm:$0xff]
    %v455 = vld [vmem:[#allocation5 + $0x7a8] sm:$0xff]
    %v456 = vld [vmem:[#allocation5 + $0x7b0] sm:$0xff]
    %v457 = vld [vmem:[#allocation5 + $0x7b8] sm:$0xff]
    %v458 = vld [vmem:[#allocation5 + $0x7c0] sm:$0xff]
    %v459 = vld [vmem:[#allocation5 + $0x7c8] sm:$0xff]
    %v460 = vld [vmem:[#allocation5 + $0x7d0] sm:$0xff]
    %v461 = vld [vmem:[#allocation5 + $0x7d8] sm:$0xff]
    %v462 = vld [vmem:[#allocation5 + $0x7e0] sm:$0xff]
    %v463 = vld [vmem:[#allocation5 + $0x7e8] sm:$0xff]
    %v464 = vld [vmem:[#allocation5 + $0x7f0] sm:$0xff]
    %v465 = vld [vmem:[#allocation5 + $0x7f8] sm:$0xff]
    %v466 = vld [vmem:[#allocation5 + $0x800] sm:$0xff]
    %v467 = vld [vmem:[#allocation5 + $0x808] sm:$0xff]
    %v468 = vld [vmem:[#allocation5 + $0x810] sm:$0xff]
    %v469 = vld [vmem:[#allocation5 + $0x818] sm:$0xff]
    %v470 = vld [vmem:[#allocation5 + $0x820] sm:$0xff]
    %v471 = vld [vmem:[#allocation5 + $0x828] sm:$0xff]
    %v472 = vld [vmem:[#allocation5 + $0x830] sm:$0xff]
    %v473 = vld [vmem:[#allocation5 + $0x838] sm:$0xff]
    %v474 = vld [vmem:[#allocation5 + $0x840] sm:$0xff]
    %v475 = vld [vmem:[#allocation5 + $0x848] sm:$0xff]
    %v476 = vld [vmem:[#allocation5 + $0x850] sm:$0xff]
    %v477 = vld [vmem:[#allocation5 + $0x858] sm:$0xff]
    %v478 = vld [vmem:[#allocation5 + $0x860] sm:$0xff]
    %v479 = vld [vmem:[#allocation5 + $0x868] sm:$0xff]
    %v480 = vld [vmem:[#allocation5 + $0x870] sm:$0xff]
    %v481 = vld [vmem:[#allocation5 + $0x878] sm:$0xff]
    %v482 = vld [vmem:[#allocation5 + $0x880] sm:$0xff]
    %v483 = vld [vmem:[#allocation5 + $0x888] sm:$0xff]
    %v484 = vld [vmem:[#allocation5 + $0x890] sm:$0xff]
    %v485 = vld [vmem:[#allocation5 + $0x898] sm:$0xff]
    %v486 = vld [vmem:[#allocation5 + $0x8a0] sm:$0xff]
    %v487 = vld [vmem:[#allocation5 + $0x8a8] sm:$0xff]
    %v488 = vld [vmem:[#allocation5 + $0x8b0] sm:$0xff]
    %v489 = vld [vmem:[#allocation5 + $0x8b8] sm:$0xff]
    %v490 = vld [vmem:[#allocation5 + $0x8c0] sm:$0xff]
    %v491 = vld [vmem:[#allocation5 + $0x8c8] sm:$0xff]
    %v492 = vld [vmem:[#allocation5 + $0x8d0] sm:$0xff]
    %v493 = vld [vmem:[#allocation5 + $0x8d8] sm:$0xff]
    %v494 = vld [vmem:[#allocation5 + $0x8e0] sm:$0xff]
    %v495 = vld [vmem:[#allocation5 + $0x8e8] sm:$0xff]
    %v496 = vld [vmem:[#allocation5 + $0x8f0] sm:$0xff]
    %v497 = vld [vmem:[#allocation5 + $0x8f8] sm:$0xff]
    %v498 = vld [vmem:[#allocation5 + $0x900] sm:$0xff]
    %v499 = vld [vmem:[#allocation5 + $0x908] sm:$0xff]
    %v500 = vld [vmem:[#allocation5 + $0x910] sm:$0xff]
    %v501 = vld [vmem:[#allocation5 + $0x918] sm:$0xff]
    %v502 = vld [vmem:[#allocation5 + $0x920] sm:$0xff]
    %v503 = vld [vmem:[#allocation5 + $0x928] sm:$0xff]
    %v504 = vld [vmem:[#allocation5 + $0x930] sm:$0xff]
    %v505 = vld [vmem:[#allocation5 + $0x938] sm:$0xff]
    %v506 = vld [vmem:[#allocation5 + $0x940] sm:$0xff]
    %v507 = vld [vmem:[#allocation5 + $0x948] sm:$0xff]
    %v508 = vld [vmem:[#allocation5 + $0x950] sm:$0xff]
    %v509 = vld [vmem:[#allocation5 + $0x958] sm:$0xff]
    %v510 = vld [vmem:[#allocation5 + $0x960] sm:$0xff]
    %v511 = vld [vmem:[#allocation5 + $0x968] sm:$0xff]
    %v512 = vld [vmem:[#allocation5 + $0x970] sm:$0xff]
    %v513 = vld [vmem:[#allocation5 + $0x978] sm:$0xff]
    %v514 = vld [vmem:[#allocation5 + $0x980] sm:$0xff]
    %v515 = vld [vmem:[#allocation5 + $0x988] sm:$0xff]
    %v516 = vld [vmem:[#allocation5 + $0x990] sm:$0xff]
    %v517 = vld [vmem:[#allocation5 + $0x998] sm:$0xff]
    %v518 = vld [vmem:[#allocation5 + $0x9a0] sm:$0xff]
    %v519 = vld [vmem:[#allocation5 + $0x9a8] sm:$0xff]
    %v520 = vld [vmem:[#allocation5 + $0x9b0] sm:$0xff]
    %v521 = vld [vmem:[#allocation5 + $0x9b8] sm:$0xff]
    %v522 = vld [vmem:[#allocation5 + $0x9c0] sm:$0xff]
    %v523 = vld [vmem:[#allocation5 + $0x9c8] sm:$0xff]
    %v524 = vld [vmem:[#allocation5 + $0x9d0] sm:$0xff]
    %v525 = vld [vmem:[#allocation5 + $0x9d8] sm:$0xff]
    %v526 = vld [vmem:[#allocation5 + $0x9e0] sm:$0xff]
    %v527 = vld [vmem:[#allocation5 + $0x9e8] sm:$0xff]
    %v528 = vld [vmem:[#allocation5 + $0x9f0] sm:$0xff]
    %v529 = vld [vmem:[#allocation5 + $0x9f8] sm:$0xff]
    %v530 = vld [vmem:[#allocation5 + $0xa00] sm:$0xff]
    %v531 = vld [vmem:[#allocation5 + $0xa08] sm:$0xff]
    %v532 = vld [vmem:[#allocation5 + $0xa10] sm:$0xff]
    %v533 = vld [vmem:[#allocation5 + $0xa18] sm:$0xff]
    %v534 = vld [vmem:[#allocation5 + $0xa20] sm:$0xff]
    %v535 = vld [vmem:[#allocation5 + $0xa28] sm:$0xff]
    %v536 = vld [vmem:[#allocation5 + $0xa30] sm:$0xff]
    %v537 = vld [vmem:[#allocation5 + $0xa38] sm:$0xff]
    %v538 = vld [vmem:[#allocation5 + $0xa40] sm:$0xff]
    %v539 = vld [vmem:[#allocation5 + $0xa48] sm:$0xff]
    %v540 = vld [vmem:[#allocation5 + $0xa50] sm:$0xff]
    %v541 = vld [vmem:[#allocation5 + $0xa58] sm:$0xff]
    %v542 = vld [vmem:[#allocation5 + $0xa60] sm:$0xff]
    %v543 = vld [vmem:[#allocation5 + $0xa68] sm:$0xff]
    %v544 = vld [vmem:[#allocation5 + $0xa70] sm:$0xff]
    %v545 = vld [vmem:[#allocation5 + $0xa78] sm:$0xff]
    %v546 = vld [vmem:[#allocation5 + $0xa80] sm:$0xff]
    %v547 = vld [vmem:[#allocation5 + $0xa88] sm:$0xff]
    %v548 = vld [vmem:[#allocation5 + $0xa90] sm:$0xff]
    %v549 = vld [vmem:[#allocation5 + $0xa98] sm:$0xff]
    %v550 = vld [vmem:[#allocation5 + $0xaa0] sm:$0xff]
    %v551 = vld [vmem:[#allocation5 + $0xaa8] sm:$0xff]
    %v552 = vld [vmem:[#allocation5 + $0xab0] sm:$0xff]
    %v553 = vld [vmem:[#allocation5 + $0xab8] sm:$0xff]
    %v554 = vld [vmem:[#allocation5 + $0xac0] sm:$0xff]
    %v555 = vld [vmem:[#allocation5 + $0xac8] sm:$0xff]
    %v556 = vld [vmem:[#allocation5 + $0xad0] sm:$0xff]
    %v557 = vld [vmem:[#allocation5 + $0xad8] sm:$0xff]
    %v558 = vld [vmem:[#allocation5 + $0xae0] sm:$0xff]
    %v559 = vld [vmem:[#allocation5 + $0xae8] sm:$0xff]
    %v560 = vld [vmem:[#allocation5 + $0xaf0] sm:$0xff]
    %v561 = vld [vmem:[#allocation5 + $0xaf8] sm:$0xff]
    %v562 = vld [vmem:[#allocation5 + $0xb00] sm:$0xff]
    %v563 = vld [vmem:[#allocation5 + $0xb08] sm:$0xff]
    %v564 = vld [vmem:[#allocation5 + $0xb10] sm:$0xff]
    %v565 = vld [vmem:[#allocation5 + $0xb18] sm:$0xff]
    %v566 = vld [vmem:[#allocation5 + $0xb20] sm:$0xff]
    %v567 = vld [vmem:[#allocation5 + $0xb28] sm:$0xff]
    %v568 = vld [vmem:[#allocation5 + $0xb30] sm:$0xff]
    %v569 = vld [vmem:[#allocation5 + $0xb38] sm:$0xff]
    %v570 = vld [vmem:[#allocation5 + $0xb40] sm:$0xff]
    %v571 = vld [vmem:[#allocation5 + $0xb48] sm:$0xff]
    %v572 = vld [vmem:[#allocation5 + $0xb50] sm:$0xff]
    %v573 = vld [vmem:[#allocation5 + $0xb58] sm:$0xff]
    %v574 = vld [vmem:[#allocation5 + $0xb60] sm:$0xff]
    %v575 = vld [vmem:[#allocation5 + $0xb68] sm:$0xff]
    %v576 = vld [vmem:[#allocation5 + $0xb70] sm:$0xff]
    %v577 = vld [vmem:[#allocation5 + $0xb78] sm:$0xff]
    %v578 = vld [vmem:[#allocation5 + $0xb80] sm:$0xff]
    %v579 = vld [vmem:[#allocation5 + $0xb88] sm:$0xff]
    %v580 = vld [vmem:[#allocation5 + $0xb90] sm:$0xff]
    %v581 = vld [vmem:[#allocation5 + $0xb98] sm:$0xff]
    %v582 = vld [vmem:[#allocation5 + $0xba0] sm:$0xff]
    %v583 = vld [vmem:[#allocation5 + $0xba8] sm:$0xff]
    %v584 = vld [vmem:[#allocation5 + $0xbb0] sm:$0xff]
    %v585 = vld [vmem:[#allocation5 + $0xbb8] sm:$0xff]
    %v586 = vld [vmem:[#allocation5 + $0xbc0] sm:$0xff]
    %v587 = vld [vmem:[#allocation5 + $0xbc8] sm:$0xff]
    %v588 = vld [vmem:[#allocation5 + $0xbd0] sm:$0xff]
    %v589 = vld [vmem:[#allocation5 + $0xbd8] sm:$0xff]
    %v590 = vld [vmem:[#allocation5 + $0xbe0] sm:$0xff]
    %v591 = vld [vmem:[#allocation5 + $0xbe8] sm:$0xff]
    %v592 = vld [vmem:[#allocation5 + $0xbf0] sm:$0xff]
    %v593 = vld [vmem:[#allocation5 + $0xbf8] sm:$0xff]
    %v594 = vunpack.c.l.s8.bf16 %v210
    %v595 = vunpack.c.l.s8.bf16 %v211
    %v596 = vunpack.c.l.s8.bf16 %v212
    %v597 = vunpack.c.l.s8.bf16 %v213
    %v598 = vunpack.c.l.s8.bf16 %v214
    %v599 = vunpack.c.l.s8.bf16 %v215
    %v600 = vunpack.c.l.s8.bf16 %v216
    %v601 = vunpack.c.l.s8.bf16 %v217
    %v602 = vunpack.c.h.s8.bf16 %v210
    %v603 = vunpack.c.h.s8.bf16 %v211
    %v604 = vunpack.c.h.s8.bf16 %v212
    %v605 = vunpack.c.h.s8.bf16 %v213
    %v606 = vunpack.c.h.s8.bf16 %v214
    %v607 = vunpack.c.h.s8.bf16 %v215
    %v608 = vunpack.c.h.s8.bf16 %v216
    %v609 = vunpack.c.h.s8.bf16 %v217
    %v610 = vunpack.c.l.s8.bf16 %v218
    %v611 = vunpack.c.l.s8.bf16 %v219
    %v612 = vunpack.c.l.s8.bf16 %v220
    %v613 = vunpack.c.l.s8.bf16 %v221
    %v614 = vunpack.c.l.s8.bf16 %v222
    %v615 = vunpack.c.l.s8.bf16 %v223
    %v616 = vunpack.c.l.s8.bf16 %v224
    %v617 = vunpack.c.l.s8.bf16 %v225
    %v618 = vunpack.c.h.s8.bf16 %v218
    %v619 = vunpack.c.h.s8.bf16 %v219
    %v620 = vunpack.c.h.s8.bf16 %v220
    %v621 = vunpack.c.h.s8.bf16 %v221
    %v622 = vunpack.c.h.s8.bf16 %v222
    %v623 = vunpack.c.h.s8.bf16 %v223
    %v624 = vunpack.c.h.s8.bf16 %v224
    %v625 = vunpack.c.h.s8.bf16 %v225
    %v626 = vunpack.c.l.s8.bf16 %v226
    %v627 = vunpack.c.l.s8.bf16 %v227
    %v628 = vunpack.c.l.s8.bf16 %v228
    %v629 = vunpack.c.l.s8.bf16 %v229
    %v630 = vunpack.c.l.s8.bf16 %v230
    %v631 = vunpack.c.l.s8.bf16 %v231
    %v632 = vunpack.c.l.s8.bf16 %v232
    %v633 = vunpack.c.l.s8.bf16 %v233
    %v634 = vunpack.c.h.s8.bf16 %v226
    %v635 = vunpack.c.h.s8.bf16 %v227
    %v636 = vunpack.c.h.s8.bf16 %v228
    %v637 = vunpack.c.h.s8.bf16 %v229
    %v638 = vunpack.c.h.s8.bf16 %v230
    %v639 = vunpack.c.h.s8.bf16 %v231
    %v640 = vunpack.c.h.s8.bf16 %v232
    %v641 = vunpack.c.h.s8.bf16 %v233
    %v642 = vunpack.c.l.s8.bf16 %v234
    %v643 = vunpack.c.l.s8.bf16 %v235
    %v644 = vunpack.c.l.s8.bf16 %v236
    %v645 = vunpack.c.l.s8.bf16 %v237
    %v646 = vunpack.c.l.s8.bf16 %v238
    %v647 = vunpack.c.l.s8.bf16 %v239
    %v648 = vunpack.c.l.s8.bf16 %v240
    %v649 = vunpack.c.l.s8.bf16 %v241
    %v650 = vunpack.c.h.s8.bf16 %v234
    %v651 = vunpack.c.h.s8.bf16 %v235
    %v652 = vunpack.c.h.s8.bf16 %v236
    %v653 = vunpack.c.h.s8.bf16 %v237
    %v654 = vunpack.c.h.s8.bf16 %v238
    %v655 = vunpack.c.h.s8.bf16 %v239
    %v656 = vunpack.c.h.s8.bf16 %v240
    %v657 = vunpack.c.h.s8.bf16 %v241
    %v658 = vunpack.c.l.s8.bf16 %v242
    %v659 = vunpack.c.l.s8.bf16 %v243
    %v660 = vunpack.c.l.s8.bf16 %v244
    %v661 = vunpack.c.l.s8.bf16 %v245
    %v662 = vunpack.c.l.s8.bf16 %v246
    %v663 = vunpack.c.l.s8.bf16 %v247
    %v664 = vunpack.c.l.s8.bf16 %v248
    %v665 = vunpack.c.l.s8.bf16 %v249
    %v666 = vunpack.c.h.s8.bf16 %v242
    %v667 = vunpack.c.h.s8.bf16 %v243
    %v668 = vunpack.c.h.s8.bf16 %v244
    %v669 = vunpack.c.h.s8.bf16 %v245
    %v670 = vunpack.c.h.s8.bf16 %v246
    %v671 = vunpack.c.h.s8.bf16 %v247
    %v672 = vunpack.c.h.s8.bf16 %v248
    %v673 = vunpack.c.h.s8.bf16 %v249
    %v674 = vunpack.c.l.s8.bf16 %v250
    %v675 = vunpack.c.l.s8.bf16 %v251
    %v676 = vunpack.c.l.s8.bf16 %v252
    %v677 = vunpack.c.l.s8.bf16 %v253
    %v678 = vunpack.c.l.s8.bf16 %v254
    %v679 = vunpack.c.l.s8.bf16 %v255
    %v680 = vunpack.c.l.s8.bf16 %v256
    %v681 = vunpack.c.l.s8.bf16 %v257
    %v682 = vunpack.c.h.s8.bf16 %v250
    %v683 = vunpack.c.h.s8.bf16 %v251
    %v684 = vunpack.c.h.s8.bf16 %v252
    %v685 = vunpack.c.h.s8.bf16 %v253
    %v686 = vunpack.c.h.s8.bf16 %v254
    %v687 = vunpack.c.h.s8.bf16 %v255
    %v688 = vunpack.c.h.s8.bf16 %v256
    %v689 = vunpack.c.h.s8.bf16 %v257
    %v690 = vunpack.c.l.s8.bf16 %v258
    %v691 = vunpack.c.l.s8.bf16 %v259
    %v692 = vunpack.c.l.s8.bf16 %v260
    %v693 = vunpack.c.l.s8.bf16 %v261
    %v694 = vunpack.c.l.s8.bf16 %v262
    %v695 = vunpack.c.l.s8.bf16 %v263
    %v696 = vunpack.c.l.s8.bf16 %v264
    %v697 = vunpack.c.l.s8.bf16 %v265
    %v698 = vunpack.c.h.s8.bf16 %v258
    %v699 = vunpack.c.h.s8.bf16 %v259
    %v700 = vunpack.c.h.s8.bf16 %v260
    %v701 = vunpack.c.h.s8.bf16 %v261
    %v702 = vunpack.c.h.s8.bf16 %v262
    %v703 = vunpack.c.h.s8.bf16 %v263
    %v704 = vunpack.c.h.s8.bf16 %v264
    %v705 = vunpack.c.h.s8.bf16 %v265
    %v706 = vunpack.c.l.s8.bf16 %v266
    %v707 = vunpack.c.l.s8.bf16 %v267
    %v708 = vunpack.c.l.s8.bf16 %v268
    %v709 = vunpack.c.l.s8.bf16 %v269
    %v710 = vunpack.c.l.s8.bf16 %v270
    %v711 = vunpack.c.l.s8.bf16 %v271
    %v712 = vunpack.c.l.s8.bf16 %v272
    %v713 = vunpack.c.l.s8.bf16 %v273
    %v714 = vunpack.c.h.s8.bf16 %v266
    %v715 = vunpack.c.h.s8.bf16 %v267
    %v716 = vunpack.c.h.s8.bf16 %v268
    %v717 = vunpack.c.h.s8.bf16 %v269
    %v718 = vunpack.c.h.s8.bf16 %v270
    %v719 = vunpack.c.h.s8.bf16 %v271
    %v720 = vunpack.c.h.s8.bf16 %v272
    %v721 = vunpack.c.h.s8.bf16 %v273
    %v722 = vunpack.c.l.s8.bf16 %v274
    %v723 = vunpack.c.l.s8.bf16 %v275
    %v724 = vunpack.c.l.s8.bf16 %v276
    %v725 = vunpack.c.l.s8.bf16 %v277
    %v726 = vunpack.c.l.s8.bf16 %v278
    %v727 = vunpack.c.l.s8.bf16 %v279
    %v728 = vunpack.c.l.s8.bf16 %v280
    %v729 = vunpack.c.l.s8.bf16 %v281
    %v730 = vunpack.c.h.s8.bf16 %v274
    %v731 = vunpack.c.h.s8.bf16 %v275
    %v732 = vunpack.c.h.s8.bf16 %v276
    %v733 = vunpack.c.h.s8.bf16 %v277
    %v734 = vunpack.c.h.s8.bf16 %v278
    %v735 = vunpack.c.h.s8.bf16 %v279
    %v736 = vunpack.c.h.s8.bf16 %v280
    %v737 = vunpack.c.h.s8.bf16 %v281
    %v738 = vunpack.c.l.s8.bf16 %v282
    %v739 = vunpack.c.l.s8.bf16 %v283
    %v740 = vunpack.c.l.s8.bf16 %v284
    %v741 = vunpack.c.l.s8.bf16 %v285
    %v742 = vunpack.c.l.s8.bf16 %v286
    %v743 = vunpack.c.l.s8.bf16 %v287
    %v744 = vunpack.c.l.s8.bf16 %v288
    %v745 = vunpack.c.l.s8.bf16 %v289
    %v746 = vunpack.c.h.s8.bf16 %v282
    %v747 = vunpack.c.h.s8.bf16 %v283
    %v748 = vunpack.c.h.s8.bf16 %v284
    %v749 = vunpack.c.h.s8.bf16 %v285
    %v750 = vunpack.c.h.s8.bf16 %v286
    %v751 = vunpack.c.h.s8.bf16 %v287
    %v752 = vunpack.c.h.s8.bf16 %v288
    %v753 = vunpack.c.h.s8.bf16 %v289
    %v754 = vunpack.c.l.s8.bf16 %v290
    %v755 = vunpack.c.l.s8.bf16 %v291
    %v756 = vunpack.c.l.s8.bf16 %v292
    %v757 = vunpack.c.l.s8.bf16 %v293
    %v758 = vunpack.c.l.s8.bf16 %v294
    %v759 = vunpack.c.l.s8.bf16 %v295
    %v760 = vunpack.c.l.s8.bf16 %v296
    %v761 = vunpack.c.l.s8.bf16 %v297
    %v762 = vunpack.c.h.s8.bf16 %v290
    %v763 = vunpack.c.h.s8.bf16 %v291
    %v764 = vunpack.c.h.s8.bf16 %v292
    %v765 = vunpack.c.h.s8.bf16 %v293
    %v766 = vunpack.c.h.s8.bf16 %v294
    %v767 = vunpack.c.h.s8.bf16 %v295
    %v768 = vunpack.c.h.s8.bf16 %v296
    %v769 = vunpack.c.h.s8.bf16 %v297
    %v770 = vunpack.c.l.s8.bf16 %v298
    %v771 = vunpack.c.l.s8.bf16 %v299
    %v772 = vunpack.c.l.s8.bf16 %v300
    %v773 = vunpack.c.l.s8.bf16 %v301
    %v774 = vunpack.c.l.s8.bf16 %v302
    %v775 = vunpack.c.l.s8.bf16 %v303
    %v776 = vunpack.c.l.s8.bf16 %v304
    %v777 = vunpack.c.l.s8.bf16 %v305
    %v778 = vunpack.c.h.s8.bf16 %v298
    %v779 = vunpack.c.h.s8.bf16 %v299
    %v780 = vunpack.c.h.s8.bf16 %v300
    %v781 = vunpack.c.h.s8.bf16 %v301
    %v782 = vunpack.c.h.s8.bf16 %v302
    %v783 = vunpack.c.h.s8.bf16 %v303
    %v784 = vunpack.c.h.s8.bf16 %v304
    %v785 = vunpack.c.h.s8.bf16 %v305
    %v786 = vunpack.c.l.s8.bf16 %v306
    %v787 = vunpack.c.l.s8.bf16 %v307
    %v788 = vunpack.c.l.s8.bf16 %v308
    %v789 = vunpack.c.l.s8.bf16 %v309
    %v790 = vunpack.c.l.s8.bf16 %v310
    %v791 = vunpack.c.l.s8.bf16 %v311
    %v792 = vunpack.c.l.s8.bf16 %v312
    %v793 = vunpack.c.l.s8.bf16 %v313
    %v794 = vunpack.c.h.s8.bf16 %v306
    %v795 = vunpack.c.h.s8.bf16 %v307
    %v796 = vunpack.c.h.s8.bf16 %v308
    %v797 = vunpack.c.h.s8.bf16 %v309
    %v798 = vunpack.c.h.s8.bf16 %v310
    %v799 = vunpack.c.h.s8.bf16 %v311
    %v800 = vunpack.c.h.s8.bf16 %v312
    %v801 = vunpack.c.h.s8.bf16 %v313
    %v802 = vunpack.c.l.s8.bf16 %v314
    %v803 = vunpack.c.l.s8.bf16 %v315
    %v804 = vunpack.c.l.s8.bf16 %v316
    %v805 = vunpack.c.l.s8.bf16 %v317
    %v806 = vunpack.c.l.s8.bf16 %v318
    %v807 = vunpack.c.l.s8.bf16 %v319
    %v808 = vunpack.c.l.s8.bf16 %v320
    %v809 = vunpack.c.l.s8.bf16 %v321
    %v810 = vunpack.c.h.s8.bf16 %v314
    %v811 = vunpack.c.h.s8.bf16 %v315
    %v812 = vunpack.c.h.s8.bf16 %v316
    %v813 = vunpack.c.h.s8.bf16 %v317
    %v814 = vunpack.c.h.s8.bf16 %v318
    %v815 = vunpack.c.h.s8.bf16 %v319
    %v816 = vunpack.c.h.s8.bf16 %v320
    %v817 = vunpack.c.h.s8.bf16 %v321
    %v818 = vunpack.c.l.s8.bf16 %v322
    %v819 = vunpack.c.l.s8.bf16 %v323
    %v820 = vunpack.c.l.s8.bf16 %v324
    %v821 = vunpack.c.l.s8.bf16 %v325
    %v822 = vunpack.c.l.s8.bf16 %v326
    %v823 = vunpack.c.l.s8.bf16 %v327
    %v824 = vunpack.c.l.s8.bf16 %v328
    %v825 = vunpack.c.l.s8.bf16 %v329
    %v826 = vunpack.c.h.s8.bf16 %v322
    %v827 = vunpack.c.h.s8.bf16 %v323
    %v828 = vunpack.c.h.s8.bf16 %v324
    %v829 = vunpack.c.h.s8.bf16 %v325
    %v830 = vunpack.c.h.s8.bf16 %v326
    %v831 = vunpack.c.h.s8.bf16 %v327
    %v832 = vunpack.c.h.s8.bf16 %v328
    %v833 = vunpack.c.h.s8.bf16 %v329
    %v834 = vunpack.c.l.s8.bf16 %v330
    %v835 = vunpack.c.l.s8.bf16 %v331
    %v836 = vunpack.c.l.s8.bf16 %v332
    %v837 = vunpack.c.l.s8.bf16 %v333
    %v838 = vunpack.c.l.s8.bf16 %v334
    %v839 = vunpack.c.l.s8.bf16 %v335
    %v840 = vunpack.c.l.s8.bf16 %v336
    %v841 = vunpack.c.l.s8.bf16 %v337
    %v842 = vunpack.c.h.s8.bf16 %v330
    %v843 = vunpack.c.h.s8.bf16 %v331
    %v844 = vunpack.c.h.s8.bf16 %v332
    %v845 = vunpack.c.h.s8.bf16 %v333
    %v846 = vunpack.c.h.s8.bf16 %v334
    %v847 = vunpack.c.h.s8.bf16 %v335
    %v848 = vunpack.c.h.s8.bf16 %v336
    %v849 = vunpack.c.h.s8.bf16 %v337
    %v850 = vunpack.c.l.s8.bf16 %v338
    %v851 = vunpack.c.l.s8.bf16 %v339
    %v852 = vunpack.c.l.s8.bf16 %v340
    %v853 = vunpack.c.l.s8.bf16 %v341
    %v854 = vunpack.c.l.s8.bf16 %v342
    %v855 = vunpack.c.l.s8.bf16 %v343
    %v856 = vunpack.c.l.s8.bf16 %v344
    %v857 = vunpack.c.l.s8.bf16 %v345
    %v858 = vunpack.c.h.s8.bf16 %v338
    %v859 = vunpack.c.h.s8.bf16 %v339
    %v860 = vunpack.c.h.s8.bf16 %v340
    %v861 = vunpack.c.h.s8.bf16 %v341
    %v862 = vunpack.c.h.s8.bf16 %v342
    %v863 = vunpack.c.h.s8.bf16 %v343
    %v864 = vunpack.c.h.s8.bf16 %v344
    %v865 = vunpack.c.h.s8.bf16 %v345
    %v866 = vunpack.c.l.s8.bf16 %v346
    %v867 = vunpack.c.l.s8.bf16 %v347
    %v868 = vunpack.c.l.s8.bf16 %v348
    %v869 = vunpack.c.l.s8.bf16 %v349
    %v870 = vunpack.c.l.s8.bf16 %v350
    %v871 = vunpack.c.l.s8.bf16 %v351
    %v872 = vunpack.c.l.s8.bf16 %v352
    %v873 = vunpack.c.l.s8.bf16 %v353
    %v874 = vunpack.c.h.s8.bf16 %v346
    %v875 = vunpack.c.h.s8.bf16 %v347
    %v876 = vunpack.c.h.s8.bf16 %v348
    %v877 = vunpack.c.h.s8.bf16 %v349
    %v878 = vunpack.c.h.s8.bf16 %v350
    %v879 = vunpack.c.h.s8.bf16 %v351
    %v880 = vunpack.c.h.s8.bf16 %v352
    %v881 = vunpack.c.h.s8.bf16 %v353
    %v882 = vunpack.c.l.s8.bf16 %v354
    %v883 = vunpack.c.l.s8.bf16 %v355
    %v884 = vunpack.c.l.s8.bf16 %v356
    %v885 = vunpack.c.l.s8.bf16 %v357
    %v886 = vunpack.c.l.s8.bf16 %v358
    %v887 = vunpack.c.l.s8.bf16 %v359
    %v888 = vunpack.c.l.s8.bf16 %v360
    %v889 = vunpack.c.l.s8.bf16 %v361
    %v890 = vunpack.c.h.s8.bf16 %v354
    %v891 = vunpack.c.h.s8.bf16 %v355
    %v892 = vunpack.c.h.s8.bf16 %v356
    %v893 = vunpack.c.h.s8.bf16 %v357
    %v894 = vunpack.c.h.s8.bf16 %v358
    %v895 = vunpack.c.h.s8.bf16 %v359
    %v896 = vunpack.c.h.s8.bf16 %v360
    %v897 = vunpack.c.h.s8.bf16 %v361
    %v898 = vunpack.c.l.s8.bf16 %v362
    %v899 = vunpack.c.l.s8.bf16 %v363
    %v900 = vunpack.c.l.s8.bf16 %v364
    %v901 = vunpack.c.l.s8.bf16 %v365
    %v902 = vunpack.c.l.s8.bf16 %v366
    %v903 = vunpack.c.l.s8.bf16 %v367
    %v904 = vunpack.c.l.s8.bf16 %v368
    %v905 = vunpack.c.l.s8.bf16 %v369
    %v906 = vunpack.c.h.s8.bf16 %v362
    %v907 = vunpack.c.h.s8.bf16 %v363
    %v908 = vunpack.c.h.s8.bf16 %v364
    %v909 = vunpack.c.h.s8.bf16 %v365
    %v910 = vunpack.c.h.s8.bf16 %v366
    %v911 = vunpack.c.h.s8.bf16 %v367
    %v912 = vunpack.c.h.s8.bf16 %v368
    %v913 = vunpack.c.h.s8.bf16 %v369
    %v914 = vunpack.c.l.s8.bf16 %v370
    %v915 = vunpack.c.l.s8.bf16 %v371
    %v916 = vunpack.c.l.s8.bf16 %v372
    %v917 = vunpack.c.l.s8.bf16 %v373
    %v918 = vunpack.c.l.s8.bf16 %v374
    %v919 = vunpack.c.l.s8.bf16 %v375
    %v920 = vunpack.c.l.s8.bf16 %v376
    %v921 = vunpack.c.l.s8.bf16 %v377
    %v922 = vunpack.c.h.s8.bf16 %v370
    %v923 = vunpack.c.h.s8.bf16 %v371
    %v924 = vunpack.c.h.s8.bf16 %v372
    %v925 = vunpack.c.h.s8.bf16 %v373
    %v926 = vunpack.c.h.s8.bf16 %v374
    %v927 = vunpack.c.h.s8.bf16 %v375
    %v928 = vunpack.c.h.s8.bf16 %v376
    %v929 = vunpack.c.h.s8.bf16 %v377
    %v930 = vunpack.c.l.s8.bf16 %v378
    %v931 = vunpack.c.l.s8.bf16 %v379
    %v932 = vunpack.c.l.s8.bf16 %v380
    %v933 = vunpack.c.l.s8.bf16 %v381
    %v934 = vunpack.c.l.s8.bf16 %v382
    %v935 = vunpack.c.l.s8.bf16 %v383
    %v936 = vunpack.c.l.s8.bf16 %v384
    %v937 = vunpack.c.l.s8.bf16 %v385
    %v938 = vunpack.c.h.s8.bf16 %v378
    %v939 = vunpack.c.h.s8.bf16 %v379
    %v940 = vunpack.c.h.s8.bf16 %v380
    %v941 = vunpack.c.h.s8.bf16 %v381
    %v942 = vunpack.c.h.s8.bf16 %v382
    %v943 = vunpack.c.h.s8.bf16 %v383
    %v944 = vunpack.c.h.s8.bf16 %v384
    %v945 = vunpack.c.h.s8.bf16 %v385
    %v946 = vunpack.c.l.s8.bf16 %v386
    %v947 = vunpack.c.l.s8.bf16 %v387
    %v948 = vunpack.c.l.s8.bf16 %v388
    %v949 = vunpack.c.l.s8.bf16 %v389
    %v950 = vunpack.c.l.s8.bf16 %v390
    %v951 = vunpack.c.l.s8.bf16 %v391
    %v952 = vunpack.c.l.s8.bf16 %v392
    %v953 = vunpack.c.l.s8.bf16 %v393
    %v954 = vunpack.c.h.s8.bf16 %v386
    %v955 = vunpack.c.h.s8.bf16 %v387
    %v956 = vunpack.c.h.s8.bf16 %v388
    %v957 = vunpack.c.h.s8.bf16 %v389
    %v958 = vunpack.c.h.s8.bf16 %v390
    %v959 = vunpack.c.h.s8.bf16 %v391
    %v960 = vunpack.c.h.s8.bf16 %v392
    %v961 = vunpack.c.h.s8.bf16 %v393
    %v962 = vunpack.c.l.s8.bf16 %v394
    %v963 = vunpack.c.l.s8.bf16 %v395
    %v964 = vunpack.c.l.s8.bf16 %v396
    %v965 = vunpack.c.l.s8.bf16 %v397
    %v966 = vunpack.c.l.s8.bf16 %v398
    %v967 = vunpack.c.l.s8.bf16 %v399
    %v968 = vunpack.c.l.s8.bf16 %v400
    %v969 = vunpack.c.l.s8.bf16 %v401
    %v970 = vunpack.c.h.s8.bf16 %v394
    %v971 = vunpack.c.h.s8.bf16 %v395
    %v972 = vunpack.c.h.s8.bf16 %v396
    %v973 = vunpack.c.h.s8.bf16 %v397
    %v974 = vunpack.c.h.s8.bf16 %v398
    %v975 = vunpack.c.h.s8.bf16 %v399
    %v976 = vunpack.c.h.s8.bf16 %v400
    %v977 = vunpack.c.h.s8.bf16 %v401
    %v978 = vunpack.c.l.s8.bf16 %v402
    %v979 = vunpack.c.l.s8.bf16 %v403
    %v980 = vunpack.c.l.s8.bf16 %v404
    %v981 = vunpack.c.l.s8.bf16 %v405
    %v982 = vunpack.c.l.s8.bf16 %v406
    %v983 = vunpack.c.l.s8.bf16 %v407
    %v984 = vunpack.c.l.s8.bf16 %v408
    %v985 = vunpack.c.l.s8.bf16 %v409
    %v986 = vunpack.c.h.s8.bf16 %v402
    %v987 = vunpack.c.h.s8.bf16 %v403
    %v988 = vunpack.c.h.s8.bf16 %v404
    %v989 = vunpack.c.h.s8.bf16 %v405
    %v990 = vunpack.c.h.s8.bf16 %v406
    %v991 = vunpack.c.h.s8.bf16 %v407
    %v992 = vunpack.c.h.s8.bf16 %v408
    %v993 = vunpack.c.h.s8.bf16 %v409
    %v994 = vunpack.c.l.s8.bf16 %v410
    %v995 = vunpack.c.l.s8.bf16 %v411
    %v996 = vunpack.c.l.s8.bf16 %v412
    %v997 = vunpack.c.l.s8.bf16 %v413
    %v998 = vunpack.c.l.s8.bf16 %v414
    %v999 = vunpack.c.l.s8.bf16 %v415
    %v1000 = vunpack.c.l.s8.bf16 %v416
    %v1001 = vunpack.c.l.s8.bf16 %v417
    %v1002 = vunpack.c.h.s8.bf16 %v410
    %v1003 = vunpack.c.h.s8.bf16 %v411
    %v1004 = vunpack.c.h.s8.bf16 %v412
    %v1005 = vunpack.c.h.s8.bf16 %v413
    %v1006 = vunpack.c.h.s8.bf16 %v414
    %v1007 = vunpack.c.h.s8.bf16 %v415
    %v1008 = vunpack.c.h.s8.bf16 %v416
    %v1009 = vunpack.c.h.s8.bf16 %v417
    %v1010 = vunpack.c.l.s8.bf16 %v418
    %v1011 = vunpack.c.l.s8.bf16 %v419
    %v1012 = vunpack.c.l.s8.bf16 %v420
    %v1013 = vunpack.c.l.s8.bf16 %v421
    %v1014 = vunpack.c.l.s8.bf16 %v422
    %v1015 = vunpack.c.l.s8.bf16 %v423
    %v1016 = vunpack.c.l.s8.bf16 %v424
    %v1017 = vunpack.c.l.s8.bf16 %v425
    %v1018 = vunpack.c.h.s8.bf16 %v418
    %v1019 = vunpack.c.h.s8.bf16 %v419
    %v1020 = vunpack.c.h.s8.bf16 %v420
    %v1021 = vunpack.c.h.s8.bf16 %v421
    %v1022 = vunpack.c.h.s8.bf16 %v422
    %v1023 = vunpack.c.h.s8.bf16 %v423
    %v1024 = vunpack.c.h.s8.bf16 %v424
    %v1025 = vunpack.c.h.s8.bf16 %v425
    %v1026 = vunpack.c.l.s8.bf16 %v426
    %v1027 = vunpack.c.l.s8.bf16 %v427
    %v1028 = vunpack.c.l.s8.bf16 %v428
    %v1029 = vunpack.c.l.s8.bf16 %v429
    %v1030 = vunpack.c.l.s8.bf16 %v430
    %v1031 = vunpack.c.l.s8.bf16 %v431
    %v1032 = vunpack.c.l.s8.bf16 %v432
    %v1033 = vunpack.c.l.s8.bf16 %v433
    %v1034 = vunpack.c.h.s8.bf16 %v426
    %v1035 = vunpack.c.h.s8.bf16 %v427
    %v1036 = vunpack.c.h.s8.bf16 %v428
    %v1037 = vunpack.c.h.s8.bf16 %v429
    %v1038 = vunpack.c.h.s8.bf16 %v430
    %v1039 = vunpack.c.h.s8.bf16 %v431
    %v1040 = vunpack.c.h.s8.bf16 %v432
    %v1041 = vunpack.c.h.s8.bf16 %v433
    %v1042 = vunpack.c.l.s8.bf16 %v434
    %v1043 = vunpack.c.l.s8.bf16 %v435
    %v1044 = vunpack.c.l.s8.bf16 %v436
    %v1045 = vunpack.c.l.s8.bf16 %v437
    %v1046 = vunpack.c.l.s8.bf16 %v438
    %v1047 = vunpack.c.l.s8.bf16 %v439
    %v1048 = vunpack.c.l.s8.bf16 %v440
    %v1049 = vunpack.c.l.s8.bf16 %v441
    %v1050 = vunpack.c.h.s8.bf16 %v434
    %v1051 = vunpack.c.h.s8.bf16 %v435
    %v1052 = vunpack.c.h.s8.bf16 %v436
    %v1053 = vunpack.c.h.s8.bf16 %v437
    %v1054 = vunpack.c.h.s8.bf16 %v438
    %v1055 = vunpack.c.h.s8.bf16 %v439
    %v1056 = vunpack.c.h.s8.bf16 %v440
    %v1057 = vunpack.c.h.s8.bf16 %v441
    %v1058 = vunpack.c.l.s8.bf16 %v442
    %v1059 = vunpack.c.l.s8.bf16 %v443
    %v1060 = vunpack.c.l.s8.bf16 %v444
    %v1061 = vunpack.c.l.s8.bf16 %v445
    %v1062 = vunpack.c.l.s8.bf16 %v446
    %v1063 = vunpack.c.l.s8.bf16 %v447
    %v1064 = vunpack.c.l.s8.bf16 %v448
    %v1065 = vunpack.c.l.s8.bf16 %v449
    %v1066 = vunpack.c.h.s8.bf16 %v442
    %v1067 = vunpack.c.h.s8.bf16 %v443
    %v1068 = vunpack.c.h.s8.bf16 %v444
    %v1069 = vunpack.c.h.s8.bf16 %v445
    %v1070 = vunpack.c.h.s8.bf16 %v446
    %v1071 = vunpack.c.h.s8.bf16 %v447
    %v1072 = vunpack.c.h.s8.bf16 %v448
    %v1073 = vunpack.c.h.s8.bf16 %v449
    %v1074 = vunpack.c.l.s8.bf16 %v450
    %v1075 = vunpack.c.l.s8.bf16 %v451
    %v1076 = vunpack.c.l.s8.bf16 %v452
    %v1077 = vunpack.c.l.s8.bf16 %v453
    %v1078 = vunpack.c.l.s8.bf16 %v454
    %v1079 = vunpack.c.l.s8.bf16 %v455
    %v1080 = vunpack.c.l.s8.bf16 %v456
    %v1081 = vunpack.c.l.s8.bf16 %v457
    %v1082 = vunpack.c.h.s8.bf16 %v450
    %v1083 = vunpack.c.h.s8.bf16 %v451
    %v1084 = vunpack.c.h.s8.bf16 %v452
    %v1085 = vunpack.c.h.s8.bf16 %v453
    %v1086 = vunpack.c.h.s8.bf16 %v454
    %v1087 = vunpack.c.h.s8.bf16 %v455
    %v1088 = vunpack.c.h.s8.bf16 %v456
    %v1089 = vunpack.c.h.s8.bf16 %v457
    %v1090 = vunpack.c.l.s8.bf16 %v458
    %v1091 = vunpack.c.l.s8.bf16 %v459
    %v1092 = vunpack.c.l.s8.bf16 %v460
    %v1093 = vunpack.c.l.s8.bf16 %v461
    %v1094 = vunpack.c.l.s8.bf16 %v462
    %v1095 = vunpack.c.l.s8.bf16 %v463
    %v1096 = vunpack.c.l.s8.bf16 %v464
    %v1097 = vunpack.c.l.s8.bf16 %v465
    %v1098 = vunpack.c.h.s8.bf16 %v458
    %v1099 = vunpack.c.h.s8.bf16 %v459
    %v1100 = vunpack.c.h.s8.bf16 %v460
    %v1101 = vunpack.c.h.s8.bf16 %v461
    %v1102 = vunpack.c.h.s8.bf16 %v462
    %v1103 = vunpack.c.h.s8.bf16 %v463
    %v1104 = vunpack.c.h.s8.bf16 %v464
    %v1105 = vunpack.c.h.s8.bf16 %v465
    %v1106 = vunpack.c.l.s8.bf16 %v466
    %v1107 = vunpack.c.l.s8.bf16 %v467
    %v1108 = vunpack.c.l.s8.bf16 %v468
    %v1109 = vunpack.c.l.s8.bf16 %v469
    %v1110 = vunpack.c.l.s8.bf16 %v470
    %v1111 = vunpack.c.l.s8.bf16 %v471
    %v1112 = vunpack.c.l.s8.bf16 %v472
    %v1113 = vunpack.c.l.s8.bf16 %v473
    %v1114 = vunpack.c.h.s8.bf16 %v466
    %v1115 = vunpack.c.h.s8.bf16 %v467
    %v1116 = vunpack.c.h.s8.bf16 %v468
    %v1117 = vunpack.c.h.s8.bf16 %v469
    %v1118 = vunpack.c.h.s8.bf16 %v470
    %v1119 = vunpack.c.h.s8.bf16 %v471
    %v1120 = vunpack.c.h.s8.bf16 %v472
    %v1121 = vunpack.c.h.s8.bf16 %v473
    %v1122 = vunpack.c.l.s8.bf16 %v474
    %v1123 = vunpack.c.l.s8.bf16 %v475
    %v1124 = vunpack.c.l.s8.bf16 %v476
    %v1125 = vunpack.c.l.s8.bf16 %v477
    %v1126 = vunpack.c.l.s8.bf16 %v478
    %v1127 = vunpack.c.l.s8.bf16 %v479
    %v1128 = vunpack.c.l.s8.bf16 %v480
    %v1129 = vunpack.c.l.s8.bf16 %v481
    %v1130 = vunpack.c.h.s8.bf16 %v474
    %v1131 = vunpack.c.h.s8.bf16 %v475
    %v1132 = vunpack.c.h.s8.bf16 %v476
    %v1133 = vunpack.c.h.s8.bf16 %v477
    %v1134 = vunpack.c.h.s8.bf16 %v478
    %v1135 = vunpack.c.h.s8.bf16 %v479
    %v1136 = vunpack.c.h.s8.bf16 %v480
    %v1137 = vunpack.c.h.s8.bf16 %v481
    %v1138 = vunpack.c.l.s8.bf16 %v482
    %v1139 = vunpack.c.l.s8.bf16 %v483
    %v1140 = vunpack.c.l.s8.bf16 %v484
    %v1141 = vunpack.c.l.s8.bf16 %v485
    %v1142 = vunpack.c.l.s8.bf16 %v486
    %v1143 = vunpack.c.l.s8.bf16 %v487
    %v1144 = vunpack.c.l.s8.bf16 %v488
    %v1145 = vunpack.c.l.s8.bf16 %v489
    %v1146 = vunpack.c.h.s8.bf16 %v482
    %v1147 = vunpack.c.h.s8.bf16 %v483
    %v1148 = vunpack.c.h.s8.bf16 %v484
    %v1149 = vunpack.c.h.s8.bf16 %v485
    %v1150 = vunpack.c.h.s8.bf16 %v486
    %v1151 = vunpack.c.h.s8.bf16 %v487
    %v1152 = vunpack.c.h.s8.bf16 %v488
    %v1153 = vunpack.c.h.s8.bf16 %v489
    %v1154 = vunpack.c.l.s8.bf16 %v490
    %v1155 = vunpack.c.l.s8.bf16 %v491
    %v1156 = vunpack.c.l.s8.bf16 %v492
    %v1157 = vunpack.c.l.s8.bf16 %v493
    %v1158 = vunpack.c.l.s8.bf16 %v494
    %v1159 = vunpack.c.l.s8.bf16 %v495
    %v1160 = vunpack.c.l.s8.bf16 %v496
    %v1161 = vunpack.c.l.s8.bf16 %v497
    %v1162 = vunpack.c.h.s8.bf16 %v490
    %v1163 = vunpack.c.h.s8.bf16 %v491
    %v1164 = vunpack.c.h.s8.bf16 %v492
    %v1165 = vunpack.c.h.s8.bf16 %v493
    %v1166 = vunpack.c.h.s8.bf16 %v494
    %v1167 = vunpack.c.h.s8.bf16 %v495
    %v1168 = vunpack.c.h.s8.bf16 %v496
    %v1169 = vunpack.c.h.s8.bf16 %v497
    %v1170 = vunpack.c.l.s8.bf16 %v498
    %v1171 = vunpack.c.l.s8.bf16 %v499
    %v1172 = vunpack.c.l.s8.bf16 %v500
    %v1173 = vunpack.c.l.s8.bf16 %v501
    %v1174 = vunpack.c.l.s8.bf16 %v502
    %v1175 = vunpack.c.l.s8.bf16 %v503
    %v1176 = vunpack.c.l.s8.bf16 %v504
    %v1177 = vunpack.c.l.s8.bf16 %v505
    %v1178 = vunpack.c.h.s8.bf16 %v498
    %v1179 = vunpack.c.h.s8.bf16 %v499
    %v1180 = vunpack.c.h.s8.bf16 %v500
    %v1181 = vunpack.c.h.s8.bf16 %v501
    %v1182 = vunpack.c.h.s8.bf16 %v502
    %v1183 = vunpack.c.h.s8.bf16 %v503
    %v1184 = vunpack.c.h.s8.bf16 %v504
    %v1185 = vunpack.c.h.s8.bf16 %v505
    %v1186 = vunpack.c.l.s8.bf16 %v506
    %v1187 = vunpack.c.l.s8.bf16 %v507
    %v1188 = vunpack.c.l.s8.bf16 %v508
    %v1189 = vunpack.c.l.s8.bf16 %v509
    %v1190 = vunpack.c.l.s8.bf16 %v510
    %v1191 = vunpack.c.l.s8.bf16 %v511
    %v1192 = vunpack.c.l.s8.bf16 %v512
    %v1193 = vunpack.c.l.s8.bf16 %v513
    %v1194 = vunpack.c.h.s8.bf16 %v506
    %v1195 = vunpack.c.h.s8.bf16 %v507
    %v1196 = vunpack.c.h.s8.bf16 %v508
    %v1197 = vunpack.c.h.s8.bf16 %v509
    %v1198 = vunpack.c.h.s8.bf16 %v510
    %v1199 = vunpack.c.h.s8.bf16 %v511
    %v1200 = vunpack.c.h.s8.bf16 %v512
    %v1201 = vunpack.c.h.s8.bf16 %v513
    %v1202 = vunpack.c.l.s8.bf16 %v514
    %v1203 = vunpack.c.l.s8.bf16 %v515
    %v1204 = vunpack.c.l.s8.bf16 %v516
    %v1205 = vunpack.c.l.s8.bf16 %v517
    %v1206 = vunpack.c.l.s8.bf16 %v518
    %v1207 = vunpack.c.l.s8.bf16 %v519
    %v1208 = vunpack.c.l.s8.bf16 %v520
    %v1209 = vunpack.c.l.s8.bf16 %v521
    %v1210 = vunpack.c.h.s8.bf16 %v514
    %v1211 = vunpack.c.h.s8.bf16 %v515
    %v1212 = vunpack.c.h.s8.bf16 %v516
    %v1213 = vunpack.c.h.s8.bf16 %v517
    %v1214 = vunpack.c.h.s8.bf16 %v518
    %v1215 = vunpack.c.h.s8.bf16 %v519
    %v1216 = vunpack.c.h.s8.bf16 %v520
    %v1217 = vunpack.c.h.s8.bf16 %v521
    %v1218 = vunpack.c.l.s8.bf16 %v522
    %v1219 = vunpack.c.l.s8.bf16 %v523
    %v1220 = vunpack.c.l.s8.bf16 %v524
    %v1221 = vunpack.c.l.s8.bf16 %v525
    %v1222 = vunpack.c.l.s8.bf16 %v526
    %v1223 = vunpack.c.l.s8.bf16 %v527
    %v1224 = vunpack.c.l.s8.bf16 %v528
    %v1225 = vunpack.c.l.s8.bf16 %v529
    %v1226 = vunpack.c.h.s8.bf16 %v522
    %v1227 = vunpack.c.h.s8.bf16 %v523
    %v1228 = vunpack.c.h.s8.bf16 %v524
    %v1229 = vunpack.c.h.s8.bf16 %v525
    %v1230 = vunpack.c.h.s8.bf16 %v526
    %v1231 = vunpack.c.h.s8.bf16 %v527
    %v1232 = vunpack.c.h.s8.bf16 %v528
    %v1233 = vunpack.c.h.s8.bf16 %v529
    %v1234 = vunpack.c.l.s8.bf16 %v530
    %v1235 = vunpack.c.l.s8.bf16 %v531
    %v1236 = vunpack.c.l.s8.bf16 %v532
    %v1237 = vunpack.c.l.s8.bf16 %v533
    %v1238 = vunpack.c.l.s8.bf16 %v534
    %v1239 = vunpack.c.l.s8.bf16 %v535
    %v1240 = vunpack.c.l.s8.bf16 %v536
    %v1241 = vunpack.c.l.s8.bf16 %v537
    %v1242 = vunpack.c.h.s8.bf16 %v530
    %v1243 = vunpack.c.h.s8.bf16 %v531
    %v1244 = vunpack.c.h.s8.bf16 %v532
    %v1245 = vunpack.c.h.s8.bf16 %v533
    %v1246 = vunpack.c.h.s8.bf16 %v534
    %v1247 = vunpack.c.h.s8.bf16 %v535
    %v1248 = vunpack.c.h.s8.bf16 %v536
    %v1249 = vunpack.c.h.s8.bf16 %v537
    %v1250 = vunpack.c.l.s8.bf16 %v538
    %v1251 = vunpack.c.l.s8.bf16 %v539
    %v1252 = vunpack.c.l.s8.bf16 %v540
    %v1253 = vunpack.c.l.s8.bf16 %v541
    %v1254 = vunpack.c.l.s8.bf16 %v542
    %v1255 = vunpack.c.l.s8.bf16 %v543
    %v1256 = vunpack.c.l.s8.bf16 %v544
    %v1257 = vunpack.c.l.s8.bf16 %v545
    %v1258 = vunpack.c.h.s8.bf16 %v538
    %v1259 = vunpack.c.h.s8.bf16 %v539
    %v1260 = vunpack.c.h.s8.bf16 %v540
    %v1261 = vunpack.c.h.s8.bf16 %v541
    %v1262 = vunpack.c.h.s8.bf16 %v542
    %v1263 = vunpack.c.h.s8.bf16 %v543
    %v1264 = vunpack.c.h.s8.bf16 %v544
    %v1265 = vunpack.c.h.s8.bf16 %v545
    %v1266 = vunpack.c.l.s8.bf16 %v546
    %v1267 = vunpack.c.l.s8.bf16 %v547
    %v1268 = vunpack.c.l.s8.bf16 %v548
    %v1269 = vunpack.c.l.s8.bf16 %v549
    %v1270 = vunpack.c.l.s8.bf16 %v550
    %v1271 = vunpack.c.l.s8.bf16 %v551
    %v1272 = vunpack.c.l.s8.bf16 %v552
    %v1273 = vunpack.c.l.s8.bf16 %v553
    %v1274 = vunpack.c.h.s8.bf16 %v546
    %v1275 = vunpack.c.h.s8.bf16 %v547
    %v1276 = vunpack.c.h.s8.bf16 %v548
    %v1277 = vunpack.c.h.s8.bf16 %v549
    %v1278 = vunpack.c.h.s8.bf16 %v550
    %v1279 = vunpack.c.h.s8.bf16 %v551
    %v1280 = vunpack.c.h.s8.bf16 %v552
    %v1281 = vunpack.c.h.s8.bf16 %v553
    %v1282 = vunpack.c.l.s8.bf16 %v554
    %v1283 = vunpack.c.l.s8.bf16 %v555
    %v1284 = vunpack.c.l.s8.bf16 %v556
    %v1285 = vunpack.c.l.s8.bf16 %v557
    %v1286 = vunpack.c.l.s8.bf16 %v558
    %v1287 = vunpack.c.l.s8.bf16 %v559
    %v1288 = vunpack.c.l.s8.bf16 %v560
    %v1289 = vunpack.c.l.s8.bf16 %v561
    %v1290 = vunpack.c.h.s8.bf16 %v554
    %v1291 = vunpack.c.h.s8.bf16 %v555
    %v1292 = vunpack.c.h.s8.bf16 %v556
    %v1293 = vunpack.c.h.s8.bf16 %v557
    %v1294 = vunpack.c.h.s8.bf16 %v558
    %v1295 = vunpack.c.h.s8.bf16 %v559
    %v1296 = vunpack.c.h.s8.bf16 %v560
    %v1297 = vunpack.c.h.s8.bf16 %v561
    %v1298 = vunpack.c.l.s8.bf16 %v562
    %v1299 = vunpack.c.l.s8.bf16 %v563
    %v1300 = vunpack.c.l.s8.bf16 %v564
    %v1301 = vunpack.c.l.s8.bf16 %v565
    %v1302 = vunpack.c.l.s8.bf16 %v566
    %v1303 = vunpack.c.l.s8.bf16 %v567
    %v1304 = vunpack.c.l.s8.bf16 %v568
    %v1305 = vunpack.c.l.s8.bf16 %v569
    %v1306 = vunpack.c.h.s8.bf16 %v562
    %v1307 = vunpack.c.h.s8.bf16 %v563
    %v1308 = vunpack.c.h.s8.bf16 %v564
    %v1309 = vunpack.c.h.s8.bf16 %v565
    %v1310 = vunpack.c.h.s8.bf16 %v566
    %v1311 = vunpack.c.h.s8.bf16 %v567
    %v1312 = vunpack.c.h.s8.bf16 %v568
    %v1313 = vunpack.c.h.s8.bf16 %v569
    %v1314 = vunpack.c.l.s8.bf16 %v570
    %v1315 = vunpack.c.l.s8.bf16 %v571
    %v1316 = vunpack.c.l.s8.bf16 %v572
    %v1317 = vunpack.c.l.s8.bf16 %v573
    %v1318 = vunpack.c.l.s8.bf16 %v574
    %v1319 = vunpack.c.l.s8.bf16 %v575
    %v1320 = vunpack.c.l.s8.bf16 %v576
    %v1321 = vunpack.c.l.s8.bf16 %v577
    %v1322 = vunpack.c.h.s8.bf16 %v570
    %v1323 = vunpack.c.h.s8.bf16 %v571
    %v1324 = vunpack.c.h.s8.bf16 %v572
    %v1325 = vunpack.c.h.s8.bf16 %v573
    %v1326 = vunpack.c.h.s8.bf16 %v574
    %v1327 = vunpack.c.h.s8.bf16 %v575
    %v1328 = vunpack.c.h.s8.bf16 %v576
    %v1329 = vunpack.c.h.s8.bf16 %v577
    %v1330 = vunpack.c.l.s8.bf16 %v578
    %v1331 = vunpack.c.l.s8.bf16 %v579
    %v1332 = vunpack.c.l.s8.bf16 %v580
    %v1333 = vunpack.c.l.s8.bf16 %v581
    %v1334 = vunpack.c.l.s8.bf16 %v582
    %v1335 = vunpack.c.l.s8.bf16 %v583
    %v1336 = vunpack.c.l.s8.bf16 %v584
    %v1337 = vunpack.c.l.s8.bf16 %v585
    %v1338 = vunpack.c.h.s8.bf16 %v578
    %v1339 = vunpack.c.h.s8.bf16 %v579
    %v1340 = vunpack.c.h.s8.bf16 %v580
    %v1341 = vunpack.c.h.s8.bf16 %v581
    %v1342 = vunpack.c.h.s8.bf16 %v582
    %v1343 = vunpack.c.h.s8.bf16 %v583
    %v1344 = vunpack.c.h.s8.bf16 %v584
    %v1345 = vunpack.c.h.s8.bf16 %v585
    %v1346 = vunpack.c.l.s8.bf16 %v586
    %v1347 = vunpack.c.l.s8.bf16 %v587
    %v1348 = vunpack.c.l.s8.bf16 %v588
    %v1349 = vunpack.c.l.s8.bf16 %v589
    %v1350 = vunpack.c.l.s8.bf16 %v590
    %v1351 = vunpack.c.l.s8.bf16 %v591
    %v1352 = vunpack.c.l.s8.bf16 %v592
    %v1353 = vunpack.c.l.s8.bf16 %v593
    %v1354 = vunpack.c.h.s8.bf16 %v586
    %v1355 = vunpack.c.h.s8.bf16 %v587
    %v1356 = vunpack.c.h.s8.bf16 %v588
    %v1357 = vunpack.c.h.s8.bf16 %v589
    %v1358 = vunpack.c.h.s8.bf16 %v590
    %v1359 = vunpack.c.h.s8.bf16 %v591
    %v1360 = vunpack.c.h.s8.bf16 %v592
    %v1361 = vunpack.c.h.s8.bf16 %v593
    %v1368 = vunpack.c.l.b16 %v204
    %v1369 = vunpack.c.h.b16 %v204
    %v1370 = vunpack.c.l.b16 %v205
    %v1371 = vunpack.c.h.b16 %v205
    %v1372 = vunpack.c.l.b16 %v206
    %v1373 = vunpack.c.h.b16 %v206
    %v1374 = vunpack.c.l.b16 %v207
    %v1375 = vunpack.c.h.b16 %v207
    %v1376 = vunpack.c.l.b16 %v208
    %v1377 = vunpack.c.h.b16 %v208
    %v1378 = vunpack.c.l.b16 %v209
    %v1379 = vunpack.c.h.b16 %v209
    %v1380 = vpack.c.b16 %v1368, %v1368
    %v1381 = vpack.c.b16 %v1369, %v1369
    %v1382 = vpack.c.b16 %v1370, %v1370
    %v1383 = vpack.c.b16 %v1371, %v1371
    %v1384 = vpack.c.b16 %v1372, %v1372
    %v1385 = vpack.c.b16 %v1373, %v1373
    %v1386 = vpack.c.b16 %v1374, %v1374
    %v1387 = vpack.c.b16 %v1375, %v1375
    %v1388 = vpack.c.b16 %v1376, %v1376
    %v1389 = vpack.c.b16 %v1377, %v1377
    %v1390 = vpack.c.b16 %v1378, %v1378
    %v1391 = vpack.c.b16 %v1379, %v1379
    %1404 = vmatprep.subr.bf16.mxu0 %v651
    %1405 = vmatpush1.bf16.msra.mxu0 %v650
    %1406 = vmatprep.subr.bf16.mxu0 %v643
    %1407 = vmatpush1.bf16.msra.mxu0 %v642
    %1408 = vmatprep.subr.bf16.mxu0 %v635
    %1409 = vmatpush1.bf16.msra.mxu0 %v634
    %1410 = vmatprep.subr.bf16.mxu0 %v627
    %1411 = vmatpush1.bf16.msra.mxu0 %v626
    %1412 = vmatprep.subr.bf16.mxu0 %v619
    %1413 = vmatpush1.bf16.msra.mxu0 %v618
    %1414 = vmatprep.subr.bf16.mxu0 %v611
    %1415 = vmatpush1.bf16.msra.mxu0 %v610
    %1416 = vmatprep.subr.bf16.mxu0 %v603
    %1417 = vmatpush1.bf16.msra.mxu0 %v602
    %1418 = vmatprep.subr.bf16.mxu0 %v595
    %1419 = vmatpush1.bf16.msra.mxu0 %v594
    %1420 = vmatprep.subr.bf16.mxu0 %v715
    %1421 = vmatpush2.bf16.msra.mxu0 %v714
    %1422 = vmatprep.subr.bf16.mxu0 %v707
    %1423 = vmatpush2.bf16.msra.mxu0 %v706
    %1424 = vmatprep.subr.bf16.mxu0 %v699
    %1425 = vmatpush2.bf16.msra.mxu0 %v698
    %1426 = vmatprep.subr.bf16.mxu0 %v691
    %1427 = vmatpush2.bf16.msra.mxu0 %v690
    %1428 = vmatprep.subr.bf16.mxu0 %v683
    %1429 = vmatpush2.bf16.msra.mxu0 %v682
    %1430 = vmatprep.subr.bf16.mxu0 %v675
    %1431 = vmatpush2.bf16.msra.mxu0 %v674
    %1432 = vmatprep.subr.bf16.mxu0 %v667
    %1433 = vmatpush2.bf16.msra.mxu0 %v666
    %1434 = vmatprep.subr.bf16.mxu0 %v659
    %1435 = vmatpush2.bf16.msra.mxu0 %v658
    %1436 = vmatprep.mubr.bf16.mxu0 %v1381
    %1437 = vmatmul.mubr.bf16.gmra.mxu0 %v1380
    %v1438 = vpop.f32.mrf.mxu0
    %v1439 = vadd.f32 0.0, %v1438
    %v1440 = vpop.f32.mrf.mxu0
    %v1441 = vadd.f32 0.0, %v1440
    %v1442 = vpop.f32.mrf.mxu0
    %v1443 = vpop.f32.mrf.mxu0
    %1444 = vdwg.mxu0
    %1445 = vmatprep.subr.bf16.mxu0 %v779
    %1446 = vmatpush1.bf16.msra.mxu0 %v778
    %1447 = vmatprep.subr.bf16.mxu0 %v771
    %1448 = vmatpush1.bf16.msra.mxu0 %v770
    %1449 = vmatprep.subr.bf16.mxu0 %v763
    %1450 = vmatpush1.bf16.msra.mxu0 %v762
    %1451 = vmatprep.subr.bf16.mxu0 %v755
    %1452 = vmatpush1.bf16.msra.mxu0 %v754
    %1453 = vmatprep.subr.bf16.mxu0 %v747
    %1454 = vmatpush1.bf16.msra.mxu0 %v746
    %1455 = vmatprep.subr.bf16.mxu0 %v739
    %1456 = vmatpush1.bf16.msra.mxu0 %v738
    %1457 = vmatprep.subr.bf16.mxu0 %v731
    %1458 = vmatpush1.bf16.msra.mxu0 %v730
    %1459 = vmatprep.subr.bf16.mxu0 %v723
    %1460 = vmatpush1.bf16.msra.mxu0 %v722
    %1461 = vmatprep.subr.bf16.mxu0 %v843
    %1462 = vmatpush2.bf16.msra.mxu0 %v842
    %1463 = vmatprep.subr.bf16.mxu0 %v835
    %1464 = vmatpush2.bf16.msra.mxu0 %v834
    %1465 = vmatprep.subr.bf16.mxu0 %v827
    %1466 = vmatpush2.bf16.msra.mxu0 %v826
    %1467 = vmatprep.subr.bf16.mxu0 %v819
    %1468 = vmatpush2.bf16.msra.mxu0 %v818
    %1469 = vmatprep.subr.bf16.mxu0 %v811
    %1470 = vmatpush2.bf16.msra.mxu0 %v810
    %1471 = vmatprep.subr.bf16.mxu0 %v803
    %1472 = vmatpush2.bf16.msra.mxu0 %v802
    %1473 = vmatprep.subr.bf16.mxu0 %v795
    %1474 = vmatpush2.bf16.msra.mxu0 %v794
    %1475 = vmatprep.subr.bf16.mxu0 %v787
    %1476 = vmatpush2.bf16.msra.mxu0 %v786
    %1477 = vmatprep.mubr.bf16.mxu0 %v1383
    %1478 = vmatmul.mubr.bf16.gmra.mxu0 %v1382
    %v1479 = vpop.f32.mrf.mxu0
    %v1480 = vadd.f32 %v1439, %v1479
    %v1481 = vpop.f32.mrf.mxu0
    %v1482 = vadd.f32 %v1441, %v1481
    %v1483 = vpop.f32.mrf.mxu0
    %v1484 = vpop.f32.mrf.mxu0
    %1485 = vdwg.mxu0
    %1486 = vmatprep.subr.bf16.mxu0 %v907
    %1487 = vmatpush1.bf16.msra.mxu0 %v906
    %1488 = vmatprep.subr.bf16.mxu0 %v899
    %1489 = vmatpush1.bf16.msra.mxu0 %v898
    %1490 = vmatprep.subr.bf16.mxu0 %v891
    %1491 = vmatpush1.bf16.msra.mxu0 %v890
    %1492 = vmatprep.subr.bf16.mxu0 %v883
    %1493 = vmatpush1.bf16.msra.mxu0 %v882
    %1494 = vmatprep.subr.bf16.mxu0 %v875
    %1495 = vmatpush1.bf16.msra.mxu0 %v874
    %1496 = vmatprep.subr.bf16.mxu0 %v867
    %1497 = vmatpush1.bf16.msra.mxu0 %v866
    %1498 = vmatprep.subr.bf16.mxu0 %v859
    %1499 = vmatpush1.bf16.msra.mxu0 %v858
    %1500 = vmatprep.subr.bf16.mxu0 %v851
    %1501 = vmatpush1.bf16.msra.mxu0 %v850
    %1502 = vmatprep.subr.bf16.mxu0 %v971
    %1503 = vmatpush2.bf16.msra.mxu0 %v970
    %1504 = vmatprep.subr.bf16.mxu0 %v963
    %1505 = vmatpush2.bf16.msra.mxu0 %v962
    %1506 = vmatprep.subr.bf16.mxu0 %v955
    %1507 = vmatpush2.bf16.msra.mxu0 %v954
    %1508 = vmatprep.subr.bf16.mxu0 %v947
    %1509 = vmatpush2.bf16.msra.mxu0 %v946
    %1510 = vmatprep.subr.bf16.mxu0 %v939
    %1511 = vmatpush2.bf16.msra.mxu0 %v938
    %1512 = vmatprep.subr.bf16.mxu0 %v931
    %1513 = vmatpush2.bf16.msra.mxu0 %v930
    %1514 = vmatprep.subr.bf16.mxu0 %v923
    %1515 = vmatpush2.bf16.msra.mxu0 %v922
    %1516 = vmatprep.subr.bf16.mxu0 %v915
    %1517 = vmatpush2.bf16.msra.mxu0 %v914
    %1518 = vmatprep.mubr.bf16.mxu0 %v1385
    %1519 = vmatmul.mubr.bf16.gmra.mxu0 %v1384
    %v1520 = vpop.f32.mrf.mxu0
    %v1521 = vadd.f32 %v1480, %v1520
    %v1522 = vpop.f32.mrf.mxu0
    %v1523 = vadd.f32 %v1482, %v1522
    %v1524 = vpop.f32.mrf.mxu0
    %v1525 = vpop.f32.mrf.mxu0
    %1526 = vdwg.mxu0
    %1527 = vmatprep.subr.bf16.mxu0 %v1035
    %1528 = vmatpush1.bf16.msra.mxu0 %v1034
    %1529 = vmatprep.subr.bf16.mxu0 %v1027
    %1530 = vmatpush1.bf16.msra.mxu0 %v1026
    %1531 = vmatprep.subr.bf16.mxu0 %v1019
    %1532 = vmatpush1.bf16.msra.mxu0 %v1018
    %1533 = vmatprep.subr.bf16.mxu0 %v1011
    %1534 = vmatpush1.bf16.msra.mxu0 %v1010
    %1535 = vmatprep.subr.bf16.mxu0 %v1003
    %1536 = vmatpush1.bf16.msra.mxu0 %v1002
    %1537 = vmatprep.subr.bf16.mxu0 %v995
    %1538 = vmatpush1.bf16.msra.mxu0 %v994
    %1539 = vmatprep.subr.bf16.mxu0 %v987
    %1540 = vmatpush1.bf16.msra.mxu0 %v986
    %1541 = vmatprep.subr.bf16.mxu0 %v979
    %1542 = vmatpush1.bf16.msra.mxu0 %v978
    %1543 = vmatprep.subr.bf16.mxu0 %v1099
    %1544 = vmatpush2.bf16.msra.mxu0 %v1098
    %1545 = vmatprep.subr.bf16.mxu0 %v1091
    %1546 = vmatpush2.bf16.msra.mxu0 %v1090
    %1547 = vmatprep.subr.bf16.mxu0 %v1083
    %1548 = vmatpush2.bf16.msra.mxu0 %v1082
    %1549 = vmatprep.subr.bf16.mxu0 %v1075
    %1550 = vmatpush2.bf16.msra.mxu0 %v1074
    %1551 = vmatprep.subr.bf16.mxu0 %v1067
    %1552 = vmatpush2.bf16.msra.mxu0 %v1066
    %1553 = vmatprep.subr.bf16.mxu0 %v1059
    %1554 = vmatpush2.bf16.msra.mxu0 %v1058
    %1555 = vmatprep.subr.bf16.mxu0 %v1051
    %1556 = vmatpush2.bf16.msra.mxu0 %v1050
    %1557 = vmatprep.subr.bf16.mxu0 %v1043
    %1558 = vmatpush2.bf16.msra.mxu0 %v1042
    %1559 = vmatprep.mubr.bf16.mxu0 %v1387
    %1560 = vmatmul.mubr.bf16.gmra.mxu0 %v1386
    %v1561 = vpop.f32.mrf.mxu0
    %v1562 = vadd.f32 %v1521, %v1561
    %v1563 = vpop.f32.mrf.mxu0
    %v1564 = vadd.f32 %v1523, %v1563
    %v1565 = vpop.f32.mrf.mxu0
    %v1566 = vpop.f32.mrf.mxu0
    %1567 = vdwg.mxu0
    %1568 = vmatprep.subr.bf16.mxu0 %v1163
    %1569 = vmatpush1.bf16.msra.mxu0 %v1162
    %1570 = vmatprep.subr.bf16.mxu0 %v1155
    %1571 = vmatpush1.bf16.msra.mxu0 %v1154
    %1572 = vmatprep.subr.bf16.mxu0 %v1147
    %1573 = vmatpush1.bf16.msra.mxu0 %v1146
    %1574 = vmatprep.subr.bf16.mxu0 %v1139
    %1575 = vmatpush1.bf16.msra.mxu0 %v1138
    %1576 = vmatprep.subr.bf16.mxu0 %v1131
    %1577 = vmatpush1.bf16.msra.mxu0 %v1130
    %1578 = vmatprep.subr.bf16.mxu0 %v1123
    %1579 = vmatpush1.bf16.msra.mxu0 %v1122
    %1580 = vmatprep.subr.bf16.mxu0 %v1115
    %1581 = vmatpush1.bf16.msra.mxu0 %v1114
    %1582 = vmatprep.subr.bf16.mxu0 %v1107
    %1583 = vmatpush1.bf16.msra.mxu0 %v1106
    %1584 = vmatprep.subr.bf16.mxu0 %v1227
    %1585 = vmatpush2.bf16.msra.mxu0 %v1226
    %1586 = vmatprep.subr.bf16.mxu0 %v1219
    %1587 = vmatpush2.bf16.msra.mxu0 %v1218
    %1588 = vmatprep.subr.bf16.mxu0 %v1211
    %1589 = vmatpush2.bf16.msra.mxu0 %v1210
    %1590 = vmatprep.subr.bf16.mxu0 %v1203
    %1591 = vmatpush2.bf16.msra.mxu0 %v1202
    %1592 = vmatprep.subr.bf16.mxu0 %v1195
    %1593 = vmatpush2.bf16.msra.mxu0 %v1194
    %1594 = vmatprep.subr.bf16.mxu0 %v1187
    %1595 = vmatpush2.bf16.msra.mxu0 %v1186
    %1596 = vmatprep.subr.bf16.mxu0 %v1179
    %1597 = vmatpush2.bf16.msra.mxu0 %v1178
    %1598 = vmatprep.subr.bf16.mxu0 %v1171
    %1599 = vmatpush2.bf16.msra.mxu0 %v1170
    %1600 = vmatprep.mubr.bf16.mxu0 %v1389
    %1601 = vmatmul.mubr.bf16.gmra.mxu0 %v1388
    %v1602 = vpop.f32.mrf.mxu0
    %v1603 = vadd.f32 %v1562, %v1602
    %v1604 = vpop.f32.mrf.mxu0
    %v1605 = vadd.f32 %v1564, %v1604
    %v1606 = vpop.f32.mrf.mxu0
    %v1607 = vpop.f32.mrf.mxu0
    %1608 = vdwg.mxu0
    %1609 = vmatprep.subr.bf16.mxu0 %v1291
    %1610 = vmatpush1.bf16.msra.mxu0 %v1290
    %1611 = vmatprep.subr.bf16.mxu0 %v1283
    %1612 = vmatpush1.bf16.msra.mxu0 %v1282
    %1613 = vmatprep.subr.bf16.mxu0 %v1275
    %1614 = vmatpush1.bf16.msra.mxu0 %v1274
    %1615 = vmatprep.subr.bf16.mxu0 %v1267
    %1616 = vmatpush1.bf16.msra.mxu0 %v1266
    %1617 = vmatprep.subr.bf16.mxu0 %v1259
    %1618 = vmatpush1.bf16.msra.mxu0 %v1258
    %1619 = vmatprep.subr.bf16.mxu0 %v1251
    %1620 = vmatpush1.bf16.msra.mxu0 %v1250
    %1621 = vmatprep.subr.bf16.mxu0 %v1243
    %1622 = vmatpush1.bf16.msra.mxu0 %v1242
    %1623 = vmatprep.subr.bf16.mxu0 %v1235
    %1624 = vmatpush1.bf16.msra.mxu0 %v1234
    %1625 = vmatprep.subr.bf16.mxu0 %v1355
    %1626 = vmatpush2.bf16.msra.mxu0 %v1354
    %1627 = vmatprep.subr.bf16.mxu0 %v1347
    %1628 = vmatpush2.bf16.msra.mxu0 %v1346
    %1629 = vmatprep.subr.bf16.mxu0 %v1339
    %1630 = vmatpush2.bf16.msra.mxu0 %v1338
    %1631 = vmatprep.subr.bf16.mxu0 %v1331
    %1632 = vmatpush2.bf16.msra.mxu0 %v1330
    %1633 = vmatprep.subr.bf16.mxu0 %v1323
    %1634 = vmatpush2.bf16.msra.mxu0 %v1322
    %1635 = vmatprep.subr.bf16.mxu0 %v1315
    %1636 = vmatpush2.bf16.msra.mxu0 %v1314
    %1637 = vmatprep.subr.bf16.mxu0 %v1307
    %1638 = vmatpush2.bf16.msra.mxu0 %v1306
    %1639 = vmatprep.subr.bf16.mxu0 %v1299
    %1640 = vmatpush2.bf16.msra.mxu0 %v1298
    %1641 = vmatprep.mubr.bf16.mxu0 %v1391
    %1642 = vmatmul.mubr.bf16.gmra.mxu0 %v1390
    %v1643 = vpop.f32.mrf.mxu0
    %v1644 = vadd.f32 %v1603, %v1643
    %v1645 = vpop.f32.mrf.mxu0
    %v1646 = vadd.f32 %v1605, %v1645
    %v1647 = vpop.f32.mrf.mxu0
    %v1648 = vpop.f32.mrf.mxu0
    %1649 = vdwg.mxu0
    %1650 = vmatprep.subr.bf16.mxu0 %v653
    %1651 = vmatpush1.bf16.msra.mxu0 %v652
    %1652 = vmatprep.subr.bf16.mxu0 %v645
    %1653 = vmatpush1.bf16.msra.mxu0 %v644
    %1654 = vmatprep.subr.bf16.mxu0 %v637
    %1655 = vmatpush1.bf16.msra.mxu0 %v636
    %1656 = vmatprep.subr.bf16.mxu0 %v629
    %1657 = vmatpush1.bf16.msra.mxu0 %v628
    %1658 = vmatprep.subr.bf16.mxu0 %v621
    %1659 = vmatpush1.bf16.msra.mxu0 %v620
    %1660 = vmatprep.subr.bf16.mxu0 %v613
    %1661 = vmatpush1.bf16.msra.mxu0 %v612
    %1662 = vmatprep.subr.bf16.mxu0 %v605
    %1663 = vmatpush1.bf16.msra.mxu0 %v604
    %1664 = vmatprep.subr.bf16.mxu0 %v597
    %1665 = vmatpush1.bf16.msra.mxu0 %v596
    %1666 = vmatprep.subr.bf16.mxu0 %v717
    %1667 = vmatpush2.bf16.msra.mxu0 %v716
    %1668 = vmatprep.subr.bf16.mxu0 %v709
    %1669 = vmatpush2.bf16.msra.mxu0 %v708
    %1670 = vmatprep.subr.bf16.mxu0 %v701
    %1671 = vmatpush2.bf16.msra.mxu0 %v700
    %1672 = vmatprep.subr.bf16.mxu0 %v693
    %1673 = vmatpush2.bf16.msra.mxu0 %v692
    %1674 = vmatprep.subr.bf16.mxu0 %v685
    %1675 = vmatpush2.bf16.msra.mxu0 %v684
    %1676 = vmatprep.subr.bf16.mxu0 %v677
    %1677 = vmatpush2.bf16.msra.mxu0 %v676
    %1678 = vmatprep.subr.bf16.mxu0 %v669
    %1679 = vmatpush2.bf16.msra.mxu0 %v668
    %1680 = vmatprep.subr.bf16.mxu0 %v661
    %1681 = vmatpush2.bf16.msra.mxu0 %v660
    %1682 = vmatprep.mubr.bf16.mxu0 %v1381
    %1683 = vmatmul.mubr.bf16.gmra.mxu0 %v1380
    %v1684 = vpop.f32.mrf.mxu0
    %v1685 = vadd.f32 0.0, %v1684
    %v1686 = vpop.f32.mrf.mxu0
    %v1687 = vadd.f32 0.0, %v1686
    %v1688 = vpop.f32.mrf.mxu0
    %v1689 = vpop.f32.mrf.mxu0
    %1690 = vdwg.mxu0
    %1691 = vmatprep.subr.bf16.mxu0 %v781
    %1692 = vmatpush1.bf16.msra.mxu0 %v780
    %1693 = vmatprep.subr.bf16.mxu0 %v773
    %1694 = vmatpush1.bf16.msra.mxu0 %v772
    %1695 = vmatprep.subr.bf16.mxu0 %v765
    %1696 = vmatpush1.bf16.msra.mxu0 %v764
    %1697 = vmatprep.subr.bf16.mxu0 %v757
    %1698 = vmatpush1.bf16.msra.mxu0 %v756
    %1699 = vmatprep.subr.bf16.mxu0 %v749
    %1700 = vmatpush1.bf16.msra.mxu0 %v748
    %1701 = vmatprep.subr.bf16.mxu0 %v741
    %1702 = vmatpush1.bf16.msra.mxu0 %v740
    %1703 = vmatprep.subr.bf16.mxu0 %v733
    %1704 = vmatpush1.bf16.msra.mxu0 %v732
    %1705 = vmatprep.subr.bf16.mxu0 %v725
    %1706 = vmatpush1.bf16.msra.mxu0 %v724
    %1707 = vmatprep.subr.bf16.mxu0 %v845
    %1708 = vmatpush2.bf16.msra.mxu0 %v844
    %1709 = vmatprep.subr.bf16.mxu0 %v837
    %1710 = vmatpush2.bf16.msra.mxu0 %v836
    %1711 = vmatprep.subr.bf16.mxu0 %v829
    %1712 = vmatpush2.bf16.msra.mxu0 %v828
    %1713 = vmatprep.subr.bf16.mxu0 %v821
    %1714 = vmatpush2.bf16.msra.mxu0 %v820
    %1715 = vmatprep.subr.bf16.mxu0 %v813
    %1716 = vmatpush2.bf16.msra.mxu0 %v812
    %1717 = vmatprep.subr.bf16.mxu0 %v805
    %1718 = vmatpush2.bf16.msra.mxu0 %v804
    %1719 = vmatprep.subr.bf16.mxu0 %v797
    %1720 = vmatpush2.bf16.msra.mxu0 %v796
    %1721 = vmatprep.subr.bf16.mxu0 %v789
    %1722 = vmatpush2.bf16.msra.mxu0 %v788
    %1723 = vmatprep.mubr.bf16.mxu0 %v1383
    %1724 = vmatmul.mubr.bf16.gmra.mxu0 %v1382
    %v1725 = vpop.f32.mrf.mxu0
    %v1726 = vadd.f32 %v1685, %v1725
    %v1727 = vpop.f32.mrf.mxu0
    %v1728 = vadd.f32 %v1687, %v1727
    %v1729 = vpop.f32.mrf.mxu0
    %v1730 = vpop.f32.mrf.mxu0
    %1731 = vdwg.mxu0
    %1732 = vmatprep.subr.bf16.mxu0 %v909
    %1733 = vmatpush1.bf16.msra.mxu0 %v908
    %1734 = vmatprep.subr.bf16.mxu0 %v901
    %1735 = vmatpush1.bf16.msra.mxu0 %v900
    %1736 = vmatprep.subr.bf16.mxu0 %v893
    %1737 = vmatpush1.bf16.msra.mxu0 %v892
    %1738 = vmatprep.subr.bf16.mxu0 %v885
    %1739 = vmatpush1.bf16.msra.mxu0 %v884
    %1740 = vmatprep.subr.bf16.mxu0 %v877
    %1741 = vmatpush1.bf16.msra.mxu0 %v876
    %1742 = vmatprep.subr.bf16.mxu0 %v869
    %1743 = vmatpush1.bf16.msra.mxu0 %v868
    %1744 = vmatprep.subr.bf16.mxu0 %v861
    %1745 = vmatpush1.bf16.msra.mxu0 %v860
    %1746 = vmatprep.subr.bf16.mxu0 %v853
    %1747 = vmatpush1.bf16.msra.mxu0 %v852
    %1748 = vmatprep.subr.bf16.mxu0 %v973
    %1749 = vmatpush2.bf16.msra.mxu0 %v972
    %1750 = vmatprep.subr.bf16.mxu0 %v965
    %1751 = vmatpush2.bf16.msra.mxu0 %v964
    %1752 = vmatprep.subr.bf16.mxu0 %v957
    %1753 = vmatpush2.bf16.msra.mxu0 %v956
    %1754 = vmatprep.subr.bf16.mxu0 %v949
    %1755 = vmatpush2.bf16.msra.mxu0 %v948
    %1756 = vmatprep.subr.bf16.mxu0 %v941
    %1757 = vmatpush2.bf16.msra.mxu0 %v940
    %1758 = vmatprep.subr.bf16.mxu0 %v933
    %1759 = vmatpush2.bf16.msra.mxu0 %v932
    %1760 = vmatprep.subr.bf16.mxu0 %v925
    %1761 = vmatpush2.bf16.msra.mxu0 %v924
    %1762 = vmatprep.subr.bf16.mxu0 %v917
    %1763 = vmatpush2.bf16.msra.mxu0 %v916
    %1764 = vmatprep.mubr.bf16.mxu0 %v1385
    %1765 = vmatmul.mubr.bf16.gmra.mxu0 %v1384
    %v1766 = vpop.f32.mrf.mxu0
    %v1767 = vadd.f32 %v1726, %v1766
    %v1768 = vpop.f32.mrf.mxu0
    %v1769 = vadd.f32 %v1728, %v1768
    %v1770 = vpop.f32.mrf.mxu0
    %v1771 = vpop.f32.mrf.mxu0
    %1772 = vdwg.mxu0
    %1773 = vmatprep.subr.bf16.mxu0 %v1037
    %1774 = vmatpush1.bf16.msra.mxu0 %v1036
    %1775 = vmatprep.subr.bf16.mxu0 %v1029
    %1776 = vmatpush1.bf16.msra.mxu0 %v1028
    %1777 = vmatprep.subr.bf16.mxu0 %v1021
    %1778 = vmatpush1.bf16.msra.mxu0 %v1020
    %1779 = vmatprep.subr.bf16.mxu0 %v1013
    %1780 = vmatpush1.bf16.msra.mxu0 %v1012
    %1781 = vmatprep.subr.bf16.mxu0 %v1005
    %1782 = vmatpush1.bf16.msra.mxu0 %v1004
    %1783 = vmatprep.subr.bf16.mxu0 %v997
    %1784 = vmatpush1.bf16.msra.mxu0 %v996
    %1785 = vmatprep.subr.bf16.mxu0 %v989
    %1786 = vmatpush1.bf16.msra.mxu0 %v988
    %1787 = vmatprep.subr.bf16.mxu0 %v981
    %1788 = vmatpush1.bf16.msra.mxu0 %v980
    %1789 = vmatprep.subr.bf16.mxu0 %v1101
    %1790 = vmatpush2.bf16.msra.mxu0 %v1100
    %1791 = vmatprep.subr.bf16.mxu0 %v1093
    %1792 = vmatpush2.bf16.msra.mxu0 %v1092
    %1793 = vmatprep.subr.bf16.mxu0 %v1085
    %1794 = vmatpush2.bf16.msra.mxu0 %v1084
    %1795 = vmatprep.subr.bf16.mxu0 %v1077
    %1796 = vmatpush2.bf16.msra.mxu0 %v1076
    %1797 = vmatprep.subr.bf16.mxu0 %v1069
    %1798 = vmatpush2.bf16.msra.mxu0 %v1068
    %1799 = vmatprep.subr.bf16.mxu0 %v1061
    %1800 = vmatpush2.bf16.msra.mxu0 %v1060
    %1801 = vmatprep.subr.bf16.mxu0 %v1053
    %1802 = vmatpush2.bf16.msra.mxu0 %v1052
    %1803 = vmatprep.subr.bf16.mxu0 %v1045
    %1804 = vmatpush2.bf16.msra.mxu0 %v1044
    %1805 = vmatprep.mubr.bf16.mxu0 %v1387
    %1806 = vmatmul.mubr.bf16.gmra.mxu0 %v1386
    %v1807 = vpop.f32.mrf.mxu0
    %v1808 = vadd.f32 %v1767, %v1807
    %v1809 = vpop.f32.mrf.mxu0
    %v1810 = vadd.f32 %v1769, %v1809
    %v1811 = vpop.f32.mrf.mxu0
    %v1812 = vpop.f32.mrf.mxu0
    %1813 = vdwg.mxu0
    %1814 = vmatprep.subr.bf16.mxu0 %v1165
    %1815 = vmatpush1.bf16.msra.mxu0 %v1164
    %1816 = vmatprep.subr.bf16.mxu0 %v1157
    %1817 = vmatpush1.bf16.msra.mxu0 %v1156
    %1818 = vmatprep.subr.bf16.mxu0 %v1149
    %1819 = vmatpush1.bf16.msra.mxu0 %v1148
    %1820 = vmatprep.subr.bf16.mxu0 %v1141
    %1821 = vmatpush1.bf16.msra.mxu0 %v1140
    %1822 = vmatprep.subr.bf16.mxu0 %v1133
    %1823 = vmatpush1.bf16.msra.mxu0 %v1132
    %1824 = vmatprep.subr.bf16.mxu0 %v1125
    %1825 = vmatpush1.bf16.msra.mxu0 %v1124
    %1826 = vmatprep.subr.bf16.mxu0 %v1117
    %1827 = vmatpush1.bf16.msra.mxu0 %v1116
    %1828 = vmatprep.subr.bf16.mxu0 %v1109
    %1829 = vmatpush1.bf16.msra.mxu0 %v1108
    %1830 = vmatprep.subr.bf16.mxu0 %v1229
    %1831 = vmatpush2.bf16.msra.mxu0 %v1228
    %1832 = vmatprep.subr.bf16.mxu0 %v1221
    %1833 = vmatpush2.bf16.msra.mxu0 %v1220
    %1834 = vmatprep.subr.bf16.mxu0 %v1213
    %1835 = vmatpush2.bf16.msra.mxu0 %v1212
    %1836 = vmatprep.subr.bf16.mxu0 %v1205
    %1837 = vmatpush2.bf16.msra.mxu0 %v1204
    %1838 = vmatprep.subr.bf16.mxu0 %v1197
    %1839 = vmatpush2.bf16.msra.mxu0 %v1196
    %1840 = vmatprep.subr.bf16.mxu0 %v1189
    %1841 = vmatpush2.bf16.msra.mxu0 %v1188
    %1842 = vmatprep.subr.bf16.mxu0 %v1181
    %1843 = vmatpush2.bf16.msra.mxu0 %v1180
    %1844 = vmatprep.subr.bf16.mxu0 %v1173
    %1845 = vmatpush2.bf16.msra.mxu0 %v1172
    %1846 = vmatprep.mubr.bf16.mxu0 %v1389
    %1847 = vmatmul.mubr.bf16.gmra.mxu0 %v1388
    %v1848 = vpop.f32.mrf.mxu0
    %v1849 = vadd.f32 %v1808, %v1848
    %v1850 = vpop.f32.mrf.mxu0
    %v1851 = vadd.f32 %v1810, %v1850
    %v1852 = vpop.f32.mrf.mxu0
    %v1853 = vpop.f32.mrf.mxu0
    %1854 = vdwg.mxu0
    %1855 = vmatprep.subr.bf16.mxu0 %v1293
    %1856 = vmatpush1.bf16.msra.mxu0 %v1292
    %1857 = vmatprep.subr.bf16.mxu0 %v1285
    %1858 = vmatpush1.bf16.msra.mxu0 %v1284
    %1859 = vmatprep.subr.bf16.mxu0 %v1277
    %1860 = vmatpush1.bf16.msra.mxu0 %v1276
    %1861 = vmatprep.subr.bf16.mxu0 %v1269
    %1862 = vmatpush1.bf16.msra.mxu0 %v1268
    %1863 = vmatprep.subr.bf16.mxu0 %v1261
    %1864 = vmatpush1.bf16.msra.mxu0 %v1260
    %1865 = vmatprep.subr.bf16.mxu0 %v1253
    %1866 = vmatpush1.bf16.msra.mxu0 %v1252
    %1867 = vmatprep.subr.bf16.mxu0 %v1245
    %1868 = vmatpush1.bf16.msra.mxu0 %v1244
    %1869 = vmatprep.subr.bf16.mxu0 %v1237
    %1870 = vmatpush1.bf16.msra.mxu0 %v1236
    %1871 = vmatprep.subr.bf16.mxu0 %v1357
    %1872 = vmatpush2.bf16.msra.mxu0 %v1356
    %1873 = vmatprep.subr.bf16.mxu0 %v1349
    %1874 = vmatpush2.bf16.msra.mxu0 %v1348
    %1875 = vmatprep.subr.bf16.mxu0 %v1341
    %1876 = vmatpush2.bf16.msra.mxu0 %v1340
    %1877 = vmatprep.subr.bf16.mxu0 %v1333
    %1878 = vmatpush2.bf16.msra.mxu0 %v1332
    %1879 = vmatprep.subr.bf16.mxu0 %v1325
    %1880 = vmatpush2.bf16.msra.mxu0 %v1324
    %1881 = vmatprep.subr.bf16.mxu0 %v1317
    %1882 = vmatpush2.bf16.msra.mxu0 %v1316
    %1883 = vmatprep.subr.bf16.mxu0 %v1309
    %1884 = vmatpush2.bf16.msra.mxu0 %v1308
    %1885 = vmatprep.subr.bf16.mxu0 %v1301
    %1886 = vmatpush2.bf16.msra.mxu0 %v1300
    %1887 = vmatprep.mubr.bf16.mxu0 %v1391
    %1888 = vmatmul.mubr.bf16.gmra.mxu0 %v1390
    %v1889 = vpop.f32.mrf.mxu0
    %v1890 = vadd.f32 %v1849, %v1889
    %v1891 = vpop.f32.mrf.mxu0
    %v1892 = vadd.f32 %v1851, %v1891
    %v1893 = vpop.f32.mrf.mxu0
    %v1894 = vpop.f32.mrf.mxu0
    %1895 = vdwg.mxu0
    %1896 = vmatprep.subr.bf16.mxu0 %v655
    %1897 = vmatpush1.bf16.msra.mxu0 %v654
    %1898 = vmatprep.subr.bf16.mxu0 %v647
    %1899 = vmatpush1.bf16.msra.mxu0 %v646
    %1900 = vmatprep.subr.bf16.mxu0 %v639
    %1901 = vmatpush1.bf16.msra.mxu0 %v638
    %1902 = vmatprep.subr.bf16.mxu0 %v631
    %1903 = vmatpush1.bf16.msra.mxu0 %v630
    %1904 = vmatprep.subr.bf16.mxu0 %v623
    %1905 = vmatpush1.bf16.msra.mxu0 %v622
    %1906 = vmatprep.subr.bf16.mxu0 %v615
    %1907 = vmatpush1.bf16.msra.mxu0 %v614
    %1908 = vmatprep.subr.bf16.mxu0 %v607
    %1909 = vmatpush1.bf16.msra.mxu0 %v606
    %1910 = vmatprep.subr.bf16.mxu0 %v599
    %1911 = vmatpush1.bf16.msra.mxu0 %v598
    %1912 = vmatprep.subr.bf16.mxu0 %v719
    %1913 = vmatpush2.bf16.msra.mxu0 %v718
    %1914 = vmatprep.subr.bf16.mxu0 %v711
    %1915 = vmatpush2.bf16.msra.mxu0 %v710
    %1916 = vmatprep.subr.bf16.mxu0 %v703
    %1917 = vmatpush2.bf16.msra.mxu0 %v702
    %1918 = vmatprep.subr.bf16.mxu0 %v695
    %1919 = vmatpush2.bf16.msra.mxu0 %v694
    %1920 = vmatprep.subr.bf16.mxu0 %v687
    %1921 = vmatpush2.bf16.msra.mxu0 %v686
    %1922 = vmatprep.subr.bf16.mxu0 %v679
    %1923 = vmatpush2.bf16.msra.mxu0 %v678
    %1924 = vmatprep.subr.bf16.mxu0 %v671
    %1925 = vmatpush2.bf16.msra.mxu0 %v670
    %1926 = vmatprep.subr.bf16.mxu0 %v663
    %1927 = vmatpush2.bf16.msra.mxu0 %v662
    %1928 = vmatprep.mubr.bf16.mxu0 %v1381
    %1929 = vmatmul.mubr.bf16.gmra.mxu0 %v1380
    %v1930 = vpop.f32.mrf.mxu0
    %v1931 = vadd.f32 0.0, %v1930
    %v1932 = vpop.f32.mrf.mxu0
    %v1933 = vadd.f32 0.0, %v1932
    %v1934 = vpop.f32.mrf.mxu0
    %v1935 = vpop.f32.mrf.mxu0
    %1936 = vdwg.mxu0
    %1937 = vmatprep.subr.bf16.mxu0 %v783
    %1938 = vmatpush1.bf16.msra.mxu0 %v782
    %1939 = vmatprep.subr.bf16.mxu0 %v775
    %1940 = vmatpush1.bf16.msra.mxu0 %v774
    %1941 = vmatprep.subr.bf16.mxu0 %v767
    %1942 = vmatpush1.bf16.msra.mxu0 %v766
    %1943 = vmatprep.subr.bf16.mxu0 %v759
    %1944 = vmatpush1.bf16.msra.mxu0 %v758
    %1945 = vmatprep.subr.bf16.mxu0 %v751
    %1946 = vmatpush1.bf16.msra.mxu0 %v750
    %1947 = vmatprep.subr.bf16.mxu0 %v743
    %1948 = vmatpush1.bf16.msra.mxu0 %v742
    %1949 = vmatprep.subr.bf16.mxu0 %v735
    %1950 = vmatpush1.bf16.msra.mxu0 %v734
    %1951 = vmatprep.subr.bf16.mxu0 %v727
    %1952 = vmatpush1.bf16.msra.mxu0 %v726
    %1953 = vmatprep.subr.bf16.mxu0 %v847
    %1954 = vmatpush2.bf16.msra.mxu0 %v846
    %1955 = vmatprep.subr.bf16.mxu0 %v839
    %1956 = vmatpush2.bf16.msra.mxu0 %v838
    %1957 = vmatprep.subr.bf16.mxu0 %v831
    %1958 = vmatpush2.bf16.msra.mxu0 %v830
    %1959 = vmatprep.subr.bf16.mxu0 %v823
    %1960 = vmatpush2.bf16.msra.mxu0 %v822
    %1961 = vmatprep.subr.bf16.mxu0 %v815
    %1962 = vmatpush2.bf16.msra.mxu0 %v814
    %1963 = vmatprep.subr.bf16.mxu0 %v807
    %1964 = vmatpush2.bf16.msra.mxu0 %v806
    %1965 = vmatprep.subr.bf16.mxu0 %v799
    %1966 = vmatpush2.bf16.msra.mxu0 %v798
    %1967 = vmatprep.subr.bf16.mxu0 %v791
    %1968 = vmatpush2.bf16.msra.mxu0 %v790
    %1969 = vmatprep.mubr.bf16.mxu0 %v1383
    %1970 = vmatmul.mubr.bf16.gmra.mxu0 %v1382
    %v1971 = vpop.f32.mrf.mxu0
    %v1972 = vadd.f32 %v1931, %v1971
    %v1973 = vpop.f32.mrf.mxu0
    %v1974 = vadd.f32 %v1933, %v1973
    %v1975 = vpop.f32.mrf.mxu0
    %v1976 = vpop.f32.mrf.mxu0
    %1977 = vdwg.mxu0
    %1978 = vmatprep.subr.bf16.mxu0 %v911
    %1979 = vmatpush1.bf16.msra.mxu0 %v910
    %1980 = vmatprep.subr.bf16.mxu0 %v903
    %1981 = vmatpush1.bf16.msra.mxu0 %v902
    %1982 = vmatprep.subr.bf16.mxu0 %v895
    %1983 = vmatpush1.bf16.msra.mxu0 %v894
    %1984 = vmatprep.subr.bf16.mxu0 %v887
    %1985 = vmatpush1.bf16.msra.mxu0 %v886
    %1986 = vmatprep.subr.bf16.mxu0 %v879
    %1987 = vmatpush1.bf16.msra.mxu0 %v878
    %1988 = vmatprep.subr.bf16.mxu0 %v871
    %1989 = vmatpush1.bf16.msra.mxu0 %v870
    %1990 = vmatprep.subr.bf16.mxu0 %v863
    %1991 = vmatpush1.bf16.msra.mxu0 %v862
    %1992 = vmatprep.subr.bf16.mxu0 %v855
    %1993 = vmatpush1.bf16.msra.mxu0 %v854
    %1994 = vmatprep.subr.bf16.mxu0 %v975
    %1995 = vmatpush2.bf16.msra.mxu0 %v974
    %1996 = vmatprep.subr.bf16.mxu0 %v967
    %1997 = vmatpush2.bf16.msra.mxu0 %v966
    %1998 = vmatprep.subr.bf16.mxu0 %v959
    %1999 = vmatpush2.bf16.msra.mxu0 %v958
    %2000 = vmatprep.subr.bf16.mxu0 %v951
    %2001 = vmatpush2.bf16.msra.mxu0 %v950
    %2002 = vmatprep.subr.bf16.mxu0 %v943
    %2003 = vmatpush2.bf16.msra.mxu0 %v942
    %2004 = vmatprep.subr.bf16.mxu0 %v935
    %2005 = vmatpush2.bf16.msra.mxu0 %v934
    %2006 = vmatprep.subr.bf16.mxu0 %v927
    %2007 = vmatpush2.bf16.msra.mxu0 %v926
    %2008 = vmatprep.subr.bf16.mxu0 %v919
    %2009 = vmatpush2.bf16.msra.mxu0 %v918
    %2010 = vmatprep.mubr.bf16.mxu0 %v1385
    %2011 = vmatmul.mubr.bf16.gmra.mxu0 %v1384
    %v2012 = vpop.f32.mrf.mxu0
    %v2013 = vadd.f32 %v1972, %v2012
    %v2014 = vpop.f32.mrf.mxu0
    %v2015 = vadd.f32 %v1974, %v2014
    %v2016 = vpop.f32.mrf.mxu0
    %v2017 = vpop.f32.mrf.mxu0
    %2018 = vdwg.mxu0
    %2019 = vmatprep.subr.bf16.mxu0 %v1039
    %2020 = vmatpush1.bf16.msra.mxu0 %v1038
    %2021 = vmatprep.subr.bf16.mxu0 %v1031
    %2022 = vmatpush1.bf16.msra.mxu0 %v1030
    %2023 = vmatprep.subr.bf16.mxu0 %v1023
    %2024 = vmatpush1.bf16.msra.mxu0 %v1022
    %2025 = vmatprep.subr.bf16.mxu0 %v1015
    %2026 = vmatpush1.bf16.msra.mxu0 %v1014
    %2027 = vmatprep.subr.bf16.mxu0 %v1007
    %2028 = vmatpush1.bf16.msra.mxu0 %v1006
    %2029 = vmatprep.subr.bf16.mxu0 %v999
    %2030 = vmatpush1.bf16.msra.mxu0 %v998
    %2031 = vmatprep.subr.bf16.mxu0 %v991
    %2032 = vmatpush1.bf16.msra.mxu0 %v990
    %2033 = vmatprep.subr.bf16.mxu0 %v983
    %2034 = vmatpush1.bf16.msra.mxu0 %v982
    %2035 = vmatprep.subr.bf16.mxu0 %v1103
    %2036 = vmatpush2.bf16.msra.mxu0 %v1102
    %2037 = vmatprep.subr.bf16.mxu0 %v1095
    %2038 = vmatpush2.bf16.msra.mxu0 %v1094
    %2039 = vmatprep.subr.bf16.mxu0 %v1087
    %2040 = vmatpush2.bf16.msra.mxu0 %v1086
    %2041 = vmatprep.subr.bf16.mxu0 %v1079
    %2042 = vmatpush2.bf16.msra.mxu0 %v1078
    %2043 = vmatprep.subr.bf16.mxu0 %v1071
    %2044 = vmatpush2.bf16.msra.mxu0 %v1070
    %2045 = vmatprep.subr.bf16.mxu0 %v1063
    %2046 = vmatpush2.bf16.msra.mxu0 %v1062
    %2047 = vmatprep.subr.bf16.mxu0 %v1055
    %2048 = vmatpush2.bf16.msra.mxu0 %v1054
    %2049 = vmatprep.subr.bf16.mxu0 %v1047
    %2050 = vmatpush2.bf16.msra.mxu0 %v1046
    %2051 = vmatprep.mubr.bf16.mxu0 %v1387
    %2052 = vmatmul.mubr.bf16.gmra.mxu0 %v1386
    %v2053 = vpop.f32.mrf.mxu0
    %v2054 = vadd.f32 %v2013, %v2053
    %v2055 = vpop.f32.mrf.mxu0
    %v2056 = vadd.f32 %v2015, %v2055
    %v2057 = vpop.f32.mrf.mxu0
    %v2058 = vpop.f32.mrf.mxu0
    %2059 = vdwg.mxu0
    %2060 = vmatprep.subr.bf16.mxu0 %v1167
    %2061 = vmatpush1.bf16.msra.mxu0 %v1166
    %2062 = vmatprep.subr.bf16.mxu0 %v1159
    %2063 = vmatpush1.bf16.msra.mxu0 %v1158
    %2064 = vmatprep.subr.bf16.mxu0 %v1151
    %2065 = vmatpush1.bf16.msra.mxu0 %v1150
    %2066 = vmatprep.subr.bf16.mxu0 %v1143
    %2067 = vmatpush1.bf16.msra.mxu0 %v1142
    %2068 = vmatprep.subr.bf16.mxu0 %v1135
    %2069 = vmatpush1.bf16.msra.mxu0 %v1134
    %2070 = vmatprep.subr.bf16.mxu0 %v1127
    %2071 = vmatpush1.bf16.msra.mxu0 %v1126
    %2072 = vmatprep.subr.bf16.mxu0 %v1119
    %2073 = vmatpush1.bf16.msra.mxu0 %v1118
    %2074 = vmatprep.subr.bf16.mxu0 %v1111
    %2075 = vmatpush1.bf16.msra.mxu0 %v1110
    %2076 = vmatprep.subr.bf16.mxu0 %v1231
    %2077 = vmatpush2.bf16.msra.mxu0 %v1230
    %2078 = vmatprep.subr.bf16.mxu0 %v1223
    %2079 = vmatpush2.bf16.msra.mxu0 %v1222
    %2080 = vmatprep.subr.bf16.mxu0 %v1215
    %2081 = vmatpush2.bf16.msra.mxu0 %v1214
    %2082 = vmatprep.subr.bf16.mxu0 %v1207
    %2083 = vmatpush2.bf16.msra.mxu0 %v1206
    %2084 = vmatprep.subr.bf16.mxu0 %v1199
    %2085 = vmatpush2.bf16.msra.mxu0 %v1198
    %2086 = vmatprep.subr.bf16.mxu0 %v1191
    %2087 = vmatpush2.bf16.msra.mxu0 %v1190
    %2088 = vmatprep.subr.bf16.mxu0 %v1183
    %2089 = vmatpush2.bf16.msra.mxu0 %v1182
    %2090 = vmatprep.subr.bf16.mxu0 %v1175
    %2091 = vmatpush2.bf16.msra.mxu0 %v1174
    %2092 = vmatprep.mubr.bf16.mxu0 %v1389
    %2093 = vmatmul.mubr.bf16.gmra.mxu0 %v1388
    %v2094 = vpop.f32.mrf.mxu0
    %v2095 = vadd.f32 %v2054, %v2094
    %v2096 = vpop.f32.mrf.mxu0
    %v2097 = vadd.f32 %v2056, %v2096
    %v2098 = vpop.f32.mrf.mxu0
    %v2099 = vpop.f32.mrf.mxu0
    %2100 = vdwg.mxu0
    %2101 = vmatprep.subr.bf16.mxu0 %v1295
    %2102 = vmatpush1.bf16.msra.mxu0 %v1294
    %2103 = vmatprep.subr.bf16.mxu0 %v1287
    %2104 = vmatpush1.bf16.msra.mxu0 %v1286
    %2105 = vmatprep.subr.bf16.mxu0 %v1279
    %2106 = vmatpush1.bf16.msra.mxu0 %v1278
    %2107 = vmatprep.subr.bf16.mxu0 %v1271
    %2108 = vmatpush1.bf16.msra.mxu0 %v1270
    %2109 = vmatprep.subr.bf16.mxu0 %v1263
    %2110 = vmatpush1.bf16.msra.mxu0 %v1262
    %2111 = vmatprep.subr.bf16.mxu0 %v1255
    %2112 = vmatpush1.bf16.msra.mxu0 %v1254
    %2113 = vmatprep.subr.bf16.mxu0 %v1247
    %2114 = vmatpush1.bf16.msra.mxu0 %v1246
    %2115 = vmatprep.subr.bf16.mxu0 %v1239
    %2116 = vmatpush1.bf16.msra.mxu0 %v1238
    %2117 = vmatprep.subr.bf16.mxu0 %v1359
    %2118 = vmatpush2.bf16.msra.mxu0 %v1358
    %2119 = vmatprep.subr.bf16.mxu0 %v1351
    %2120 = vmatpush2.bf16.msra.mxu0 %v1350
    %2121 = vmatprep.subr.bf16.mxu0 %v1343
    %2122 = vmatpush2.bf16.msra.mxu0 %v1342
    %2123 = vmatprep.subr.bf16.mxu0 %v1335
    %2124 = vmatpush2.bf16.msra.mxu0 %v1334
    %2125 = vmatprep.subr.bf16.mxu0 %v1327
    %2126 = vmatpush2.bf16.msra.mxu0 %v1326
    %2127 = vmatprep.subr.bf16.mxu0 %v1319
    %2128 = vmatpush2.bf16.msra.mxu0 %v1318
    %2129 = vmatprep.subr.bf16.mxu0 %v1311
    %2130 = vmatpush2.bf16.msra.mxu0 %v1310
    %2131 = vmatprep.subr.bf16.mxu0 %v1303
    %2132 = vmatpush2.bf16.msra.mxu0 %v1302
    %2133 = vmatprep.mubr.bf16.mxu0 %v1391
    %2134 = vmatmul.mubr.bf16.gmra.mxu0 %v1390
    %v2135 = vpop.f32.mrf.mxu0
    %v2136 = vadd.f32 %v2095, %v2135
    %v2137 = vpop.f32.mrf.mxu0
    %v2138 = vadd.f32 %v2097, %v2137
    %v2139 = vpop.f32.mrf.mxu0
    %v2140 = vpop.f32.mrf.mxu0
    %2141 = vdwg.mxu0
    %2142 = vmatprep.subr.bf16.mxu0 %v657
    %2143 = vmatpush1.bf16.msra.mxu0 %v656
    %2144 = vmatprep.subr.bf16.mxu0 %v649
    %2145 = vmatpush1.bf16.msra.mxu0 %v648
    %2146 = vmatprep.subr.bf16.mxu0 %v641
    %2147 = vmatpush1.bf16.msra.mxu0 %v640
    %2148 = vmatprep.subr.bf16.mxu0 %v633
    %2149 = vmatpush1.bf16.msra.mxu0 %v632
    %2150 = vmatprep.subr.bf16.mxu0 %v625
    %2151 = vmatpush1.bf16.msra.mxu0 %v624
    %2152 = vmatprep.subr.bf16.mxu0 %v617
    %2153 = vmatpush1.bf16.msra.mxu0 %v616
    %2154 = vmatprep.subr.bf16.mxu0 %v609
    %2155 = vmatpush1.bf16.msra.mxu0 %v608
    %2156 = vmatprep.subr.bf16.mxu0 %v601
    %2157 = vmatpush1.bf16.msra.mxu0 %v600
    %2158 = vmatprep.subr.bf16.mxu0 %v721
    %2159 = vmatpush2.bf16.msra.mxu0 %v720
    %2160 = vmatprep.subr.bf16.mxu0 %v713
    %2161 = vmatpush2.bf16.msra.mxu0 %v712
    %2162 = vmatprep.subr.bf16.mxu0 %v705
    %2163 = vmatpush2.bf16.msra.mxu0 %v704
    %2164 = vmatprep.subr.bf16.mxu0 %v697
    %2165 = vmatpush2.bf16.msra.mxu0 %v696
    %2166 = vmatprep.subr.bf16.mxu0 %v689
    %2167 = vmatpush2.bf16.msra.mxu0 %v688
    %2168 = vmatprep.subr.bf16.mxu0 %v681
    %2169 = vmatpush2.bf16.msra.mxu0 %v680
    %2170 = vmatprep.subr.bf16.mxu0 %v673
    %2171 = vmatpush2.bf16.msra.mxu0 %v672
    %2172 = vmatprep.subr.bf16.mxu0 %v665
    %2173 = vmatpush2.bf16.msra.mxu0 %v664
    %2174 = vmatprep.mubr.bf16.mxu0 %v1381
    %2175 = vmatmul.mubr.bf16.gmra.mxu0 %v1380
    %v2176 = vpop.f32.mrf.mxu0
    %v2177 = vadd.f32 0.0, %v2176
    %v2178 = vpop.f32.mrf.mxu0
    %v2179 = vadd.f32 0.0, %v2178
    %v2180 = vpop.f32.mrf.mxu0
    %v2181 = vpop.f32.mrf.mxu0
    %2182 = vdwg.mxu0
    %2183 = vmatprep.subr.bf16.mxu0 %v785
    %2184 = vmatpush1.bf16.msra.mxu0 %v784
    %2185 = vmatprep.subr.bf16.mxu0 %v777
    %2186 = vmatpush1.bf16.msra.mxu0 %v776
    %2187 = vmatprep.subr.bf16.mxu0 %v769
    %2188 = vmatpush1.bf16.msra.mxu0 %v768
    %2189 = vmatprep.subr.bf16.mxu0 %v761
    %2190 = vmatpush1.bf16.msra.mxu0 %v760
    %2191 = vmatprep.subr.bf16.mxu0 %v753
    %2192 = vmatpush1.bf16.msra.mxu0 %v752
    %2193 = vmatprep.subr.bf16.mxu0 %v745
    %2194 = vmatpush1.bf16.msra.mxu0 %v744
    %2195 = vmatprep.subr.bf16.mxu0 %v737
    %2196 = vmatpush1.bf16.msra.mxu0 %v736
    %2197 = vmatprep.subr.bf16.mxu0 %v729
    %2198 = vmatpush1.bf16.msra.mxu0 %v728
    %2199 = vmatprep.subr.bf16.mxu0 %v849
    %2200 = vmatpush2.bf16.msra.mxu0 %v848
    %2201 = vmatprep.subr.bf16.mxu0 %v841
    %2202 = vmatpush2.bf16.msra.mxu0 %v840
    %2203 = vmatprep.subr.bf16.mxu0 %v833
    %2204 = vmatpush2.bf16.msra.mxu0 %v832
    %2205 = vmatprep.subr.bf16.mxu0 %v825
    %2206 = vmatpush2.bf16.msra.mxu0 %v824
    %2207 = vmatprep.subr.bf16.mxu0 %v817
    %2208 = vmatpush2.bf16.msra.mxu0 %v816
    %2209 = vmatprep.subr.bf16.mxu0 %v809
    %2210 = vmatpush2.bf16.msra.mxu0 %v808
    %2211 = vmatprep.subr.bf16.mxu0 %v801
    %2212 = vmatpush2.bf16.msra.mxu0 %v800
    %2213 = vmatprep.subr.bf16.mxu0 %v793
    %2214 = vmatpush2.bf16.msra.mxu0 %v792
    %2215 = vmatprep.mubr.bf16.mxu0 %v1383
    %2216 = vmatmul.mubr.bf16.gmra.mxu0 %v1382
    %v2217 = vpop.f32.mrf.mxu0
    %v2218 = vadd.f32 %v2177, %v2217
    %v2219 = vpop.f32.mrf.mxu0
    %v2220 = vadd.f32 %v2179, %v2219
    %v2221 = vpop.f32.mrf.mxu0
    %v2222 = vpop.f32.mrf.mxu0
    %2223 = vdwg.mxu0
    %2224 = vmatprep.subr.bf16.mxu0 %v913
    %2225 = vmatpush1.bf16.msra.mxu0 %v912
    %2226 = vmatprep.subr.bf16.mxu0 %v905
    %2227 = vmatpush1.bf16.msra.mxu0 %v904
    %2228 = vmatprep.subr.bf16.mxu0 %v897
    %2229 = vmatpush1.bf16.msra.mxu0 %v896
    %2230 = vmatprep.subr.bf16.mxu0 %v889
    %2231 = vmatpush1.bf16.msra.mxu0 %v888
    %2232 = vmatprep.subr.bf16.mxu0 %v881
    %2233 = vmatpush1.bf16.msra.mxu0 %v880
    %2234 = vmatprep.subr.bf16.mxu0 %v873
    %2235 = vmatpush1.bf16.msra.mxu0 %v872
    %2236 = vmatprep.subr.bf16.mxu0 %v865
    %2237 = vmatpush1.bf16.msra.mxu0 %v864
    %2238 = vmatprep.subr.bf16.mxu0 %v857
    %2239 = vmatpush1.bf16.msra.mxu0 %v856
    %2240 = vmatprep.subr.bf16.mxu0 %v977
    %2241 = vmatpush2.bf16.msra.mxu0 %v976
    %2242 = vmatprep.subr.bf16.mxu0 %v969
    %2243 = vmatpush2.bf16.msra.mxu0 %v968
    %2244 = vmatprep.subr.bf16.mxu0 %v961
    %2245 = vmatpush2.bf16.msra.mxu0 %v960
    %2246 = vmatprep.subr.bf16.mxu0 %v953
    %2247 = vmatpush2.bf16.msra.mxu0 %v952
    %2248 = vmatprep.subr.bf16.mxu0 %v945
    %2249 = vmatpush2.bf16.msra.mxu0 %v944
    %2250 = vmatprep.subr.bf16.mxu0 %v937
    %2251 = vmatpush2.bf16.msra.mxu0 %v936
    %2252 = vmatprep.subr.bf16.mxu0 %v929
    %2253 = vmatpush2.bf16.msra.mxu0 %v928
    %2254 = vmatprep.subr.bf16.mxu0 %v921
    %2255 = vmatpush2.bf16.msra.mxu0 %v920
    %2256 = vmatprep.mubr.bf16.mxu0 %v1385
    %2257 = vmatmul.mubr.bf16.gmra.mxu0 %v1384
    %v2258 = vpop.f32.mrf.mxu0
    %v2259 = vadd.f32 %v2218, %v2258
    %v2260 = vpop.f32.mrf.mxu0
    %v2261 = vadd.f32 %v2220, %v2260
    %v2262 = vpop.f32.mrf.mxu0
    %v2263 = vpop.f32.mrf.mxu0
    %2264 = vdwg.mxu0
    %2265 = vmatprep.subr.bf16.mxu0 %v1041
    %2266 = vmatpush1.bf16.msra.mxu0 %v1040
    %2267 = vmatprep.subr.bf16.mxu0 %v1033
    %2268 = vmatpush1.bf16.msra.mxu0 %v1032
    %2269 = vmatprep.subr.bf16.mxu0 %v1025
    %2270 = vmatpush1.bf16.msra.mxu0 %v1024
    %2271 = vmatprep.subr.bf16.mxu0 %v1017
    %2272 = vmatpush1.bf16.msra.mxu0 %v1016
    %2273 = vmatprep.subr.bf16.mxu0 %v1009
    %2274 = vmatpush1.bf16.msra.mxu0 %v1008
    %2275 = vmatprep.subr.bf16.mxu0 %v1001
    %2276 = vmatpush1.bf16.msra.mxu0 %v1000
    %2277 = vmatprep.subr.bf16.mxu0 %v993
    %2278 = vmatpush1.bf16.msra.mxu0 %v992
    %2279 = vmatprep.subr.bf16.mxu0 %v985
    %2280 = vmatpush1.bf16.msra.mxu0 %v984
    %2281 = vmatprep.subr.bf16.mxu0 %v1105
    %2282 = vmatpush2.bf16.msra.mxu0 %v1104
    %2283 = vmatprep.subr.bf16.mxu0 %v1097
    %2284 = vmatpush2.bf16.msra.mxu0 %v1096
    %2285 = vmatprep.subr.bf16.mxu0 %v1089
    %2286 = vmatpush2.bf16.msra.mxu0 %v1088
    %2287 = vmatprep.subr.bf16.mxu0 %v1081
    %2288 = vmatpush2.bf16.msra.mxu0 %v1080
    %2289 = vmatprep.subr.bf16.mxu0 %v1073
    %2290 = vmatpush2.bf16.msra.mxu0 %v1072
    %2291 = vmatprep.subr.bf16.mxu0 %v1065
    %2292 = vmatpush2.bf16.msra.mxu0 %v1064
    %2293 = vmatprep.subr.bf16.mxu0 %v1057
    %2294 = vmatpush2.bf16.msra.mxu0 %v1056
    %2295 = vmatprep.subr.bf16.mxu0 %v1049
    %2296 = vmatpush2.bf16.msra.mxu0 %v1048
    %2297 = vmatprep.mubr.bf16.mxu0 %v1387
    %2298 = vmatmul.mubr.bf16.gmra.mxu0 %v1386
    %v2299 = vpop.f32.mrf.mxu0
    %v2300 = vadd.f32 %v2259, %v2299
    %v2301 = vpop.f32.mrf.mxu0
    %v2302 = vadd.f32 %v2261, %v2301
    %v2303 = vpop.f32.mrf.mxu0
    %v2304 = vpop.f32.mrf.mxu0
    %2305 = vdwg.mxu0
    %2306 = vmatprep.subr.bf16.mxu0 %v1169
    %2307 = vmatpush1.bf16.msra.mxu0 %v1168
    %2308 = vmatprep.subr.bf16.mxu0 %v1161
    %2309 = vmatpush1.bf16.msra.mxu0 %v1160
    %2310 = vmatprep.subr.bf16.mxu0 %v1153
    %2311 = vmatpush1.bf16.msra.mxu0 %v1152
    %2312 = vmatprep.subr.bf16.mxu0 %v1145
    %2313 = vmatpush1.bf16.msra.mxu0 %v1144
    %2314 = vmatprep.subr.bf16.mxu0 %v1137
    %2315 = vmatpush1.bf16.msra.mxu0 %v1136
    %2316 = vmatprep.subr.bf16.mxu0 %v1129
    %2317 = vmatpush1.bf16.msra.mxu0 %v1128
    %2318 = vmatprep.subr.bf16.mxu0 %v1121
    %2319 = vmatpush1.bf16.msra.mxu0 %v1120
    %2320 = vmatprep.subr.bf16.mxu0 %v1113
    %2321 = vmatpush1.bf16.msra.mxu0 %v1112
    %2322 = vmatprep.subr.bf16.mxu0 %v1233
    %2323 = vmatpush2.bf16.msra.mxu0 %v1232
    %2324 = vmatprep.subr.bf16.mxu0 %v1225
    %2325 = vmatpush2.bf16.msra.mxu0 %v1224
    %2326 = vmatprep.subr.bf16.mxu0 %v1217
    %2327 = vmatpush2.bf16.msra.mxu0 %v1216
    %2328 = vmatprep.subr.bf16.mxu0 %v1209
    %2329 = vmatpush2.bf16.msra.mxu0 %v1208
    %2330 = vmatprep.subr.bf16.mxu0 %v1201
    %2331 = vmatpush2.bf16.msra.mxu0 %v1200
    %2332 = vmatprep.subr.bf16.mxu0 %v1193
    %2333 = vmatpush2.bf16.msra.mxu0 %v1192
    %2334 = vmatprep.subr.bf16.mxu0 %v1185
    %2335 = vmatpush2.bf16.msra.mxu0 %v1184
    %2336 = vmatprep.subr.bf16.mxu0 %v1177
    %2337 = vmatpush2.bf16.msra.mxu0 %v1176
    %2338 = vmatprep.mubr.bf16.mxu0 %v1389
    %2339 = vmatmul.mubr.bf16.gmra.mxu0 %v1388
    %v2340 = vpop.f32.mrf.mxu0
    %v2341 = vadd.f32 %v2300, %v2340
    %v2342 = vpop.f32.mrf.mxu0
    %v2343 = vadd.f32 %v2302, %v2342
    %v2344 = vpop.f32.mrf.mxu0
    %v2345 = vpop.f32.mrf.mxu0
    %2346 = vdwg.mxu0
    %2347 = vmatprep.subr.bf16.mxu0 %v1297
    %2348 = vmatpush1.bf16.msra.mxu0 %v1296
    %2349 = vmatprep.subr.bf16.mxu0 %v1289
    %2350 = vmatpush1.bf16.msra.mxu0 %v1288
    %2351 = vmatprep.subr.bf16.mxu0 %v1281
    %2352 = vmatpush1.bf16.msra.mxu0 %v1280
    %2353 = vmatprep.subr.bf16.mxu0 %v1273
    %2354 = vmatpush1.bf16.msra.mxu0 %v1272
    %2355 = vmatprep.subr.bf16.mxu0 %v1265
    %2356 = vmatpush1.bf16.msra.mxu0 %v1264
    %2357 = vmatprep.subr.bf16.mxu0 %v1257
    %2358 = vmatpush1.bf16.msra.mxu0 %v1256
    %2359 = vmatprep.subr.bf16.mxu0 %v1249
    %2360 = vmatpush1.bf16.msra.mxu0 %v1248
    %2361 = vmatprep.subr.bf16.mxu0 %v1241
    %2362 = vmatpush1.bf16.msra.mxu0 %v1240
    %2363 = vmatprep.subr.bf16.mxu0 %v1361
    %2364 = vmatpush2.bf16.msra.mxu0 %v1360
    %2365 = vmatprep.subr.bf16.mxu0 %v1353
    %2366 = vmatpush2.bf16.msra.mxu0 %v1352
    %2367 = vmatprep.subr.bf16.mxu0 %v1345
    %2368 = vmatpush2.bf16.msra.mxu0 %v1344
    %2369 = vmatprep.subr.bf16.mxu0 %v1337
    %2370 = vmatpush2.bf16.msra.mxu0 %v1336
    %2371 = vmatprep.subr.bf16.mxu0 %v1329
    %2372 = vmatpush2.bf16.msra.mxu0 %v1328
    %2373 = vmatprep.subr.bf16.mxu0 %v1321
    %2374 = vmatpush2.bf16.msra.mxu0 %v1320
    %2375 = vmatprep.subr.bf16.mxu0 %v1313
    %2376 = vmatpush2.bf16.msra.mxu0 %v1312
    %2377 = vmatprep.subr.bf16.mxu0 %v1305
    %2378 = vmatpush2.bf16.msra.mxu0 %v1304
    %2379 = vmatprep.mubr.bf16.mxu0 %v1391
    %2380 = vmatmul.mubr.bf16.gmra.mxu0 %v1390
    %v2381 = vpop.f32.mrf.mxu0
    %v2382 = vadd.f32 %v2341, %v2381
    %v2383 = vpop.f32.mrf.mxu0
    %v2384 = vadd.f32 %v2343, %v2383
    %v2385 = vpop.f32.mrf.mxu0
    %v2386 = vpop.f32.mrf.mxu0
    %2387 = vdwg.mxu0
    %v2388 = vld [vmem:[#allocation7] sm:$0xff]
    %v2390 = vlaneseq
    %v2391 = vshrl.u32 %v2390, 7
    %v2392 = vsub.s32 0, %v2391
    %v2393 = vrot.slane %v2388, %v2392
    %v2394 = vlaneseq
    %v2395 = vshrl.u32 %v2394, 7
    %v2396 = vsub.s32 1, %v2395
    %v2397 = vrot.slane %v2388, %v2396
    %v2398 = vlaneseq
    %v2399 = vshrl.u32 %v2398, 7
    %v2400 = vsub.s32 2, %v2399
    %v2401 = vrot.slane %v2388, %v2400
    %v2402 = vlaneseq
    %v2403 = vshrl.u32 %v2402, 7
    %v2404 = vsub.s32 3, %v2403
    %v2405 = vrot.slane %v2388, %v2404
    %v2406 = vlaneseq
    %v2407 = vshrl.u32 %v2406, 7
    %v2408 = vsub.s32 4, %v2407
    %v2409 = vrot.slane %v2388, %v2408
    %v2410 = vlaneseq
    %v2411 = vshrl.u32 %v2410, 7
    %v2412 = vsub.s32 5, %v2411
    %v2413 = vrot.slane %v2388, %v2412
    %v2414 = vlaneseq
    %v2415 = vshrl.u32 %v2414, 7
    %v2416 = vsub.s32 6, %v2415
    %v2417 = vrot.slane %v2388, %v2416
    %v2418 = vlaneseq
    %v2419 = vshrl.u32 %v2418, 7
    %v2420 = vsub.s32 7, %v2419
    %v2421 = vrot.slane %v2388, %v2420
    %v2430 = vmul.f32 %v1644, %v2393
    %v2431 = vmul.f32 %v1646, %v2397
    %v2432 = vmul.f32 %v1890, %v2401
    %v2433 = vmul.f32 %v1892, %v2405
    %v2434 = vmul.f32 %v2136, %v2409
    %v2435 = vmul.f32 %v2138, %v2413
    %v2436 = vmul.f32 %v2382, %v2417
    %v2437 = vmul.f32 %v2384, %v2421
    %v2438 = vld [vmem:[#allocation8] sm:$0xff]
    %v2440 = vlaneseq
    %v2441 = vshrl.u32 %v2440, 7
    %v2442 = vsub.s32 0, %v2441
    %v2443 = vrot.slane %v2438, %v2442
    %v2444 = vlaneseq
    %v2445 = vshrl.u32 %v2444, 7
    %v2446 = vsub.s32 1, %v2445
    %v2447 = vrot.slane %v2438, %v2446
    %v2448 = vlaneseq
    %v2449 = vshrl.u32 %v2448, 7
    %v2450 = vsub.s32 2, %v2449
    %v2451 = vrot.slane %v2438, %v2450
    %v2452 = vlaneseq
    %v2453 = vshrl.u32 %v2452, 7
    %v2454 = vsub.s32 3, %v2453
    %v2455 = vrot.slane %v2438, %v2454
    %v2456 = vlaneseq
    %v2457 = vshrl.u32 %v2456, 7
    %v2458 = vsub.s32 4, %v2457
    %v2459 = vrot.slane %v2438, %v2458
    %v2460 = vlaneseq
    %v2461 = vshrl.u32 %v2460, 7
    %v2462 = vsub.s32 5, %v2461
    %v2463 = vrot.slane %v2438, %v2462
    %v2464 = vlaneseq
    %v2465 = vshrl.u32 %v2464, 7
    %v2466 = vsub.s32 6, %v2465
    %v2467 = vrot.slane %v2438, %v2466
    %v2468 = vlaneseq
    %v2469 = vshrl.u32 %v2468, 7
    %v2470 = vsub.s32 7, %v2469
    %v2471 = vrot.slane %v2438, %v2470
    %v2480 = vadd.f32 %v2430, %v2443
    %v2481 = vadd.f32 %v2431, %v2447
    %v2482 = vadd.f32 %v2432, %v2451
    %v2483 = vadd.f32 %v2433, %v2455
    %v2484 = vadd.f32 %v2434, %v2459
    %v2485 = vadd.f32 %v2435, %v2463
    %v2486 = vadd.f32 %v2436, %v2467
    %v2487 = vadd.f32 %v2437, %v2471
    %v2488 = vmax.f32 %v2480, 0.0
    %v2489 = vmax.f32 %v2481, 0.0
    %v2490 = vmax.f32 %v2482, 0.0
    %v2491 = vmax.f32 %v2483, 0.0
    %v2492 = vmax.f32 %v2484, 0.0
    %v2493 = vmax.f32 %v2485, 0.0
    %v2494 = vmax.f32 %v2486, 0.0
    %v2495 = vmax.f32 %v2487, 0.0
    %v2496 = vpack.c.bf16 %v2488, %v2488
    %v2497 = vpack.c.bf16 %v2489, %v2489
    %v2498 = vpack.c.bf16 %v2490, %v2490
    %v2499 = vpack.c.bf16 %v2491, %v2491
    %v2500 = vpack.c.bf16 %v2492, %v2492
    %v2501 = vpack.c.bf16 %v2493, %v2493
    %v2502 = vpack.c.bf16 %v2494, %v2494
    %v2503 = vpack.c.bf16 %v2495, %v2495
    %v2504 = vld [vmem:[#allocation10] sm:$0xff]
    %v2505 = vld [vmem:[#allocation10 + $0x8] sm:$0xff]
    %v2506 = vld [vmem:[#allocation10 + $0x10] sm:$0xff]
    %v2507 = vld [vmem:[#allocation10 + $0x18] sm:$0xff]
    %v2508 = vld [vmem:[#allocation10 + $0x20] sm:$0xff]
    %v2509 = vld [vmem:[#allocation10 + $0x28] sm:$0xff]
    %v2510 = vld [vmem:[#allocation10 + $0x30] sm:$0xff]
    %v2511 = vld [vmem:[#allocation10 + $0x38] sm:$0xff]
    %v2512 = vld [vmem:[#allocation10 + $0x40] sm:$0xff]
    %v2513 = vld [vmem:[#allocation10 + $0x48] sm:$0xff]
    %v2514 = vld [vmem:[#allocation10 + $0x50] sm:$0xff]
    %v2515 = vld [vmem:[#allocation10 + $0x58] sm:$0xff]
    %v2516 = vld [vmem:[#allocation10 + $0x60] sm:$0xff]
    %v2517 = vld [vmem:[#allocation10 + $0x68] sm:$0xff]
    %v2518 = vld [vmem:[#allocation10 + $0x70] sm:$0xff]
    %v2519 = vld [vmem:[#allocation10 + $0x78] sm:$0xff]
    %v2520 = vld [vmem:[#allocation10 + $0x80] sm:$0xff]
    %v2521 = vld [vmem:[#allocation10 + $0x88] sm:$0xff]
    %v2522 = vld [vmem:[#allocation10 + $0x90] sm:$0xff]
    %v2523 = vld [vmem:[#allocation10 + $0x98] sm:$0xff]
    %v2524 = vld [vmem:[#allocation10 + $0xa0] sm:$0xff]
    %v2525 = vld [vmem:[#allocation10 + $0xa8] sm:$0xff]
    %v2526 = vld [vmem:[#allocation10 + $0xb0] sm:$0xff]
    %v2527 = vld [vmem:[#allocation10 + $0xb8] sm:$0xff]
    %v2528 = vld [vmem:[#allocation10 + $0xc0] sm:$0xff]
    %v2529 = vld [vmem:[#allocation10 + $0xc8] sm:$0xff]
    %v2530 = vld [vmem:[#allocation10 + $0xd0] sm:$0xff]
    %v2531 = vld [vmem:[#allocation10 + $0xd8] sm:$0xff]
    %v2532 = vld [vmem:[#allocation10 + $0xe0] sm:$0xff]
    %v2533 = vld [vmem:[#allocation10 + $0xe8] sm:$0xff]
    %v2534 = vld [vmem:[#allocation10 + $0xf0] sm:$0xff]
    %v2535 = vld [vmem:[#allocation10 + $0xf8] sm:$0xff]
    %v2536 = vld [vmem:[#allocation10 + $0x100] sm:$0xff]
    %v2537 = vld [vmem:[#allocation10 + $0x108] sm:$0xff]
    %v2538 = vld [vmem:[#allocation10 + $0x110] sm:$0xff]
    %v2539 = vld [vmem:[#allocation10 + $0x118] sm:$0xff]
    %v2540 = vld [vmem:[#allocation10 + $0x120] sm:$0xff]
    %v2541 = vld [vmem:[#allocation10 + $0x128] sm:$0xff]
    %v2542 = vld [vmem:[#allocation10 + $0x130] sm:$0xff]
    %v2543 = vld [vmem:[#allocation10 + $0x138] sm:$0xff]
    %v2544 = vld [vmem:[#allocation10 + $0x140] sm:$0xff]
    %v2545 = vld [vmem:[#allocation10 + $0x148] sm:$0xff]
    %v2546 = vld [vmem:[#allocation10 + $0x150] sm:$0xff]
    %v2547 = vld [vmem:[#allocation10 + $0x158] sm:$0xff]
    %v2548 = vld [vmem:[#allocation10 + $0x160] sm:$0xff]
    %v2549 = vld [vmem:[#allocation10 + $0x168] sm:$0xff]
    %v2550 = vld [vmem:[#allocation10 + $0x170] sm:$0xff]
    %v2551 = vld [vmem:[#allocation10 + $0x178] sm:$0xff]
    %v2552 = vld [vmem:[#allocation10 + $0x180] sm:$0xff]
    %v2553 = vld [vmem:[#allocation10 + $0x188] sm:$0xff]
    %v2554 = vld [vmem:[#allocation10 + $0x190] sm:$0xff]
    %v2555 = vld [vmem:[#allocation10 + $0x198] sm:$0xff]
    %v2556 = vld [vmem:[#allocation10 + $0x1a0] sm:$0xff]
    %v2557 = vld [vmem:[#allocation10 + $0x1a8] sm:$0xff]
    %v2558 = vld [vmem:[#allocation10 + $0x1b0] sm:$0xff]
    %v2559 = vld [vmem:[#allocation10 + $0x1b8] sm:$0xff]
    %v2560 = vld [vmem:[#allocation10 + $0x1c0] sm:$0xff]
    %v2561 = vld [vmem:[#allocation10 + $0x1c8] sm:$0xff]
    %v2562 = vld [vmem:[#allocation10 + $0x1d0] sm:$0xff]
    %v2563 = vld [vmem:[#allocation10 + $0x1d8] sm:$0xff]
    %v2564 = vld [vmem:[#allocation10 + $0x1e0] sm:$0xff]
    %v2565 = vld [vmem:[#allocation10 + $0x1e8] sm:$0xff]
    %v2566 = vld [vmem:[#allocation10 + $0x1f0] sm:$0xff]
    %v2567 = vld [vmem:[#allocation10 + $0x1f8] sm:$0xff]
    %v2568 = vld [vmem:[#allocation10 + $0x200] sm:$0xff]
    %v2569 = vld [vmem:[#allocation10 + $0x208] sm:$0xff]
    %v2570 = vld [vmem:[#allocation10 + $0x210] sm:$0xff]
    %v2571 = vld [vmem:[#allocation10 + $0x218] sm:$0xff]
    %v2572 = vld [vmem:[#allocation10 + $0x220] sm:$0xff]
    %v2573 = vld [vmem:[#allocation10 + $0x228] sm:$0xff]
    %v2574 = vld [vmem:[#allocation10 + $0x230] sm:$0xff]
    %v2575 = vld [vmem:[#allocation10 + $0x238] sm:$0xff]
    %v2576 = vld [vmem:[#allocation10 + $0x240] sm:$0xff]
    %v2577 = vld [vmem:[#allocation10 + $0x248] sm:$0xff]
    %v2578 = vld [vmem:[#allocation10 + $0x250] sm:$0xff]
    %v2579 = vld [vmem:[#allocation10 + $0x258] sm:$0xff]
    %v2580 = vld [vmem:[#allocation10 + $0x260] sm:$0xff]
    %v2581 = vld [vmem:[#allocation10 + $0x268] sm:$0xff]
    %v2582 = vld [vmem:[#allocation10 + $0x270] sm:$0xff]
    %v2583 = vld [vmem:[#allocation10 + $0x278] sm:$0xff]
    %v2584 = vld [vmem:[#allocation10 + $0x280] sm:$0xff]
    %v2585 = vld [vmem:[#allocation10 + $0x288] sm:$0xff]
    %v2586 = vld [vmem:[#allocation10 + $0x290] sm:$0xff]
    %v2587 = vld [vmem:[#allocation10 + $0x298] sm:$0xff]
    %v2588 = vld [vmem:[#allocation10 + $0x2a0] sm:$0xff]
    %v2589 = vld [vmem:[#allocation10 + $0x2a8] sm:$0xff]
    %v2590 = vld [vmem:[#allocation10 + $0x2b0] sm:$0xff]
    %v2591 = vld [vmem:[#allocation10 + $0x2b8] sm:$0xff]
    %v2592 = vld [vmem:[#allocation10 + $0x2c0] sm:$0xff]
    %v2593 = vld [vmem:[#allocation10 + $0x2c8] sm:$0xff]
    %v2594 = vld [vmem:[#allocation10 + $0x2d0] sm:$0xff]
    %v2595 = vld [vmem:[#allocation10 + $0x2d8] sm:$0xff]
    %v2596 = vld [vmem:[#allocation10 + $0x2e0] sm:$0xff]
    %v2597 = vld [vmem:[#allocation10 + $0x2e8] sm:$0xff]
    %v2598 = vld [vmem:[#allocation10 + $0x2f0] sm:$0xff]
    %v2599 = vld [vmem:[#allocation10 + $0x2f8] sm:$0xff]
    %v2600 = vld [vmem:[#allocation10 + $0x300] sm:$0xff]
    %v2601 = vld [vmem:[#allocation10 + $0x308] sm:$0xff]
    %v2602 = vld [vmem:[#allocation10 + $0x310] sm:$0xff]
    %v2603 = vld [vmem:[#allocation10 + $0x318] sm:$0xff]
    %v2604 = vld [vmem:[#allocation10 + $0x320] sm:$0xff]
    %v2605 = vld [vmem:[#allocation10 + $0x328] sm:$0xff]
    %v2606 = vld [vmem:[#allocation10 + $0x330] sm:$0xff]
    %v2607 = vld [vmem:[#allocation10 + $0x338] sm:$0xff]
    %v2608 = vld [vmem:[#allocation10 + $0x340] sm:$0xff]
    %v2609 = vld [vmem:[#allocation10 + $0x348] sm:$0xff]
    %v2610 = vld [vmem:[#allocation10 + $0x350] sm:$0xff]
    %v2611 = vld [vmem:[#allocation10 + $0x358] sm:$0xff]
    %v2612 = vld [vmem:[#allocation10 + $0x360] sm:$0xff]
    %v2613 = vld [vmem:[#allocation10 + $0x368] sm:$0xff]
    %v2614 = vld [vmem:[#allocation10 + $0x370] sm:$0xff]
    %v2615 = vld [vmem:[#allocation10 + $0x378] sm:$0xff]
    %v2616 = vld [vmem:[#allocation10 + $0x380] sm:$0xff]
    %v2617 = vld [vmem:[#allocation10 + $0x388] sm:$0xff]
    %v2618 = vld [vmem:[#allocation10 + $0x390] sm:$0xff]
    %v2619 = vld [vmem:[#allocation10 + $0x398] sm:$0xff]
    %v2620 = vld [vmem:[#allocation10 + $0x3a0] sm:$0xff]
    %v2621 = vld [vmem:[#allocation10 + $0x3a8] sm:$0xff]
    %v2622 = vld [vmem:[#allocation10 + $0x3b0] sm:$0xff]
    %v2623 = vld [vmem:[#allocation10 + $0x3b8] sm:$0xff]
    %v2624 = vld [vmem:[#allocation10 + $0x3c0] sm:$0xff]
    %v2625 = vld [vmem:[#allocation10 + $0x3c8] sm:$0xff]
    %v2626 = vld [vmem:[#allocation10 + $0x3d0] sm:$0xff]
    %v2627 = vld [vmem:[#allocation10 + $0x3d8] sm:$0xff]
    %v2628 = vld [vmem:[#allocation10 + $0x3e0] sm:$0xff]
    %v2629 = vld [vmem:[#allocation10 + $0x3e8] sm:$0xff]
    %v2630 = vld [vmem:[#allocation10 + $0x3f0] sm:$0xff]
    %v2631 = vld [vmem:[#allocation10 + $0x3f8] sm:$0xff]
    %v2632 = vunpack.c.l.s8.bf16 %v2504
    %v2633 = vunpack.c.l.s8.bf16 %v2505
    %v2634 = vunpack.c.l.s8.bf16 %v2506
    %v2635 = vunpack.c.l.s8.bf16 %v2507
    %v2636 = vunpack.c.h.s8.bf16 %v2504
    %v2637 = vunpack.c.h.s8.bf16 %v2505
    %v2638 = vunpack.c.h.s8.bf16 %v2506
    %v2639 = vunpack.c.h.s8.bf16 %v2507
    %v2640 = vunpack.c.l.s8.bf16 %v2508
    %v2641 = vunpack.c.l.s8.bf16 %v2509
    %v2642 = vunpack.c.l.s8.bf16 %v2510
    %v2643 = vunpack.c.l.s8.bf16 %v2511
    %v2644 = vunpack.c.h.s8.bf16 %v2508
    %v2645 = vunpack.c.h.s8.bf16 %v2509
    %v2646 = vunpack.c.h.s8.bf16 %v2510
    %v2647 = vunpack.c.h.s8.bf16 %v2511
    %v2648 = vunpack.c.l.s8.bf16 %v2512
    %v2649 = vunpack.c.l.s8.bf16 %v2513
    %v2650 = vunpack.c.l.s8.bf16 %v2514
    %v2651 = vunpack.c.l.s8.bf16 %v2515
    %v2652 = vunpack.c.h.s8.bf16 %v2512
    %v2653 = vunpack.c.h.s8.bf16 %v2513
    %v2654 = vunpack.c.h.s8.bf16 %v2514
    %v2655 = vunpack.c.h.s8.bf16 %v2515
    %v2656 = vunpack.c.l.s8.bf16 %v2516
    %v2657 = vunpack.c.l.s8.bf16 %v2517
    %v2658 = vunpack.c.l.s8.bf16 %v2518
    %v2659 = vunpack.c.l.s8.bf16 %v2519
    %v2660 = vunpack.c.h.s8.bf16 %v2516
    %v2661 = vunpack.c.h.s8.bf16 %v2517
    %v2662 = vunpack.c.h.s8.bf16 %v2518
    %v2663 = vunpack.c.h.s8.bf16 %v2519
    %v2664 = vunpack.c.l.s8.bf16 %v2520
    %v2665 = vunpack.c.l.s8.bf16 %v2521
    %v2666 = vunpack.c.l.s8.bf16 %v2522
    %v2667 = vunpack.c.l.s8.bf16 %v2523
    %v2668 = vunpack.c.h.s8.bf16 %v2520
    %v2669 = vunpack.c.h.s8.bf16 %v2521
    %v2670 = vunpack.c.h.s8.bf16 %v2522
    %v2671 = vunpack.c.h.s8.bf16 %v2523
    %v2672 = vunpack.c.l.s8.bf16 %v2524
    %v2673 = vunpack.c.l.s8.bf16 %v2525
    %v2674 = vunpack.c.l.s8.bf16 %v2526
    %v2675 = vunpack.c.l.s8.bf16 %v2527
    %v2676 = vunpack.c.h.s8.bf16 %v2524
    %v2677 = vunpack.c.h.s8.bf16 %v2525
    %v2678 = vunpack.c.h.s8.bf16 %v2526
    %v2679 = vunpack.c.h.s8.bf16 %v2527
    %v2680 = vunpack.c.l.s8.bf16 %v2528
    %v2681 = vunpack.c.l.s8.bf16 %v2529
    %v2682 = vunpack.c.l.s8.bf16 %v2530
    %v2683 = vunpack.c.l.s8.bf16 %v2531
    %v2684 = vunpack.c.h.s8.bf16 %v2528
    %v2685 = vunpack.c.h.s8.bf16 %v2529
    %v2686 = vunpack.c.h.s8.bf16 %v2530
    %v2687 = vunpack.c.h.s8.bf16 %v2531
    %v2688 = vunpack.c.l.s8.bf16 %v2532
    %v2689 = vunpack.c.l.s8.bf16 %v2533
    %v2690 = vunpack.c.l.s8.bf16 %v2534
    %v2691 = vunpack.c.l.s8.bf16 %v2535
    %v2692 = vunpack.c.h.s8.bf16 %v2532
    %v2693 = vunpack.c.h.s8.bf16 %v2533
    %v2694 = vunpack.c.h.s8.bf16 %v2534
    %v2695 = vunpack.c.h.s8.bf16 %v2535
    %v2696 = vunpack.c.l.s8.bf16 %v2536
    %v2697 = vunpack.c.l.s8.bf16 %v2537
    %v2698 = vunpack.c.l.s8.bf16 %v2538
    %v2699 = vunpack.c.l.s8.bf16 %v2539
    %v2700 = vunpack.c.h.s8.bf16 %v2536
    %v2701 = vunpack.c.h.s8.bf16 %v2537
    %v2702 = vunpack.c.h.s8.bf16 %v2538
    %v2703 = vunpack.c.h.s8.bf16 %v2539
    %v2704 = vunpack.c.l.s8.bf16 %v2540
    %v2705 = vunpack.c.l.s8.bf16 %v2541
    %v2706 = vunpack.c.l.s8.bf16 %v2542
    %v2707 = vunpack.c.l.s8.bf16 %v2543
    %v2708 = vunpack.c.h.s8.bf16 %v2540
    %v2709 = vunpack.c.h.s8.bf16 %v2541
    %v2710 = vunpack.c.h.s8.bf16 %v2542
    %v2711 = vunpack.c.h.s8.bf16 %v2543
    %v2712 = vunpack.c.l.s8.bf16 %v2544
    %v2713 = vunpack.c.l.s8.bf16 %v2545
    %v2714 = vunpack.c.l.s8.bf16 %v2546
    %v2715 = vunpack.c.l.s8.bf16 %v2547
    %v2716 = vunpack.c.h.s8.bf16 %v2544
    %v2717 = vunpack.c.h.s8.bf16 %v2545
    %v2718 = vunpack.c.h.s8.bf16 %v2546
    %v2719 = vunpack.c.h.s8.bf16 %v2547
    %v2720 = vunpack.c.l.s8.bf16 %v2548
    %v2721 = vunpack.c.l.s8.bf16 %v2549
    %v2722 = vunpack.c.l.s8.bf16 %v2550
    %v2723 = vunpack.c.l.s8.bf16 %v2551
    %v2724 = vunpack.c.h.s8.bf16 %v2548
    %v2725 = vunpack.c.h.s8.bf16 %v2549
    %v2726 = vunpack.c.h.s8.bf16 %v2550
    %v2727 = vunpack.c.h.s8.bf16 %v2551
    %v2728 = vunpack.c.l.s8.bf16 %v2552
    %v2729 = vunpack.c.l.s8.bf16 %v2553
    %v2730 = vunpack.c.l.s8.bf16 %v2554
    %v2731 = vunpack.c.l.s8.bf16 %v2555
    %v2732 = vunpack.c.h.s8.bf16 %v2552
    %v2733 = vunpack.c.h.s8.bf16 %v2553
    %v2734 = vunpack.c.h.s8.bf16 %v2554
    %v2735 = vunpack.c.h.s8.bf16 %v2555
    %v2736 = vunpack.c.l.s8.bf16 %v2556
    %v2737 = vunpack.c.l.s8.bf16 %v2557
    %v2738 = vunpack.c.l.s8.bf16 %v2558
    %v2739 = vunpack.c.l.s8.bf16 %v2559
    %v2740 = vunpack.c.h.s8.bf16 %v2556
    %v2741 = vunpack.c.h.s8.bf16 %v2557
    %v2742 = vunpack.c.h.s8.bf16 %v2558
    %v2743 = vunpack.c.h.s8.bf16 %v2559
    %v2744 = vunpack.c.l.s8.bf16 %v2560
    %v2745 = vunpack.c.l.s8.bf16 %v2561
    %v2746 = vunpack.c.l.s8.bf16 %v2562
    %v2747 = vunpack.c.l.s8.bf16 %v2563
    %v2748 = vunpack.c.h.s8.bf16 %v2560
    %v2749 = vunpack.c.h.s8.bf16 %v2561
    %v2750 = vunpack.c.h.s8.bf16 %v2562
    %v2751 = vunpack.c.h.s8.bf16 %v2563
    %v2752 = vunpack.c.l.s8.bf16 %v2564
    %v2753 = vunpack.c.l.s8.bf16 %v2565
    %v2754 = vunpack.c.l.s8.bf16 %v2566
    %v2755 = vunpack.c.l.s8.bf16 %v2567
    %v2756 = vunpack.c.h.s8.bf16 %v2564
    %v2757 = vunpack.c.h.s8.bf16 %v2565
    %v2758 = vunpack.c.h.s8.bf16 %v2566
    %v2759 = vunpack.c.h.s8.bf16 %v2567
    %v2760 = vunpack.c.l.s8.bf16 %v2568
    %v2761 = vunpack.c.l.s8.bf16 %v2569
    %v2762 = vunpack.c.l.s8.bf16 %v2570
    %v2763 = vunpack.c.l.s8.bf16 %v2571
    %v2764 = vunpack.c.h.s8.bf16 %v2568
    %v2765 = vunpack.c.h.s8.bf16 %v2569
    %v2766 = vunpack.c.h.s8.bf16 %v2570
    %v2767 = vunpack.c.h.s8.bf16 %v2571
    %v2768 = vunpack.c.l.s8.bf16 %v2572
    %v2769 = vunpack.c.l.s8.bf16 %v2573
    %v2770 = vunpack.c.l.s8.bf16 %v2574
    %v2771 = vunpack.c.l.s8.bf16 %v2575
    %v2772 = vunpack.c.h.s8.bf16 %v2572
    %v2773 = vunpack.c.h.s8.bf16 %v2573
    %v2774 = vunpack.c.h.s8.bf16 %v2574
    %v2775 = vunpack.c.h.s8.bf16 %v2575
    %v2776 = vunpack.c.l.s8.bf16 %v2576
    %v2777 = vunpack.c.l.s8.bf16 %v2577
    %v2778 = vunpack.c.l.s8.bf16 %v2578
    %v2779 = vunpack.c.l.s8.bf16 %v2579
    %v2780 = vunpack.c.h.s8.bf16 %v2576
    %v2781 = vunpack.c.h.s8.bf16 %v2577
    %v2782 = vunpack.c.h.s8.bf16 %v2578
    %v2783 = vunpack.c.h.s8.bf16 %v2579
    %v2784 = vunpack.c.l.s8.bf16 %v2580
    %v2785 = vunpack.c.l.s8.bf16 %v2581
    %v2786 = vunpack.c.l.s8.bf16 %v2582
    %v2787 = vunpack.c.l.s8.bf16 %v2583
    %v2788 = vunpack.c.h.s8.bf16 %v2580
    %v2789 = vunpack.c.h.s8.bf16 %v2581
    %v2790 = vunpack.c.h.s8.bf16 %v2582
    %v2791 = vunpack.c.h.s8.bf16 %v2583
    %v2792 = vunpack.c.l.s8.bf16 %v2584
    %v2793 = vunpack.c.l.s8.bf16 %v2585
    %v2794 = vunpack.c.l.s8.bf16 %v2586
    %v2795 = vunpack.c.l.s8.bf16 %v2587
    %v2796 = vunpack.c.h.s8.bf16 %v2584
    %v2797 = vunpack.c.h.s8.bf16 %v2585
    %v2798 = vunpack.c.h.s8.bf16 %v2586
    %v2799 = vunpack.c.h.s8.bf16 %v2587
    %v2800 = vunpack.c.l.s8.bf16 %v2588
    %v2801 = vunpack.c.l.s8.bf16 %v2589
    %v2802 = vunpack.c.l.s8.bf16 %v2590
    %v2803 = vunpack.c.l.s8.bf16 %v2591
    %v2804 = vunpack.c.h.s8.bf16 %v2588
    %v2805 = vunpack.c.h.s8.bf16 %v2589
    %v2806 = vunpack.c.h.s8.bf16 %v2590
    %v2807 = vunpack.c.h.s8.bf16 %v2591
    %v2808 = vunpack.c.l.s8.bf16 %v2592
    %v2809 = vunpack.c.l.s8.bf16 %v2593
    %v2810 = vunpack.c.l.s8.bf16 %v2594
    %v2811 = vunpack.c.l.s8.bf16 %v2595
    %v2812 = vunpack.c.h.s8.bf16 %v2592
    %v2813 = vunpack.c.h.s8.bf16 %v2593
    %v2814 = vunpack.c.h.s8.bf16 %v2594
    %v2815 = vunpack.c.h.s8.bf16 %v2595
    %v2816 = vunpack.c.l.s8.bf16 %v2596
    %v2817 = vunpack.c.l.s8.bf16 %v2597
    %v2818 = vunpack.c.l.s8.bf16 %v2598
    %v2819 = vunpack.c.l.s8.bf16 %v2599
    %v2820 = vunpack.c.h.s8.bf16 %v2596
    %v2821 = vunpack.c.h.s8.bf16 %v2597
    %v2822 = vunpack.c.h.s8.bf16 %v2598
    %v2823 = vunpack.c.h.s8.bf16 %v2599
    %v2824 = vunpack.c.l.s8.bf16 %v2600
    %v2825 = vunpack.c.l.s8.bf16 %v2601
    %v2826 = vunpack.c.l.s8.bf16 %v2602
    %v2827 = vunpack.c.l.s8.bf16 %v2603
    %v2828 = vunpack.c.h.s8.bf16 %v2600
    %v2829 = vunpack.c.h.s8.bf16 %v2601
    %v2830 = vunpack.c.h.s8.bf16 %v2602
    %v2831 = vunpack.c.h.s8.bf16 %v2603
    %v2832 = vunpack.c.l.s8.bf16 %v2604
    %v2833 = vunpack.c.l.s8.bf16 %v2605
    %v2834 = vunpack.c.l.s8.bf16 %v2606
    %v2835 = vunpack.c.l.s8.bf16 %v2607
    %v2836 = vunpack.c.h.s8.bf16 %v2604
    %v2837 = vunpack.c.h.s8.bf16 %v2605
    %v2838 = vunpack.c.h.s8.bf16 %v2606
    %v2839 = vunpack.c.h.s8.bf16 %v2607
    %v2840 = vunpack.c.l.s8.bf16 %v2608
    %v2841 = vunpack.c.l.s8.bf16 %v2609
    %v2842 = vunpack.c.l.s8.bf16 %v2610
    %v2843 = vunpack.c.l.s8.bf16 %v2611
    %v2844 = vunpack.c.h.s8.bf16 %v2608
    %v2845 = vunpack.c.h.s8.bf16 %v2609
    %v2846 = vunpack.c.h.s8.bf16 %v2610
    %v2847 = vunpack.c.h.s8.bf16 %v2611
    %v2848 = vunpack.c.l.s8.bf16 %v2612
    %v2849 = vunpack.c.l.s8.bf16 %v2613
    %v2850 = vunpack.c.l.s8.bf16 %v2614
    %v2851 = vunpack.c.l.s8.bf16 %v2615
    %v2852 = vunpack.c.h.s8.bf16 %v2612
    %v2853 = vunpack.c.h.s8.bf16 %v2613
    %v2854 = vunpack.c.h.s8.bf16 %v2614
    %v2855 = vunpack.c.h.s8.bf16 %v2615
    %v2856 = vunpack.c.l.s8.bf16 %v2616
    %v2857 = vunpack.c.l.s8.bf16 %v2617
    %v2858 = vunpack.c.l.s8.bf16 %v2618
    %v2859 = vunpack.c.l.s8.bf16 %v2619
    %v2860 = vunpack.c.h.s8.bf16 %v2616
    %v2861 = vunpack.c.h.s8.bf16 %v2617
    %v2862 = vunpack.c.h.s8.bf16 %v2618
    %v2863 = vunpack.c.h.s8.bf16 %v2619
    %v2864 = vunpack.c.l.s8.bf16 %v2620
    %v2865 = vunpack.c.l.s8.bf16 %v2621
    %v2866 = vunpack.c.l.s8.bf16 %v2622
    %v2867 = vunpack.c.l.s8.bf16 %v2623
    %v2868 = vunpack.c.h.s8.bf16 %v2620
    %v2869 = vunpack.c.h.s8.bf16 %v2621
    %v2870 = vunpack.c.h.s8.bf16 %v2622
    %v2871 = vunpack.c.h.s8.bf16 %v2623
    %v2872 = vunpack.c.l.s8.bf16 %v2624
    %v2873 = vunpack.c.l.s8.bf16 %v2625
    %v2874 = vunpack.c.l.s8.bf16 %v2626
    %v2875 = vunpack.c.l.s8.bf16 %v2627
    %v2876 = vunpack.c.h.s8.bf16 %v2624
    %v2877 = vunpack.c.h.s8.bf16 %v2625
    %v2878 = vunpack.c.h.s8.bf16 %v2626
    %v2879 = vunpack.c.h.s8.bf16 %v2627
    %v2880 = vunpack.c.l.s8.bf16 %v2628
    %v2881 = vunpack.c.l.s8.bf16 %v2629
    %v2882 = vunpack.c.l.s8.bf16 %v2630
    %v2883 = vunpack.c.l.s8.bf16 %v2631
    %v2884 = vunpack.c.h.s8.bf16 %v2628
    %v2885 = vunpack.c.h.s8.bf16 %v2629
    %v2886 = vunpack.c.h.s8.bf16 %v2630
    %v2887 = vunpack.c.h.s8.bf16 %v2631
    %2888 = vmatprep.subr.bf16.mxu0 %v2661
    %2889 = vmatpush1.bf16.msra.mxu0 %v2660
    %2890 = vmatprep.subr.bf16.mxu0 %v2657
    %2891 = vmatpush1.bf16.msra.mxu0 %v2656
    %2892 = vmatprep.subr.bf16.mxu0 %v2653
    %2893 = vmatpush1.bf16.msra.mxu0 %v2652
    %2894 = vmatprep.subr.bf16.mxu0 %v2649
    %2895 = vmatpush1.bf16.msra.mxu0 %v2648
    %2896 = vmatprep.subr.bf16.mxu0 %v2645
    %2897 = vmatpush1.bf16.msra.mxu0 %v2644
    %2898 = vmatprep.subr.bf16.mxu0 %v2641
    %2899 = vmatpush1.bf16.msra.mxu0 %v2640
    %2900 = vmatprep.subr.bf16.mxu0 %v2637
    %2901 = vmatpush1.bf16.msra.mxu0 %v2636
    %2902 = vmatprep.subr.bf16.mxu0 %v2633
    %2903 = vmatpush1.bf16.msra.mxu0 %v2632
    %2904 = vmatprep.subr.bf16.mxu0 %v2693
    %2905 = vmatpush2.bf16.msra.mxu0 %v2692
    %2906 = vmatprep.subr.bf16.mxu0 %v2689
    %2907 = vmatpush2.bf16.msra.mxu0 %v2688
    %2908 = vmatprep.subr.bf16.mxu0 %v2685
    %2909 = vmatpush2.bf16.msra.mxu0 %v2684
    %2910 = vmatprep.subr.bf16.mxu0 %v2681
    %2911 = vmatpush2.bf16.msra.mxu0 %v2680
    %2912 = vmatprep.subr.bf16.mxu0 %v2677
    %2913 = vmatpush2.bf16.msra.mxu0 %v2676
    %2914 = vmatprep.subr.bf16.mxu0 %v2673
    %2915 = vmatpush2.bf16.msra.mxu0 %v2672
    %2916 = vmatprep.subr.bf16.mxu0 %v2669
    %2917 = vmatpush2.bf16.msra.mxu0 %v2668
    %2918 = vmatprep.subr.bf16.mxu0 %v2665
    %2919 = vmatpush2.bf16.msra.mxu0 %v2664
    %2920 = vmatprep.mubr.bf16.mxu0 %v2497
    %2921 = vmatmul.mubr.bf16.gmra.mxu0 %v2496
    %v2922 = vpop.f32.mrf.mxu0
    %v2923 = vadd.f32 0.0, %v2922
    %v2924 = vpop.f32.mrf.mxu0
    %v2925 = vadd.f32 0.0, %v2924
    %v2926 = vpop.f32.mrf.mxu0
    %v2927 = vpop.f32.mrf.mxu0
    %2928 = vdwg.mxu0
    %2929 = vmatprep.subr.bf16.mxu0 %v2725
    %2930 = vmatpush1.bf16.msra.mxu0 %v2724
    %2931 = vmatprep.subr.bf16.mxu0 %v2721
    %2932 = vmatpush1.bf16.msra.mxu0 %v2720
    %2933 = vmatprep.subr.bf16.mxu0 %v2717
    %2934 = vmatpush1.bf16.msra.mxu0 %v2716
    %2935 = vmatprep.subr.bf16.mxu0 %v2713
    %2936 = vmatpush1.bf16.msra.mxu0 %v2712
    %2937 = vmatprep.subr.bf16.mxu0 %v2709
    %2938 = vmatpush1.bf16.msra.mxu0 %v2708
    %2939 = vmatprep.subr.bf16.mxu0 %v2705
    %2940 = vmatpush1.bf16.msra.mxu0 %v2704
    %2941 = vmatprep.subr.bf16.mxu0 %v2701
    %2942 = vmatpush1.bf16.msra.mxu0 %v2700
    %2943 = vmatprep.subr.bf16.mxu0 %v2697
    %2944 = vmatpush1.bf16.msra.mxu0 %v2696
    %2945 = vmatprep.subr.bf16.mxu0 %v2757
    %2946 = vmatpush2.bf16.msra.mxu0 %v2756
    %2947 = vmatprep.subr.bf16.mxu0 %v2753
    %2948 = vmatpush2.bf16.msra.mxu0 %v2752
    %2949 = vmatprep.subr.bf16.mxu0 %v2749
    %2950 = vmatpush2.bf16.msra.mxu0 %v2748
    %2951 = vmatprep.subr.bf16.mxu0 %v2745
    %2952 = vmatpush2.bf16.msra.mxu0 %v2744
    %2953 = vmatprep.subr.bf16.mxu0 %v2741
    %2954 = vmatpush2.bf16.msra.mxu0 %v2740
    %2955 = vmatprep.subr.bf16.mxu0 %v2737
    %2956 = vmatpush2.bf16.msra.mxu0 %v2736
    %2957 = vmatprep.subr.bf16.mxu0 %v2733
    %2958 = vmatpush2.bf16.msra.mxu0 %v2732
    %2959 = vmatprep.subr.bf16.mxu0 %v2729
    %2960 = vmatpush2.bf16.msra.mxu0 %v2728
    %2961 = vmatprep.mubr.bf16.mxu0 %v2499
    %2962 = vmatmul.mubr.bf16.gmra.mxu0 %v2498
    %v2963 = vpop.f32.mrf.mxu0
    %v2964 = vadd.f32 %v2923, %v2963
    %v2965 = vpop.f32.mrf.mxu0
    %v2966 = vadd.f32 %v2925, %v2965
    %v2967 = vpop.f32.mrf.mxu0
    %v2968 = vpop.f32.mrf.mxu0
    %2969 = vdwg.mxu0
    %2970 = vmatprep.subr.bf16.mxu0 %v2789
    %2971 = vmatpush1.bf16.msra.mxu0 %v2788
    %2972 = vmatprep.subr.bf16.mxu0 %v2785
    %2973 = vmatpush1.bf16.msra.mxu0 %v2784
    %2974 = vmatprep.subr.bf16.mxu0 %v2781
    %2975 = vmatpush1.bf16.msra.mxu0 %v2780
    %2976 = vmatprep.subr.bf16.mxu0 %v2777
    %2977 = vmatpush1.bf16.msra.mxu0 %v2776
    %2978 = vmatprep.subr.bf16.mxu0 %v2773
    %2979 = vmatpush1.bf16.msra.mxu0 %v2772
    %2980 = vmatprep.subr.bf16.mxu0 %v2769
    %2981 = vmatpush1.bf16.msra.mxu0 %v2768
    %2982 = vmatprep.subr.bf16.mxu0 %v2765
    %2983 = vmatpush1.bf16.msra.mxu0 %v2764
    %2984 = vmatprep.subr.bf16.mxu0 %v2761
    %2985 = vmatpush1.bf16.msra.mxu0 %v2760
    %2986 = vmatprep.subr.bf16.mxu0 %v2821
    %2987 = vmatpush2.bf16.msra.mxu0 %v2820
    %2988 = vmatprep.subr.bf16.mxu0 %v2817
    %2989 = vmatpush2.bf16.msra.mxu0 %v2816
    %2990 = vmatprep.subr.bf16.mxu0 %v2813
    %2991 = vmatpush2.bf16.msra.mxu0 %v2812
    %2992 = vmatprep.subr.bf16.mxu0 %v2809
    %2993 = vmatpush2.bf16.msra.mxu0 %v2808
    %2994 = vmatprep.subr.bf16.mxu0 %v2805
    %2995 = vmatpush2.bf16.msra.mxu0 %v2804
    %2996 = vmatprep.subr.bf16.mxu0 %v2801
    %2997 = vmatpush2.bf16.msra.mxu0 %v2800
    %2998 = vmatprep.subr.bf16.mxu0 %v2797
    %2999 = vmatpush2.bf16.msra.mxu0 %v2796
    %3000 = vmatprep.subr.bf16.mxu0 %v2793
    %3001 = vmatpush2.bf16.msra.mxu0 %v2792
    %3002 = vmatprep.mubr.bf16.mxu0 %v2501
    %3003 = vmatmul.mubr.bf16.gmra.mxu0 %v2500
    %v3004 = vpop.f32.mrf.mxu0
    %v3005 = vadd.f32 %v2964, %v3004
    %v3006 = vpop.f32.mrf.mxu0
    %v3007 = vadd.f32 %v2966, %v3006
    %v3008 = vpop.f32.mrf.mxu0
    %v3009 = vpop.f32.mrf.mxu0
    %3010 = vdwg.mxu0
    %3011 = vmatprep.subr.bf16.mxu0 %v2853
    %3012 = vmatpush1.bf16.msra.mxu0 %v2852
    %3013 = vmatprep.subr.bf16.mxu0 %v2849
    %3014 = vmatpush1.bf16.msra.mxu0 %v2848
    %3015 = vmatprep.subr.bf16.mxu0 %v2845
    %3016 = vmatpush1.bf16.msra.mxu0 %v2844
    %3017 = vmatprep.subr.bf16.mxu0 %v2841
    %3018 = vmatpush1.bf16.msra.mxu0 %v2840
    %3019 = vmatprep.subr.bf16.mxu0 %v2837
    %3020 = vmatpush1.bf16.msra.mxu0 %v2836
    %3021 = vmatprep.subr.bf16.mxu0 %v2833
    %3022 = vmatpush1.bf16.msra.mxu0 %v2832
    %3023 = vmatprep.subr.bf16.mxu0 %v2829
    %3024 = vmatpush1.bf16.msra.mxu0 %v2828
    %3025 = vmatprep.subr.bf16.mxu0 %v2825
    %3026 = vmatpush1.bf16.msra.mxu0 %v2824
    %3027 = vmatprep.subr.bf16.mxu0 %v2885
    %3028 = vmatpush2.bf16.msra.mxu0 %v2884
    %3029 = vmatprep.subr.bf16.mxu0 %v2881
    %3030 = vmatpush2.bf16.msra.mxu0 %v2880
    %3031 = vmatprep.subr.bf16.mxu0 %v2877
    %3032 = vmatpush2.bf16.msra.mxu0 %v2876
    %3033 = vmatprep.subr.bf16.mxu0 %v2873
    %3034 = vmatpush2.bf16.msra.mxu0 %v2872
    %3035 = vmatprep.subr.bf16.mxu0 %v2869
    %3036 = vmatpush2.bf16.msra.mxu0 %v2868
    %3037 = vmatprep.subr.bf16.mxu0 %v2865
    %3038 = vmatpush2.bf16.msra.mxu0 %v2864
    %3039 = vmatprep.subr.bf16.mxu0 %v2861
    %3040 = vmatpush2.bf16.msra.mxu0 %v2860
    %3041 = vmatprep.subr.bf16.mxu0 %v2857
    %3042 = vmatpush2.bf16.msra.mxu0 %v2856
    %3043 = vmatprep.mubr.bf16.mxu0 %v2503
    %3044 = vmatmul.mubr.bf16.gmra.mxu0 %v2502
    %v3045 = vpop.f32.mrf.mxu0
    %v3046 = vadd.f32 %v3005, %v3045
    %v3047 = vpop.f32.mrf.mxu0
    %v3048 = vadd.f32 %v3007, %v3047
    %v3049 = vpop.f32.mrf.mxu0
    %v3050 = vpop.f32.mrf.mxu0
    %3051 = vdwg.mxu0
    %3052 = vmatprep.subr.bf16.mxu0 %v2663
    %3053 = vmatpush1.bf16.msra.mxu0 %v2662
    %3054 = vmatprep.subr.bf16.mxu0 %v2659
    %3055 = vmatpush1.bf16.msra.mxu0 %v2658
    %3056 = vmatprep.subr.bf16.mxu0 %v2655
    %3057 = vmatpush1.bf16.msra.mxu0 %v2654
    %3058 = vmatprep.subr.bf16.mxu0 %v2651
    %3059 = vmatpush1.bf16.msra.mxu0 %v2650
    %3060 = vmatprep.subr.bf16.mxu0 %v2647
    %3061 = vmatpush1.bf16.msra.mxu0 %v2646
    %3062 = vmatprep.subr.bf16.mxu0 %v2643
    %3063 = vmatpush1.bf16.msra.mxu0 %v2642
    %3064 = vmatprep.subr.bf16.mxu0 %v2639
    %3065 = vmatpush1.bf16.msra.mxu0 %v2638
    %3066 = vmatprep.subr.bf16.mxu0 %v2635
    %3067 = vmatpush1.bf16.msra.mxu0 %v2634
    %3068 = vmatprep.subr.bf16.mxu0 %v2695
    %3069 = vmatpush2.bf16.msra.mxu0 %v2694
    %3070 = vmatprep.subr.bf16.mxu0 %v2691
    %3071 = vmatpush2.bf16.msra.mxu0 %v2690
    %3072 = vmatprep.subr.bf16.mxu0 %v2687
    %3073 = vmatpush2.bf16.msra.mxu0 %v2686
    %3074 = vmatprep.subr.bf16.mxu0 %v2683
    %3075 = vmatpush2.bf16.msra.mxu0 %v2682
    %3076 = vmatprep.subr.bf16.mxu0 %v2679
    %3077 = vmatpush2.bf16.msra.mxu0 %v2678
    %3078 = vmatprep.subr.bf16.mxu0 %v2675
    %3079 = vmatpush2.bf16.msra.mxu0 %v2674
    %3080 = vmatprep.subr.bf16.mxu0 %v2671
    %3081 = vmatpush2.bf16.msra.mxu0 %v2670
    %3082 = vmatprep.subr.bf16.mxu0 %v2667
    %3083 = vmatpush2.bf16.msra.mxu0 %v2666
    %3084 = vmatprep.mubr.bf16.mxu0 %v2497
    %3085 = vmatmul.mubr.bf16.gmra.mxu0 %v2496
    %v3086 = vpop.f32.mrf.mxu0
    %v3087 = vadd.f32 0.0, %v3086
    %v3088 = vpop.f32.mrf.mxu0
    %v3089 = vadd.f32 0.0, %v3088
    %v3090 = vpop.f32.mrf.mxu0
    %v3091 = vpop.f32.mrf.mxu0
    %3092 = vdwg.mxu0
    %3093 = vmatprep.subr.bf16.mxu0 %v2727
    %3094 = vmatpush1.bf16.msra.mxu0 %v2726
    %3095 = vmatprep.subr.bf16.mxu0 %v2723
    %3096 = vmatpush1.bf16.msra.mxu0 %v2722
    %3097 = vmatprep.subr.bf16.mxu0 %v2719
    %3098 = vmatpush1.bf16.msra.mxu0 %v2718
    %3099 = vmatprep.subr.bf16.mxu0 %v2715
    %3100 = vmatpush1.bf16.msra.mxu0 %v2714
    %3101 = vmatprep.subr.bf16.mxu0 %v2711
    %3102 = vmatpush1.bf16.msra.mxu0 %v2710
    %3103 = vmatprep.subr.bf16.mxu0 %v2707
    %3104 = vmatpush1.bf16.msra.mxu0 %v2706
    %3105 = vmatprep.subr.bf16.mxu0 %v2703
    %3106 = vmatpush1.bf16.msra.mxu0 %v2702
    %3107 = vmatprep.subr.bf16.mxu0 %v2699
    %3108 = vmatpush1.bf16.msra.mxu0 %v2698
    %3109 = vmatprep.subr.bf16.mxu0 %v2759
    %3110 = vmatpush2.bf16.msra.mxu0 %v2758
    %3111 = vmatprep.subr.bf16.mxu0 %v2755
    %3112 = vmatpush2.bf16.msra.mxu0 %v2754
    %3113 = vmatprep.subr.bf16.mxu0 %v2751
    %3114 = vmatpush2.bf16.msra.mxu0 %v2750
    %3115 = vmatprep.subr.bf16.mxu0 %v2747
    %3116 = vmatpush2.bf16.msra.mxu0 %v2746
    %3117 = vmatprep.subr.bf16.mxu0 %v2743
    %3118 = vmatpush2.bf16.msra.mxu0 %v2742
    %3119 = vmatprep.subr.bf16.mxu0 %v2739
    %3120 = vmatpush2.bf16.msra.mxu0 %v2738
    %3121 = vmatprep.subr.bf16.mxu0 %v2735
    %3122 = vmatpush2.bf16.msra.mxu0 %v2734
    %3123 = vmatprep.subr.bf16.mxu0 %v2731
    %3124 = vmatpush2.bf16.msra.mxu0 %v2730
    %3125 = vmatprep.mubr.bf16.mxu0 %v2499
    %3126 = vmatmul.mubr.bf16.gmra.mxu0 %v2498
    %v3127 = vpop.f32.mrf.mxu0
    %v3128 = vadd.f32 %v3087, %v3127
    %v3129 = vpop.f32.mrf.mxu0
    %v3130 = vadd.f32 %v3089, %v3129
    %v3131 = vpop.f32.mrf.mxu0
    %v3132 = vpop.f32.mrf.mxu0
    %3133 = vdwg.mxu0
    %3134 = vmatprep.subr.bf16.mxu0 %v2791
    %3135 = vmatpush1.bf16.msra.mxu0 %v2790
    %3136 = vmatprep.subr.bf16.mxu0 %v2787
    %3137 = vmatpush1.bf16.msra.mxu0 %v2786
    %3138 = vmatprep.subr.bf16.mxu0 %v2783
    %3139 = vmatpush1.bf16.msra.mxu0 %v2782
    %3140 = vmatprep.subr.bf16.mxu0 %v2779
    %3141 = vmatpush1.bf16.msra.mxu0 %v2778
    %3142 = vmatprep.subr.bf16.mxu0 %v2775
    %3143 = vmatpush1.bf16.msra.mxu0 %v2774
    %3144 = vmatprep.subr.bf16.mxu0 %v2771
    %3145 = vmatpush1.bf16.msra.mxu0 %v2770
    %3146 = vmatprep.subr.bf16.mxu0 %v2767
    %3147 = vmatpush1.bf16.msra.mxu0 %v2766
    %3148 = vmatprep.subr.bf16.mxu0 %v2763
    %3149 = vmatpush1.bf16.msra.mxu0 %v2762
    %3150 = vmatprep.subr.bf16.mxu0 %v2823
    %3151 = vmatpush2.bf16.msra.mxu0 %v2822
    %3152 = vmatprep.subr.bf16.mxu0 %v2819
    %3153 = vmatpush2.bf16.msra.mxu0 %v2818
    %3154 = vmatprep.subr.bf16.mxu0 %v2815
    %3155 = vmatpush2.bf16.msra.mxu0 %v2814
    %3156 = vmatprep.subr.bf16.mxu0 %v2811
    %3157 = vmatpush2.bf16.msra.mxu0 %v2810
    %3158 = vmatprep.subr.bf16.mxu0 %v2807
    %3159 = vmatpush2.bf16.msra.mxu0 %v2806
    %3160 = vmatprep.subr.bf16.mxu0 %v2803
    %3161 = vmatpush2.bf16.msra.mxu0 %v2802
    %3162 = vmatprep.subr.bf16.mxu0 %v2799
    %3163 = vmatpush2.bf16.msra.mxu0 %v2798
    %3164 = vmatprep.subr.bf16.mxu0 %v2795
    %3165 = vmatpush2.bf16.msra.mxu0 %v2794
    %3166 = vmatprep.mubr.bf16.mxu0 %v2501
    %3167 = vmatmul.mubr.bf16.gmra.mxu0 %v2500
    %v3168 = vpop.f32.mrf.mxu0
    %v3169 = vadd.f32 %v3128, %v3168
    %v3170 = vpop.f32.mrf.mxu0
    %v3171 = vadd.f32 %v3130, %v3170
    %v3172 = vpop.f32.mrf.mxu0
    %v3173 = vpop.f32.mrf.mxu0
    %3174 = vdwg.mxu0
    %3175 = vmatprep.subr.bf16.mxu0 %v2855
    %3176 = vmatpush1.bf16.msra.mxu0 %v2854
    %3177 = vmatprep.subr.bf16.mxu0 %v2851
    %3178 = vmatpush1.bf16.msra.mxu0 %v2850
    %3179 = vmatprep.subr.bf16.mxu0 %v2847
    %3180 = vmatpush1.bf16.msra.mxu0 %v2846
    %3181 = vmatprep.subr.bf16.mxu0 %v2843
    %3182 = vmatpush1.bf16.msra.mxu0 %v2842
    %3183 = vmatprep.subr.bf16.mxu0 %v2839
    %3184 = vmatpush1.bf16.msra.mxu0 %v2838
    %3185 = vmatprep.subr.bf16.mxu0 %v2835
    %3186 = vmatpush1.bf16.msra.mxu0 %v2834
    %3187 = vmatprep.subr.bf16.mxu0 %v2831
    %3188 = vmatpush1.bf16.msra.mxu0 %v2830
    %3189 = vmatprep.subr.bf16.mxu0 %v2827
    %3190 = vmatpush1.bf16.msra.mxu0 %v2826
    %3191 = vmatprep.subr.bf16.mxu0 %v2887
    %3192 = vmatpush2.bf16.msra.mxu0 %v2886
    %3193 = vmatprep.subr.bf16.mxu0 %v2883
    %3194 = vmatpush2.bf16.msra.mxu0 %v2882
    %3195 = vmatprep.subr.bf16.mxu0 %v2879
    %3196 = vmatpush2.bf16.msra.mxu0 %v2878
    %3197 = vmatprep.subr.bf16.mxu0 %v2875
    %3198 = vmatpush2.bf16.msra.mxu0 %v2874
    %3199 = vmatprep.subr.bf16.mxu0 %v2871
    %3200 = vmatpush2.bf16.msra.mxu0 %v2870
    %3201 = vmatprep.subr.bf16.mxu0 %v2867
    %3202 = vmatpush2.bf16.msra.mxu0 %v2866
    %3203 = vmatprep.subr.bf16.mxu0 %v2863
    %3204 = vmatpush2.bf16.msra.mxu0 %v2862
    %3205 = vmatprep.subr.bf16.mxu0 %v2859
    %3206 = vmatpush2.bf16.msra.mxu0 %v2858
    %3207 = vmatprep.mubr.bf16.mxu0 %v2503
    %3208 = vmatmul.mubr.bf16.gmra.mxu0 %v2502
    %v3209 = vpop.f32.mrf.mxu0
    %v3210 = vadd.f32 %v3169, %v3209
    %v3211 = vpop.f32.mrf.mxu0
    %v3212 = vadd.f32 %v3171, %v3211
    %v3213 = vpop.f32.mrf.mxu0
    %v3214 = vpop.f32.mrf.mxu0
    %3215 = vdwg.mxu0
    %v3216 = vld [vmem:[#allocation11] sm:$0xf]
    %v3218 = vlaneseq
    %v3219 = vshrl.u32 %v3218, 7
    %v3220 = vsub.s32 0, %v3219
    %v3221 = vrot.slane %v3216, %v3220
    %v3222 = vlaneseq
    %v3223 = vshrl.u32 %v3222, 7
    %v3224 = vsub.s32 1, %v3223
    %v3225 = vrot.slane %v3216, %v3224
    %v3226 = vlaneseq
    %v3227 = vshrl.u32 %v3226, 7
    %v3228 = vsub.s32 2, %v3227
    %v3229 = vrot.slane %v3216, %v3228
    %v3230 = vlaneseq
    %v3231 = vshrl.u32 %v3230, 7
    %v3232 = vsub.s32 3, %v3231
    %v3233 = vrot.slane %v3216, %v3232
    %v3238 = vmul.f32 %v3046, %v3221
    %v3239 = vmul.f32 %v3048, %v3225
    %v3240 = vmul.f32 %v3210, %v3229
    %v3241 = vmul.f32 %v3212, %v3233
    %v3242 = vld [vmem:[#allocation13] sm:$0xf]
    %v3244 = vlaneseq
    %v3245 = vshrl.u32 %v3244, 7
    %v3246 = vsub.s32 0, %v3245
    %v3247 = vrot.slane %v3242, %v3246
    %v3248 = vlaneseq
    %v3249 = vshrl.u32 %v3248, 7
    %v3250 = vsub.s32 1, %v3249
    %v3251 = vrot.slane %v3242, %v3250
    %v3252 = vlaneseq
    %v3253 = vshrl.u32 %v3252, 7
    %v3254 = vsub.s32 2, %v3253
    %v3255 = vrot.slane %v3242, %v3254
    %v3256 = vlaneseq
    %v3257 = vshrl.u32 %v3256, 7
    %v3258 = vsub.s32 3, %v3257
    %v3259 = vrot.slane %v3242, %v3258
    %v3264 = vadd.f32 %v3238, %v3247
    %v3265 = vadd.f32 %v3239, %v3251
    %v3266 = vadd.f32 %v3240, %v3255
    %v3267 = vadd.f32 %v3241, %v3259
    %v3268 = vmax.f32 %v3264, 0.0
    %v3269 = vmax.f32 %v3265, 0.0
    %v3270 = vmax.f32 %v3266, 0.0
    %v3271 = vmax.f32 %v3267, 0.0
    %v3272 = vpack.c.bf16 %v3268, %v3268
    %v3273 = vpack.c.bf16 %v3269, %v3269
    %v3274 = vpack.c.bf16 %v3270, %v3270
    %v3275 = vpack.c.bf16 %v3271, %v3271
    %v3276 = vld [vmem:[#allocation14] sm:$0xff]
    %v3277 = vld [vmem:[#allocation14 + $0x8] sm:$0xff]
    %v3278 = vld [vmem:[#allocation14 + $0x10] sm:$0xff]
    %v3279 = vld [vmem:[#allocation14 + $0x18] sm:$0xff]
    %v3280 = vld [vmem:[#allocation14 + $0x20] sm:$0xff]
    %v3281 = vld [vmem:[#allocation14 + $0x28] sm:$0xff]
    %v3282 = vld [vmem:[#allocation14 + $0x30] sm:$0xff]
    %v3283 = vld [vmem:[#allocation14 + $0x38] sm:$0xff]
    %v3284 = vld [vmem:[#allocation14 + $0x40] sm:$0xff]
    %v3285 = vld [vmem:[#allocation14 + $0x48] sm:$0xff]
    %v3286 = vld [vmem:[#allocation14 + $0x50] sm:$0xff]
    %v3287 = vld [vmem:[#allocation14 + $0x58] sm:$0xff]
    %v3288 = vld [vmem:[#allocation14 + $0x60] sm:$0xff]
    %v3289 = vld [vmem:[#allocation14 + $0x68] sm:$0xff]
    %v3290 = vld [vmem:[#allocation14 + $0x70] sm:$0xff]
    %v3291 = vld [vmem:[#allocation14 + $0x78] sm:$0xff]
    %v3292 = vld [vmem:[#allocation14 + $0x80] sm:$0xff]
    %v3293 = vld [vmem:[#allocation14 + $0x88] sm:$0xff]
    %v3294 = vld [vmem:[#allocation14 + $0x90] sm:$0xff]
    %v3295 = vld [vmem:[#allocation14 + $0x98] sm:$0xff]
    %v3296 = vld [vmem:[#allocation14 + $0xa0] sm:$0xff]
    %v3297 = vld [vmem:[#allocation14 + $0xa8] sm:$0xff]
    %v3298 = vld [vmem:[#allocation14 + $0xb0] sm:$0xff]
    %v3299 = vld [vmem:[#allocation14 + $0xb8] sm:$0xff]
    %v3300 = vld [vmem:[#allocation14 + $0xc0] sm:$0xff]
    %v3301 = vld [vmem:[#allocation14 + $0xc8] sm:$0xff]
    %v3302 = vld [vmem:[#allocation14 + $0xd0] sm:$0xff]
    %v3303 = vld [vmem:[#allocation14 + $0xd8] sm:$0xff]
    %v3304 = vld [vmem:[#allocation14 + $0xe0] sm:$0xff]
    %v3305 = vld [vmem:[#allocation14 + $0xe8] sm:$0xff]
    %v3306 = vld [vmem:[#allocation14 + $0xf0] sm:$0xff]
    %v3307 = vld [vmem:[#allocation14 + $0xf8] sm:$0xff]
    %v3308 = vunpack.c.l.s8.bf16 %v3276
    %v3309 = vunpack.c.l.s8.bf16 %v3277
    %v3310 = vunpack.c.h.s8.bf16 %v3276
    %v3311 = vunpack.c.h.s8.bf16 %v3277
    %v3312 = vunpack.c.l.s8.bf16 %v3278
    %v3313 = vunpack.c.l.s8.bf16 %v3279
    %v3314 = vunpack.c.h.s8.bf16 %v3278
    %v3315 = vunpack.c.h.s8.bf16 %v3279
    %v3316 = vunpack.c.l.s8.bf16 %v3280
    %v3317 = vunpack.c.l.s8.bf16 %v3281
    %v3318 = vunpack.c.h.s8.bf16 %v3280
    %v3319 = vunpack.c.h.s8.bf16 %v3281
    %v3320 = vunpack.c.l.s8.bf16 %v3282
    %v3321 = vunpack.c.l.s8.bf16 %v3283
    %v3322 = vunpack.c.h.s8.bf16 %v3282
    %v3323 = vunpack.c.h.s8.bf16 %v3283
    %v3324 = vunpack.c.l.s8.bf16 %v3284
    %v3325 = vunpack.c.l.s8.bf16 %v3285
    %v3326 = vunpack.c.h.s8.bf16 %v3284
    %v3327 = vunpack.c.h.s8.bf16 %v3285
    %v3328 = vunpack.c.l.s8.bf16 %v3286
    %v3329 = vunpack.c.l.s8.bf16 %v3287
    %v3330 = vunpack.c.h.s8.bf16 %v3286
    %v3331 = vunpack.c.h.s8.bf16 %v3287
    %v3332 = vunpack.c.l.s8.bf16 %v3288
    %v3333 = vunpack.c.l.s8.bf16 %v3289
    %v3334 = vunpack.c.h.s8.bf16 %v3288
    %v3335 = vunpack.c.h.s8.bf16 %v3289
    %v3336 = vunpack.c.l.s8.bf16 %v3290
    %v3337 = vunpack.c.l.s8.bf16 %v3291
    %v3338 = vunpack.c.h.s8.bf16 %v3290
    %v3339 = vunpack.c.h.s8.bf16 %v3291
    %v3340 = vunpack.c.l.s8.bf16 %v3292
    %v3341 = vunpack.c.l.s8.bf16 %v3293
    %v3342 = vunpack.c.h.s8.bf16 %v3292
    %v3343 = vunpack.c.h.s8.bf16 %v3293
    %v3344 = vunpack.c.l.s8.bf16 %v3294
    %v3345 = vunpack.c.l.s8.bf16 %v3295
    %v3346 = vunpack.c.h.s8.bf16 %v3294
    %v3347 = vunpack.c.h.s8.bf16 %v3295
    %v3348 = vunpack.c.l.s8.bf16 %v3296
    %v3349 = vunpack.c.l.s8.bf16 %v3297
    %v3350 = vunpack.c.h.s8.bf16 %v3296
    %v3351 = vunpack.c.h.s8.bf16 %v3297
    %v3352 = vunpack.c.l.s8.bf16 %v3298
    %v3353 = vunpack.c.l.s8.bf16 %v3299
    %v3354 = vunpack.c.h.s8.bf16 %v3298
    %v3355 = vunpack.c.h.s8.bf16 %v3299
    %v3356 = vunpack.c.l.s8.bf16 %v3300
    %v3357 = vunpack.c.l.s8.bf16 %v3301
    %v3358 = vunpack.c.h.s8.bf16 %v3300
    %v3359 = vunpack.c.h.s8.bf16 %v3301
    %v3360 = vunpack.c.l.s8.bf16 %v3302
    %v3361 = vunpack.c.l.s8.bf16 %v3303
    %v3362 = vunpack.c.h.s8.bf16 %v3302
    %v3363 = vunpack.c.h.s8.bf16 %v3303
    %v3364 = vunpack.c.l.s8.bf16 %v3304
    %v3365 = vunpack.c.l.s8.bf16 %v3305
    %v3366 = vunpack.c.h.s8.bf16 %v3304
    %v3367 = vunpack.c.h.s8.bf16 %v3305
    %v3368 = vunpack.c.l.s8.bf16 %v3306
    %v3369 = vunpack.c.l.s8.bf16 %v3307
    %v3370 = vunpack.c.h.s8.bf16 %v3306
    %v3371 = vunpack.c.h.s8.bf16 %v3307
    %3372 = vmatprep.subr.bf16.mxu0 %v3323
    %3373 = vmatpush1.bf16.msra.mxu0 %v3322
    %3374 = vmatprep.subr.bf16.mxu0 %v3321
    %3375 = vmatpush1.bf16.msra.mxu0 %v3320
    %3376 = vmatprep.subr.bf16.mxu0 %v3319
    %3377 = vmatpush1.bf16.msra.mxu0 %v3318
    %3378 = vmatprep.subr.bf16.mxu0 %v3317
    %3379 = vmatpush1.bf16.msra.mxu0 %v3316
    %3380 = vmatprep.subr.bf16.mxu0 %v3315
    %3381 = vmatpush1.bf16.msra.mxu0 %v3314
    %3382 = vmatprep.subr.bf16.mxu0 %v3313
    %3383 = vmatpush1.bf16.msra.mxu0 %v3312
    %3384 = vmatprep.subr.bf16.mxu0 %v3311
    %3385 = vmatpush1.bf16.msra.mxu0 %v3310
    %3386 = vmatprep.subr.bf16.mxu0 %v3309
    %3387 = vmatpush1.bf16.msra.mxu0 %v3308
    %3388 = vmatprep.subr.bf16.mxu0 %v3339
    %3389 = vmatpush2.bf16.msra.mxu0 %v3338
    %3390 = vmatprep.subr.bf16.mxu0 %v3337
    %3391 = vmatpush2.bf16.msra.mxu0 %v3336
    %3392 = vmatprep.subr.bf16.mxu0 %v3335
    %3393 = vmatpush2.bf16.msra.mxu0 %v3334
    %3394 = vmatprep.subr.bf16.mxu0 %v3333
    %3395 = vmatpush2.bf16.msra.mxu0 %v3332
    %3396 = vmatprep.subr.bf16.mxu0 %v3331
    %3397 = vmatpush2.bf16.msra.mxu0 %v3330
    %3398 = vmatprep.subr.bf16.mxu0 %v3329
    %3399 = vmatpush2.bf16.msra.mxu0 %v3328
    %3400 = vmatprep.subr.bf16.mxu0 %v3327
    %3401 = vmatpush2.bf16.msra.mxu0 %v3326
    %3402 = vmatprep.subr.bf16.mxu0 %v3325
    %3403 = vmatpush2.bf16.msra.mxu0 %v3324
    %3404 = vmatprep.mubr.bf16.mxu0 %v3273
    %3405 = vmatmul.mubr.bf16.gmra.mxu0 %v3272
    %v3406 = vpop.f32.mrf.mxu0
    %v3407 = vadd.f32 0.0, %v3406
    %v3408 = vpop.f32.mrf.mxu0
    %v3409 = vadd.f32 0.0, %v3408
    %v3410 = vpop.f32.mrf.mxu0
    %v3411 = vpop.f32.mrf.mxu0
    %3412 = vdwg.mxu0
    %3413 = vmatprep.subr.bf16.mxu0 %v3355
    %3414 = vmatpush1.bf16.msra.mxu0 %v3354
    %3415 = vmatprep.subr.bf16.mxu0 %v3353
    %3416 = vmatpush1.bf16.msra.mxu0 %v3352
    %3417 = vmatprep.subr.bf16.mxu0 %v3351
    %3418 = vmatpush1.bf16.msra.mxu0 %v3350
    %3419 = vmatprep.subr.bf16.mxu0 %v3349
    %3420 = vmatpush1.bf16.msra.mxu0 %v3348
    %3421 = vmatprep.subr.bf16.mxu0 %v3347
    %3422 = vmatpush1.bf16.msra.mxu0 %v3346
    %3423 = vmatprep.subr.bf16.mxu0 %v3345
    %3424 = vmatpush1.bf16.msra.mxu0 %v3344
    %3425 = vmatprep.subr.bf16.mxu0 %v3343
    %3426 = vmatpush1.bf16.msra.mxu0 %v3342
    %3427 = vmatprep.subr.bf16.mxu0 %v3341
    %3428 = vmatpush1.bf16.msra.mxu0 %v3340
    %3429 = vmatprep.subr.bf16.mxu0 %v3371
    %3430 = vmatpush2.bf16.msra.mxu0 %v3370
    %3431 = vmatprep.subr.bf16.mxu0 %v3369
    %3432 = vmatpush2.bf16.msra.mxu0 %v3368
    %3433 = vmatprep.subr.bf16.mxu0 %v3367
    %3434 = vmatpush2.bf16.msra.mxu0 %v3366
    %3435 = vmatprep.subr.bf16.mxu0 %v3365
    %3436 = vmatpush2.bf16.msra.mxu0 %v3364
    %3437 = vmatprep.subr.bf16.mxu0 %v3363
    %3438 = vmatpush2.bf16.msra.mxu0 %v3362
    %3439 = vmatprep.subr.bf16.mxu0 %v3361
    %3440 = vmatpush2.bf16.msra.mxu0 %v3360
    %3441 = vmatprep.subr.bf16.mxu0 %v3359
    %3442 = vmatpush2.bf16.msra.mxu0 %v3358
    %3443 = vmatprep.subr.bf16.mxu0 %v3357
    %3444 = vmatpush2.bf16.msra.mxu0 %v3356
    %3445 = vmatprep.mubr.bf16.mxu0 %v3275
    %3446 = vmatmul.mubr.bf16.gmra.mxu0 %v3274
    %v3447 = vpop.f32.mrf.mxu0
    %v3448 = vadd.f32 %v3407, %v3447
    %v3449 = vpop.f32.mrf.mxu0
    %v3450 = vadd.f32 %v3409, %v3449
    %v3451 = vpop.f32.mrf.mxu0
    %v3452 = vpop.f32.mrf.mxu0
    %3453 = vdwg.mxu0
    %v3454 = vld [vmem:[#allocation16] sm:$0x3]
    %v3456 = vlaneseq
    %v3457 = vshrl.u32 %v3456, 7
    %v3458 = vsub.s32 0, %v3457
    %v3459 = vrot.slane %v3454, %v3458
    %v3460 = vlaneseq
    %v3461 = vshrl.u32 %v3460, 7
    %v3462 = vsub.s32 1, %v3461
    %v3463 = vrot.slane %v3454, %v3462
    %v3466 = vmul.f32 %v3448, %v3459
    %v3467 = vmul.f32 %v3450, %v3463
    %v3468 = vld [vmem:[#allocation17] sm:$0x3]
    %v3470 = vlaneseq
    %v3471 = vshrl.u32 %v3470, 7
    %v3472 = vsub.s32 0, %v3471
    %v3473 = vrot.slane %v3468, %v3472
    %v3474 = vlaneseq
    %v3475 = vshrl.u32 %v3474, 7
    %v3476 = vsub.s32 1, %v3475
    %v3477 = vrot.slane %v3468, %v3476
    %v3480 = vadd.f32 %v3466, %v3473
    %v3481 = vadd.f32 %v3467, %v3477
    %v3482 = vmax.f32 %v3480, 0.0
    %v3483 = vmax.f32 %v3481, 0.0
    %v3484 = vpack.c.bf16 %v3482, %v3482
    %v3485 = vpack.c.bf16 %v3483, %v3483
    %v3486 = vld [vmem:[#allocation19] sm:$0xff]
    %v3487 = vld [vmem:[#allocation19 + $0x8] sm:$0xff]
    %v3488 = vld [vmem:[#allocation19 + $0x10] sm:$0xff]
    %v3489 = vld [vmem:[#allocation19 + $0x18] sm:$0xff]
    %v3490 = vld [vmem:[#allocation19 + $0x20] sm:$0xff]
    %v3491 = vld [vmem:[#allocation19 + $0x28] sm:$0xff]
    %v3492 = vld [vmem:[#allocation19 + $0x30] sm:$0xff]
    %v3493 = vld [vmem:[#allocation19 + $0x38] sm:$0xff]
    %v3494 = vunpack.c.l.s8.bf16 %v3486
    %v3495 = vunpack.c.h.s8.bf16 %v3486
    %v3496 = vunpack.c.l.s8.bf16 %v3487
    %v3497 = vunpack.c.h.s8.bf16 %v3487
    %v3498 = vunpack.c.l.s8.bf16 %v3488
    %v3499 = vunpack.c.h.s8.bf16 %v3488
    %v3500 = vunpack.c.l.s8.bf16 %v3489
    %v3501 = vunpack.c.h.s8.bf16 %v3489
    %v3502 = vunpack.c.l.s8.bf16 %v3490
    %v3503 = vunpack.c.h.s8.bf16 %v3490
    %v3504 = vunpack.c.l.s8.bf16 %v3491
    %v3505 = vunpack.c.h.s8.bf16 %v3491
    %v3506 = vunpack.c.l.s8.bf16 %v3492
    %v3507 = vunpack.c.h.s8.bf16 %v3492
    %v3508 = vunpack.c.l.s8.bf16 %v3493
    %v3509 = vunpack.c.h.s8.bf16 %v3493
    %3510 = vmatprep.subr.bf16.mxu0 0
    %3511 = vmatpush1.bf16.msra.mxu0 %v3501
    %3512 = vmatprep.subr.bf16.mxu0 0
    %3513 = vmatpush1.bf16.msra.mxu0 %v3500
    %3514 = vmatprep.subr.bf16.mxu0 0
    %3515 = vmatpush1.bf16.msra.mxu0 %v3499
    %3516 = vmatprep.subr.bf16.mxu0 0
    %3517 = vmatpush1.bf16.msra.mxu0 %v3498
    %3518 = vmatprep.subr.bf16.mxu0 0
    %3519 = vmatpush1.bf16.msra.mxu0 %v3497
    %3520 = vmatprep.subr.bf16.mxu0 0
    %3521 = vmatpush1.bf16.msra.mxu0 %v3496
    %3522 = vmatprep.subr.bf16.mxu0 0
    %3523 = vmatpush1.bf16.msra.mxu0 %v3495
    %3524 = vmatprep.subr.bf16.mxu0 0
    %3525 = vmatpush1.bf16.msra.mxu0 %v3494
    %3526 = vmatprep.subr.bf16.mxu0 0
    %3527 = vmatpush2.bf16.msra.mxu0 %v3509
    %3528 = vmatprep.subr.bf16.mxu0 0
    %3529 = vmatpush2.bf16.msra.mxu0 %v3508
    %3530 = vmatprep.subr.bf16.mxu0 0
    %3531 = vmatpush2.bf16.msra.mxu0 %v3507
    %3532 = vmatprep.subr.bf16.mxu0 0
    %3533 = vmatpush2.bf16.msra.mxu0 %v3506
    %3534 = vmatprep.subr.bf16.mxu0 0
    %3535 = vmatpush2.bf16.msra.mxu0 %v3505
    %3536 = vmatprep.subr.bf16.mxu0 0
    %3537 = vmatpush2.bf16.msra.mxu0 %v3504
    %3538 = vmatprep.subr.bf16.mxu0 0
    %3539 = vmatpush2.bf16.msra.mxu0 %v3503
    %3540 = vmatprep.subr.bf16.mxu0 0
    %3541 = vmatpush2.bf16.msra.mxu0 %v3502
    %3542 = vmatprep.mubr.bf16.mxu0 %v3485
    %3543 = vmatmul.mubr.bf16.gmra.mxu0 %v3484
    %v3544 = vpop.f32.mrf.mxu0
    %v3545 = vadd.f32 0.0, %v3544
    %v3546 = vpop.f32.mrf.mxu0
    %v3547 = vpop.f32.mrf.mxu0
    %v3548 = vpop.f32.mrf.mxu0
    %3549 = vdwg.mxu0
    %v3550 = vld [vmem:[#allocation20] sm:$0x1]
    %v3552 = vlaneseq
    %v3553 = vshrl.u32 %v3552, 7
    %v3554 = vsub.s32 0, %v3553
    %v3555 = vrot.slane %v3550, %v3554
    %v3557 = vmul.f32 %v3545, %v3555
    %v3558 = vld [vmem:[#allocation22] sm:$0x1]
    %v3560 = vlaneseq
    %v3561 = vshrl.u32 %v3560, 7
    %v3562 = vsub.s32 0, %v3561
    %v3563 = vrot.slane %v3558, %v3562
    %v3565 = vadd.f32 %v3557, %v3563
    %3566 = vst [vmem:[#allocation23] sm:$0xff] %v3565
    // Predicated region
    $region106: #{tpu_custom_call.1} parent=1 // pred_check
      _
    $region107: #{tpu_custom_call.1} parent=1 // pred_check_branch
      %3568 = sbr.rel (0) target = $region109
    $region108: #{tpu_custom_call.1} parent=1 // pred_region
      %s3570 = ssub.s32 128, 128
      %3571 = vsyncadd [#allocation4], %s3570
      %s3573 = sshll.u32 [#allocation23], 4
      %s3574 = int_to_ptr.vmem [resolvable:$true] %s3573
      %3576 = dma.vmem_to_hbm [thread:$0]  %s3574, 128, %s13, [#allocation4]
    $region109: #{tpu_custom_call.1} parent=1 // pred_fallthru
      _
    // Predicated region
    $region110: #{tpu_custom_call.1} parent=1 // pred_check
      _
    $region111: #{tpu_custom_call.1} parent=1 // pred_check_branch
      %3578 = sbr.rel (0) target = $region113
    $region112: #{tpu_custom_call.1} parent=1 // pred_region
      %3579 = dma.done [#allocation4], 128
    $region113: #{tpu_custom_call.1} parent=1 // pred_fallthru
      _
    %3580 = vsyncpa [#allocation3], 1
    %3581 = vsyncpa [#allocation6], 1
    %3582 = vsyncpa [#allocation9], 1
    %3583 = vsyncpa [#allocation12], 1
    %3584 = vsyncpa [#allocation15], 1
    %3585 = vsyncpa [#allocation18], 1
    %3586 = vsyncpa [#allocation21], 1
    %3587 = vsyncpa [#allocation4], 1

</llo_original>
